<compile_context>
chip_gen: v7x
topology: tpu7x:2x2x1
jax: 0.10.0
libtpu: 0.0.40
codegen_flags: <defaults>
</compile_context>

<pallas_src>
import jax
import jax.numpy as jnp
from jax import lax
from jax.experimental import pallas as pl
from jax.experimental.pallas import tpu as pltpu

HIDDEN = 16
NUM_LAYERS = 3


def lstm_kernel(x_ref,                    # (B, T*M)  row b, lanes [t*M:(t+1)*M] = x[b, t, :]
                w0_ref, b0_ref,           # (M+H, 4H), (1, 4H)   packed [Wih0; Whh0]
                w1_ref, b1_ref,           # (2H, 4H),  (1, 4H)   packed [Wih1; Whh1]
                w2_ref, b2_ref,           # (2H, 4H),  (1, 4H)   packed [Wih2; Whh2]
                wfc_ref, bfc_ref,         # (1, H), (1, 1)
                y_ref):                   # (B, T)  output (batch-major, lane-dense store)
    # NOTE: shapes inferred from refs; valid while the call stays gridless with
    # full arrays resident (as it is).
    B, T = y_ref.shape
    H = HIDDEN
    M = w0_ref.shape[0] - H

    # ---- hoist all weight / bias loads and broadcasts (loop-invariant) ----
    w0 = w0_ref[...]
    w1 = w1_ref[...]
    w2 = w2_ref[...]
    b0 = jnp.broadcast_to(b0_ref[...], (B, 4 * H))
    b1 = jnp.broadcast_to(b1_ref[...], (B, 4 * H))
    b2 = jnp.broadcast_to(b2_ref[...], (B, 4 * H))
    wfc = jnp.broadcast_to(wfc_ref[...], (B, H))
    bfc = jnp.broadcast_to(bfc_ref[...], (B, 1))
    col = lax.broadcasted_iota(jnp.int32, (B, T), 1)   # lane ids for the output merge

    def cell(gates, c_prev):
        # PyTorch gate order (i, f, g, o). Whole-width transcendentals (2 EUP
        # pushes over one (B,4H) vreg) then static lane slices.
        sg = jax.nn.sigmoid(gates)
        tg = jnp.tanh(gates)
        i = sg[:, 0:H]
        f = sg[:, H:2 * H]
        g = tg[:, 2 * H:3 * H]
        o = sg[:, 3 * H:4 * H]
        c_new = f * c_prev + i * g
        h_new = o * jnp.tanh(c_new)
        return h_new, c_new

    zeros = jnp.zeros((B, H), jnp.float32)
    h0 = c0 = h1 = c1 = h2 = c2 = zeros
    y = jnp.zeros((B, T), jnp.float32)   # register-resident output accumulator

    # ---- fused, fully unrolled time loop (T static, straight-line code):
    # layer0@t / layer1@t-1 / layer2@t-2 are independent DAG nodes, so their
    # MXU / EUP work wavefront-pipelines across unrolled iterations. ----
    for t in range(T):
        # per-step input rows: clean static lane-slice load, off the recurrent chain
        x_t = x_ref[:, t * M:(t + 1) * M]                         # (B, M)

        # layer 0: one dot of [x_t, h0] against packed [Wih0; Whh0]
        g0 = jnp.dot(jnp.concatenate([x_t, h0], axis=1), w0,
                     preferred_element_type=jnp.float32) + b0
        h0, c0 = cell(g0, c0)

        # layer 1: one dot of [h0, h1] against packed [Wih1; Whh1]
        g1 = jnp.dot(jnp.concatenate([h0, h1], axis=1), w1,
                     preferred_element_type=jnp.float32) + b1
        h1, c1 = cell(g1, c1)

        # layer 2: one dot of [h1, h2] against packed [Wih2; Whh2]
        g2 = jnp.dot(jnp.concatenate([h1, h2], axis=1), w2,
                     preferred_element_type=jnp.float32) + b2
        h2, c2 = cell(g2, c2)

        # fc1 for this step — off the recurrent chain; merged into the (B, T)
        # accumulator (no per-step masked stores, no scratch, no final transpose).
        # TODO(synk): nn.Dropout(0.1) between LSTM and fc1 is identity in eval mode; not applied.
        y_t = jnp.sum(h2 * wfc, axis=-1, keepdims=True) + bfc     # (B, 1)
        y = jnp.where(col == t, y_t, y)

    # ---- single lane-dense output store ----
    y_ref[...] = y


@jax.jit
def lstm_forward(x, params):
    """x: (B, T, M) float32 -> (B, T, 1) float32."""
    B, T, M = x.shape
    # (B, T, M) -> (B, T*M) is a pure row-major reshape: no data movement, no
    # standalone transpose op dispatched around the pallas_call.
    x2d = x.reshape(B, T * M)

    flat = []
    for (w_cat, b) in params["layers"]:
        flat += [w_cat, b]
    flat += [params["wfc"], params["bfc"]]

    y_bt = pl.pallas_call(
        lstm_kernel,
        out_shape=jax.ShapeDtypeStruct((B, T), jnp.float32),
        in_specs=[pl.BlockSpec(memory_space=pltpu.MemorySpace.VMEM)]
        * (1 + len(flat)),
        out_specs=pl.BlockSpec(memory_space=pltpu.MemorySpace.VMEM),
    )(x2d, *flat)

    return y_bt[..., None]                                        # (B, T, 1), free reshape


def init_params(key, m):
    """Deterministic synthetic parameters mimicking nn.LSTM / nn.Linear shapes.

    Per layer k: weight_ih (4H, in_k), weight_hh (4H, H), bias_ih + bias_hh (4H,).
    Stored pre-transposed AND pre-packed as one (in_k + H, 4H) matrix [Wih; Whh]
    (so the kernel does one fused dot per cell), with biases pre-summed (1, 4H).
    fc1: weight (1, H) kept as a row, bias as (1, 1).
    """
    H = HIDDEN
    bound = 1.0 / jnp.sqrt(H)
    layers = []
    in_dim = m
    for _ in range(NUM_LAYERS):
        key, k1, k2, k3, k4 = jax.random.split(key, 5)
        wih = jax.random.uniform(k1, (4 * H, in_dim), jnp.float32, -bound, bound)
        whh = jax.random.uniform(k2, (4 * H, H), jnp.float32, -bound, bound)
        bih = jax.random.uniform(k3, (4 * H,), jnp.float32, -bound, bound)
        bhh = jax.random.uniform(k4, (4 * H,), jnp.float32, -bound, bound)
        w_cat = jnp.concatenate([wih.T, whh.T], axis=0)           # (in_dim + H, 4H)
        layers.append((w_cat, (bih + bhh).reshape(1, 4 * H)))
        in_dim = H
    key, k5, k6 = jax.random.split(key, 3)
    wfc = jax.random.uniform(k5, (1, H), jnp.float32, -bound, bound)
    bfc = jax.random.uniform(k6, (1,), jnp.float32, -bound, bound)
    return {"layers": layers, "wfc": wfc, "bfc": bfc.reshape(1, 1)}


def ref_forward(x, params):
    """Pure-JAX reference for validation (identical math, lax.scan over time)."""
    B = x.shape[0]
    out = x
    for (w_cat, b) in params["layers"]:
        in_dim = w_cat.shape[0] - HIDDEN
        wih_t, whh_t = w_cat[:in_dim], w_cat[in_dim:]

        def step(carry, x_t, wih_t=wih_t, whh_t=whh_t, b=b):
            h, c = carry
            gates = x_t @ wih_t + h @ whh_t + b
            i = jax.nn.sigmoid(gates[:, :HIDDEN])
            f = jax.nn.sigmoid(gates[:, HIDDEN:2 * HIDDEN])
            g = jnp.tanh(gates[:, 2 * HIDDEN:3 * HIDDEN])
            o = jax.nn.sigmoid(gates[:, 3 * HIDDEN:])
            c = f * c + i * g
            h = o * jnp.tanh(c)
            return (h, c), h

        zeros = jnp.zeros((B, HIDDEN), jnp.float32)
        _, ys = lax.scan(step, (zeros, zeros), jnp.transpose(out, (1, 0, 2)))
        out = jnp.transpose(ys, (1, 0, 2))
    return out @ params["wfc"].T + params["bfc"]


if __name__ == "__main__":
    # args: m=8 input features, window_size=8 timesteps, hidden fixed at 16.
    B, T, M = 2, 8, 8
    key = jax.random.PRNGKey(0)
    key, kx, kp = jax.random.split(key, 3)
    x = jax.random.normal(kx, (B, T, M), jnp.float32)
    params = init_params(kp, M)

    y = jax.block_until_ready(lstm_forward(x, params))
    assert y.shape == (B, T, 1), y.shape

    y_ref = jax.block_until_ready(ref_forward(x, params))
    assert jnp.allclose(y, y_ref, atol=1e-3, rtol=1e-3), (
        float(jnp.max(jnp.abs(y - y_ref))))

    print("KERNEL_OK")
</pallas_src>

<mosaic_0001>
module attributes {stable_mosaic.version = 11 : i64} {
  func.func @lstm_kernel(%arg0: memref<2x64xf32, #tpu.memory_space<vmem>>, %arg1: memref<24x64xf32, #tpu.memory_space<vmem>>, %arg2: memref<1x64xf32, #tpu.memory_space<vmem>>, %arg3: memref<32x64xf32, #tpu.memory_space<vmem>>, %arg4: memref<1x64xf32, #tpu.memory_space<vmem>>, %arg5: memref<32x64xf32, #tpu.memory_space<vmem>>, %arg6: memref<1x64xf32, #tpu.memory_space<vmem>>, %arg7: memref<1x16xf32, #tpu.memory_space<vmem>>, %arg8: memref<1x1xf32, #tpu.memory_space<vmem>>, %arg9: memref<2x8xf32, #tpu.memory_space<vmem>>) attributes {dimension_semantics = [], scalar_prefetch = 0 : i64, scratch_operands = 0 : i64, tpu.core_type = #tpu.core_type<tc>} {
    %c0 = arith.constant 0 : index
    %c0_0 = arith.constant 0 : index
    %0 = vector.load %arg1[%c0, %c0_0] : memref<24x64xf32, #tpu.memory_space<vmem>>, vector<24x64xf32>
    %c0_1 = arith.constant 0 : index
    %c0_2 = arith.constant 0 : index
    %1 = vector.load %arg3[%c0_1, %c0_2] : memref<32x64xf32, #tpu.memory_space<vmem>>, vector<32x64xf32>
    %c0_3 = arith.constant 0 : index
    %c0_4 = arith.constant 0 : index
    %2 = vector.load %arg5[%c0_3, %c0_4] : memref<32x64xf32, #tpu.memory_space<vmem>>, vector<32x64xf32>
    %c0_5 = arith.constant 0 : index
    %c0_6 = arith.constant 0 : index
    %3 = vector.load %arg2[%c0_5, %c0_6] : memref<1x64xf32, #tpu.memory_space<vmem>>, vector<1x64xf32>
    %4 = vector.shape_cast %3 : vector<1x64xf32> to vector<1x64xf32>
    %5 = vector.broadcast %4 : vector<1x64xf32> to vector<2x64xf32>
    %c0_7 = arith.constant 0 : index
    %c0_8 = arith.constant 0 : index
    %6 = vector.load %arg4[%c0_7, %c0_8] : memref<1x64xf32, #tpu.memory_space<vmem>>, vector<1x64xf32>
    %7 = vector.shape_cast %6 : vector<1x64xf32> to vector<1x64xf32>
    %8 = vector.broadcast %7 : vector<1x64xf32> to vector<2x64xf32>
    %c0_9 = arith.constant 0 : index
    %c0_10 = arith.constant 0 : index
    %9 = vector.load %arg6[%c0_9, %c0_10] : memref<1x64xf32, #tpu.memory_space<vmem>>, vector<1x64xf32>
    %10 = vector.shape_cast %9 : vector<1x64xf32> to vector<1x64xf32>
    %11 = vector.broadcast %10 : vector<1x64xf32> to vector<2x64xf32>
    %c0_11 = arith.constant 0 : index
    %c0_12 = arith.constant 0 : index
    %12 = vector.load %arg7[%c0_11, %c0_12] : memref<1x16xf32, #tpu.memory_space<vmem>>, vector<1x16xf32>
    %13 = vector.shape_cast %12 : vector<1x16xf32> to vector<1x16xf32>
    %14 = vector.broadcast %13 : vector<1x16xf32> to vector<2x16xf32>
    %c0_13 = arith.constant 0 : index
    %c0_14 = arith.constant 0 : index
    %15 = vector.load %arg8[%c0_13, %c0_14] : memref<1x1xf32, #tpu.memory_space<vmem>>, vector<1x1xf32>
    %16 = vector.shape_cast %15 : vector<1x1xf32> to vector<1x1xf32>
    %17 = vector.broadcast %16 : vector<1x1xf32> to vector<2x1xf32>
    %18 = tpu.iota {dimensions = array<i32: 1>} : vector<2x8xi32>
    %cst = arith.constant 0.000000e+00 : f32
    %19 = vector.broadcast %cst : f32 to vector<2x16xf32>
    %cst_15 = arith.constant 0.000000e+00 : f32
    %20 = vector.broadcast %cst_15 : f32 to vector<2x8xf32>
    %c0_16 = arith.constant 0 : index
    %c0_17 = arith.constant 0 : index
    %21 = vector.load %arg0[%c0_16, %c0_17] : memref<2x64xf32, #tpu.memory_space<vmem>>, vector<2x8xf32>
    %22 = tpu.concatenate %21, %19 in 1 : vector<2x8xf32>, vector<2x16xf32> -> vector<2x24xf32>
    %cst_18 = arith.constant dense<0.000000e+00> : vector<2x64xf32>
    %23 = tpu.matmul %22, %0, %cst_18 {dimension_numbers = #tpu.dot_dimension_numbers<[1], [0], [0], [1], [0, 0, 1, 1], [], []>} : vector<2x24xf32>, vector<24x64xf32>, vector<2x64xf32> -> vector<2x64xf32>
    %24 = arith.addf %23, %5 : vector<2x64xf32>
    %25 = arith.negf %24 : vector<2x64xf32>
    %26 = math.exp %25 : vector<2x64xf32>
    %cst_19 = arith.constant 1.000000e+00 : f32
    %27 = vector.broadcast %cst_19 : f32 to vector<2x64xf32>
    %28 = arith.addf %27, %26 : vector<2x64xf32>
    %29 = arith.divf %27, %28 : vector<2x64xf32>
    %30 = math.tanh %24 : vector<2x64xf32>
    %31 = vector.extract_strided_slice %29 {offsets = [0, 0], sizes = [2, 16], strides = [1, 1]} : vector<2x64xf32> to vector<2x16xf32>
    %32 = vector.extract_strided_slice %29 {offsets = [0, 16], sizes = [2, 16], strides = [1, 1]} : vector<2x64xf32> to vector<2x16xf32>
    %33 = vector.extract_strided_slice %30 {offsets = [0, 32], sizes = [2, 16], strides = [1, 1]} : vector<2x64xf32> to vector<2x16xf32>
    %34 = vector.extract_strided_slice %29 {offsets = [0, 48], sizes = [2, 16], strides = [1, 1]} : vector<2x64xf32> to vector<2x16xf32>
    %35 = arith.mulf %32, %19 : vector<2x16xf32>
    %36 = arith.mulf %31, %33 : vector<2x16xf32>
    %37 = arith.addf %35, %36 : vector<2x16xf32>
    %38 = math.tanh %37 : vector<2x16xf32>
    %39 = arith.mulf %34, %38 : vector<2x16xf32>
    %40 = tpu.concatenate %39, %19 in 1 : vector<2x16xf32>, vector<2x16xf32> -> vector<2x32xf32>
    %cst_20 = arith.constant dense<0.000000e+00> : vector<2x64xf32>
    %41 = tpu.matmul %40, %1, %cst_20 {dimension_numbers = #tpu.dot_dimension_numbers<[1], [0], [0], [1], [0, 0, 1, 1], [], []>} : vector<2x32xf32>, vector<32x64xf32>, vector<2x64xf32> -> vector<2x64xf32>
    %42 = arith.addf %41, %8 : vector<2x64xf32>
    %43 = arith.negf %42 : vector<2x64xf32>
    %44 = math.exp %43 : vector<2x64xf32>
    %cst_21 = arith.constant 1.000000e+00 : f32
    %45 = vector.broadcast %cst_21 : f32 to vector<2x64xf32>
    %46 = arith.addf %45, %44 : vector<2x64xf32>
    %47 = arith.divf %45, %46 : vector<2x64xf32>
    %48 = math.tanh %42 : vector<2x64xf32>
    %49 = vector.extract_strided_slice %47 {offsets = [0, 0], sizes = [2, 16], strides = [1, 1]} : vector<2x64xf32> to vector<2x16xf32>
    %50 = vector.extract_strided_slice %47 {offsets = [0, 16], sizes = [2, 16], strides = [1, 1]} : vector<2x64xf32> to vector<2x16xf32>
    %51 = vector.extract_strided_slice %48 {offsets = [0, 32], sizes = [2, 16], strides = [1, 1]} : vector<2x64xf32> to vector<2x16xf32>
    %52 = vector.extract_strided_slice %47 {offsets = [0, 48], sizes = [2, 16], strides = [1, 1]} : vector<2x64xf32> to vector<2x16xf32>
    %53 = arith.mulf %50, %19 : vector<2x16xf32>
    %54 = arith.mulf %49, %51 : vector<2x16xf32>
    %55 = arith.addf %53, %54 : vector<2x16xf32>
    %56 = math.tanh %55 : vector<2x16xf32>
    %57 = arith.mulf %52, %56 : vector<2x16xf32>
    %58 = tpu.concatenate %57, %19 in 1 : vector<2x16xf32>, vector<2x16xf32> -> vector<2x32xf32>
    %cst_22 = arith.constant dense<0.000000e+00> : vector<2x64xf32>
    %59 = tpu.matmul %58, %2, %cst_22 {dimension_numbers = #tpu.dot_dimension_numbers<[1], [0], [0], [1], [0, 0, 1, 1], [], []>} : vector<2x32xf32>, vector<32x64xf32>, vector<2x64xf32> -> vector<2x64xf32>
    %60 = arith.addf %59, %11 : vector<2x64xf32>
    %61 = arith.negf %60 : vector<2x64xf32>
    %62 = math.exp %61 : vector<2x64xf32>
    %cst_23 = arith.constant 1.000000e+00 : f32
    %63 = vector.broadcast %cst_23 : f32 to vector<2x64xf32>
    %64 = arith.addf %63, %62 : vector<2x64xf32>
    %65 = arith.divf %63, %64 : vector<2x64xf32>
    %66 = math.tanh %60 : vector<2x64xf32>
    %67 = vector.extract_strided_slice %65 {offsets = [0, 0], sizes = [2, 16], strides = [1, 1]} : vector<2x64xf32> to vector<2x16xf32>
    %68 = vector.extract_strided_slice %65 {offsets = [0, 16], sizes = [2, 16], strides = [1, 1]} : vector<2x64xf32> to vector<2x16xf32>
    %69 = vector.extract_strided_slice %66 {offsets = [0, 32], sizes = [2, 16], strides = [1, 1]} : vector<2x64xf32> to vector<2x16xf32>
    %70 = vector.extract_strided_slice %65 {offsets = [0, 48], sizes = [2, 16], strides = [1, 1]} : vector<2x64xf32> to vector<2x16xf32>
    %71 = arith.mulf %68, %19 : vector<2x16xf32>
    %72 = arith.mulf %67, %69 : vector<2x16xf32>
    %73 = arith.addf %71, %72 : vector<2x16xf32>
    %74 = math.tanh %73 : vector<2x16xf32>
    %75 = arith.mulf %70, %74 : vector<2x16xf32>
    %76 = arith.mulf %75, %14 : vector<2x16xf32>
    %cst_24 = arith.constant dense<0.000000e+00> : vector<2xf32>
    %77 = vector.multi_reduction <add>, %76, %cst_24 [1] : vector<2x16xf32> to vector<2xf32>
    %78 = vector.shape_cast %77 : vector<2xf32> to vector<2x1xf32>
    %79 = arith.addf %78, %17 : vector<2x1xf32>
    %c0_i32 = arith.constant 0 : i32
    %80 = vector.broadcast %c0_i32 : i32 to vector<2x8xi32>
    %81 = arith.cmpi eq, %18, %80 : vector<2x8xi32>
    %82 = vector.shape_cast %79 : vector<2x1xf32> to vector<2x1xf32>
    %83 = vector.broadcast %82 : vector<2x1xf32> to vector<2x8xf32>
    %84 = arith.select %81, %83, %20 : vector<2x8xi1>, vector<2x8xf32>
    %c0_25 = arith.constant 0 : index
    %c8 = arith.constant 8 : index
    %85 = vector.load %arg0[%c0_25, %c8] : memref<2x64xf32, #tpu.memory_space<vmem>>, vector<2x8xf32>
    %86 = tpu.concatenate %85, %39 in 1 : vector<2x8xf32>, vector<2x16xf32> -> vector<2x24xf32>
    %cst_26 = arith.constant dense<0.000000e+00> : vector<2x64xf32>
    %87 = tpu.matmul %86, %0, %cst_26 {dimension_numbers = #tpu.dot_dimension_numbers<[1], [0], [0], [1], [0, 0, 1, 1], [], []>} : vector<2x24xf32>, vector<24x64xf32>, vector<2x64xf32> -> vector<2x64xf32>
    %88 = arith.addf %87, %5 : vector<2x64xf32>
    %89 = arith.negf %88 : vector<2x64xf32>
    %90 = math.exp %89 : vector<2x64xf32>
    %cst_27 = arith.constant 1.000000e+00 : f32
    %91 = vector.broadcast %cst_27 : f32 to vector<2x64xf32>
    %92 = arith.addf %91, %90 : vector<2x64xf32>
    %93 = arith.divf %91, %92 : vector<2x64xf32>
    %94 = math.tanh %88 : vector<2x64xf32>
    %95 = vector.extract_strided_slice %93 {offsets = [0, 0], sizes = [2, 16], strides = [1, 1]} : vector<2x64xf32> to vector<2x16xf32>
    %96 = vector.extract_strided_slice %93 {offsets = [0, 16], sizes = [2, 16], strides = [1, 1]} : vector<2x64xf32> to vector<2x16xf32>
    %97 = vector.extract_strided_slice %94 {offsets = [0, 32], sizes = [2, 16], strides = [1, 1]} : vector<2x64xf32> to vector<2x16xf32>
    %98 = vector.extract_strided_slice %93 {offsets = [0, 48], sizes = [2, 16], strides = [1, 1]} : vector<2x64xf32> to vector<2x16xf32>
    %99 = arith.mulf %96, %37 : vector<2x16xf32>
    %100 = arith.mulf %95, %97 : vector<2x16xf32>
    %101 = arith.addf %99, %100 : vector<2x16xf32>
    %102 = math.tanh %101 : vector<2x16xf32>
    %103 = arith.mulf %98, %102 : vector<2x16xf32>
    %104 = tpu.concatenate %103, %57 in 1 : vector<2x16xf32>, vector<2x16xf32> -> vector<2x32xf32>
    %cst_28 = arith.constant dense<0.000000e+00> : vector<2x64xf32>
    %105 = tpu.matmul %104, %1, %cst_28 {dimension_numbers = #tpu.dot_dimension_numbers<[1], [0], [0], [1], [0, 0, 1, 1], [], []>} : vector<2x32xf32>, vector<32x64xf32>, vector<2x64xf32> -> vector<2x64xf32>
    %106 = arith.addf %105, %8 : vector<2x64xf32>
    %107 = arith.negf %106 : vector<2x64xf32>
    %108 = math.exp %107 : vector<2x64xf32>
    %cst_29 = arith.constant 1.000000e+00 : f32
    %109 = vector.broadcast %cst_29 : f32 to vector<2x64xf32>
    %110 = arith.addf %109, %108 : vector<2x64xf32>
    %111 = arith.divf %109, %110 : vector<2x64xf32>
    %112 = math.tanh %106 : vector<2x64xf32>
    %113 = vector.extract_strided_slice %111 {offsets = [0, 0], sizes = [2, 16], strides = [1, 1]} : vector<2x64xf32> to vector<2x16xf32>
    %114 = vector.extract_strided_slice %111 {offsets = [0, 16], sizes = [2, 16], strides = [1, 1]} : vector<2x64xf32> to vector<2x16xf32>
    %115 = vector.extract_strided_slice %112 {offsets = [0, 32], sizes = [2, 16], strides = [1, 1]} : vector<2x64xf32> to vector<2x16xf32>
    %116 = vector.extract_strided_slice %111 {offsets = [0, 48], sizes = [2, 16], strides = [1, 1]} : vector<2x64xf32> to vector<2x16xf32>
    %117 = arith.mulf %114, %55 : vector<2x16xf32>
    %118 = arith.mulf %113, %115 : vector<2x16xf32>
    %119 = arith.addf %117, %118 : vector<2x16xf32>
    %120 = math.tanh %119 : vector<2x16xf32>
    %121 = arith.mulf %116, %120 : vector<2x16xf32>
    %122 = tpu.concatenate %121, %75 in 1 : vector<2x16xf32>, vector<2x16xf32> -> vector<2x32xf32>
    %cst_30 = arith.constant dense<0.000000e+00> : vector<2x64xf32>
    %123 = tpu.matmul %122, %2, %cst_30 {dimension_numbers = #tpu.dot_dimension_numbers<[1], [0], [0], [1], [0, 0, 1, 1], [], []>} : vector<2x32xf32>, vector<32x64xf32>, vector<2x64xf32> -> vector<2x64xf32>
    %124 = arith.addf %123, %11 : vector<2x64xf32>
    %125 = arith.negf %124 : vector<2x64xf32>
    %126 = math.exp %125 : vector<2x64xf32>
    %cst_31 = arith.constant 1.000000e+00 : f32
    %127 = vector.broadcast %cst_31 : f32 to vector<2x64xf32>
    %128 = arith.addf %127, %126 : vector<2x64xf32>
    %129 = arith.divf %127, %128 : vector<2x64xf32>
    %130 = math.tanh %124 : vector<2x64xf32>
    %131 = vector.extract_strided_slice %129 {offsets = [0, 0], sizes = [2, 16], strides = [1, 1]} : vector<2x64xf32> to vector<2x16xf32>
    %132 = vector.extract_strided_slice %129 {offsets = [0, 16], sizes = [2, 16], strides = [1, 1]} : vector<2x64xf32> to vector<2x16xf32>
    %133 = vector.extract_strided_slice %130 {offsets = [0, 32], sizes = [2, 16], strides = [1, 1]} : vector<2x64xf32> to vector<2x16xf32>
    %134 = vector.extract_strided_slice %129 {offsets = [0, 48], sizes = [2, 16], strides = [1, 1]} : vector<2x64xf32> to vector<2x16xf32>
    %135 = arith.mulf %132, %73 : vector<2x16xf32>
    %136 = arith.mulf %131, %133 : vector<2x16xf32>
    %137 = arith.addf %135, %136 : vector<2x16xf32>
    %138 = math.tanh %137 : vector<2x16xf32>
    %139 = arith.mulf %134, %138 : vector<2x16xf32>
    %140 = arith.mulf %139, %14 : vector<2x16xf32>
    %cst_32 = arith.constant dense<0.000000e+00> : vector<2xf32>
    %141 = vector.multi_reduction <add>, %140, %cst_32 [1] : vector<2x16xf32> to vector<2xf32>
    %142 = vector.shape_cast %141 : vector<2xf32> to vector<2x1xf32>
    %143 = arith.addf %142, %17 : vector<2x1xf32>
    %c1_i32 = arith.constant 1 : i32
    %144 = vector.broadcast %c1_i32 : i32 to vector<2x8xi32>
    %145 = arith.cmpi eq, %18, %144 : vector<2x8xi32>
    %146 = vector.shape_cast %143 : vector<2x1xf32> to vector<2x1xf32>
    %147 = vector.broadcast %146 : vector<2x1xf32> to vector<2x8xf32>
    %148 = arith.select %145, %147, %84 : vector<2x8xi1>, vector<2x8xf32>
    %c0_33 = arith.constant 0 : index
    %c16 = arith.constant 16 : index
    %149 = vector.load %arg0[%c0_33, %c16] : memref<2x64xf32, #tpu.memory_space<vmem>>, vector<2x8xf32>
    %150 = tpu.concatenate %149, %103 in 1 : vector<2x8xf32>, vector<2x16xf32> -> vector<2x24xf32>
    %cst_34 = arith.constant dense<0.000000e+00> : vector<2x64xf32>
    %151 = tpu.matmul %150, %0, %cst_34 {dimension_numbers = #tpu.dot_dimension_numbers<[1], [0], [0], [1], [0, 0, 1, 1], [], []>} : vector<2x24xf32>, vector<24x64xf32>, vector<2x64xf32> -> vector<2x64xf32>
    %152 = arith.addf %151, %5 : vector<2x64xf32>
    %153 = arith.negf %152 : vector<2x64xf32>
    %154 = math.exp %153 : vector<2x64xf32>
    %cst_35 = arith.constant 1.000000e+00 : f32
    %155 = vector.broadcast %cst_35 : f32 to vector<2x64xf32>
    %156 = arith.addf %155, %154 : vector<2x64xf32>
    %157 = arith.divf %155, %156 : vector<2x64xf32>
    %158 = math.tanh %152 : vector<2x64xf32>
    %159 = vector.extract_strided_slice %157 {offsets = [0, 0], sizes = [2, 16], strides = [1, 1]} : vector<2x64xf32> to vector<2x16xf32>
    %160 = vector.extract_strided_slice %157 {offsets = [0, 16], sizes = [2, 16], strides = [1, 1]} : vector<2x64xf32> to vector<2x16xf32>
    %161 = vector.extract_strided_slice %158 {offsets = [0, 32], sizes = [2, 16], strides = [1, 1]} : vector<2x64xf32> to vector<2x16xf32>
    %162 = vector.extract_strided_slice %157 {offsets = [0, 48], sizes = [2, 16], strides = [1, 1]} : vector<2x64xf32> to vector<2x16xf32>
    %163 = arith.mulf %160, %101 : vector<2x16xf32>
    %164 = arith.mulf %159, %161 : vector<2x16xf32>
    %165 = arith.addf %163, %164 : vector<2x16xf32>
    %166 = math.tanh %165 : vector<2x16xf32>
    %167 = arith.mulf %162, %166 : vector<2x16xf32>
    %168 = tpu.concatenate %167, %121 in 1 : vector<2x16xf32>, vector<2x16xf32> -> vector<2x32xf32>
    %cst_36 = arith.constant dense<0.000000e+00> : vector<2x64xf32>
    %169 = tpu.matmul %168, %1, %cst_36 {dimension_numbers = #tpu.dot_dimension_numbers<[1], [0], [0], [1], [0, 0, 1, 1], [], []>} : vector<2x32xf32>, vector<32x64xf32>, vector<2x64xf32> -> vector<2x64xf32>
    %170 = arith.addf %169, %8 : vector<2x64xf32>
    %171 = arith.negf %170 : vector<2x64xf32>
    %172 = math.exp %171 : vector<2x64xf32>
    %cst_37 = arith.constant 1.000000e+00 : f32
    %173 = vector.broadcast %cst_37 : f32 to vector<2x64xf32>
    %174 = arith.addf %173, %172 : vector<2x64xf32>
    %175 = arith.divf %173, %174 : vector<2x64xf32>
    %176 = math.tanh %170 : vector<2x64xf32>
    %177 = vector.extract_strided_slice %175 {offsets = [0, 0], sizes = [2, 16], strides = [1, 1]} : vector<2x64xf32> to vector<2x16xf32>
    %178 = vector.extract_strided_slice %175 {offsets = [0, 16], sizes = [2, 16], strides = [1, 1]} : vector<2x64xf32> to vector<2x16xf32>
    %179 = vector.extract_strided_slice %176 {offsets = [0, 32], sizes = [2, 16], strides = [1, 1]} : vector<2x64xf32> to vector<2x16xf32>
    %180 = vector.extract_strided_slice %175 {offsets = [0, 48], sizes = [2, 16], strides = [1, 1]} : vector<2x64xf32> to vector<2x16xf32>
    %181 = arith.mulf %178, %119 : vector<2x16xf32>
    %182 = arith.mulf %177, %179 : vector<2x16xf32>
    %183 = arith.addf %181, %182 : vector<2x16xf32>
    %184 = math.tanh %183 : vector<2x16xf32>
    %185 = arith.mulf %180, %184 : vector<2x16xf32>
    %186 = tpu.concatenate %185, %139 in 1 : vector<2x16xf32>, vector<2x16xf32> -> vector<2x32xf32>
    %cst_38 = arith.constant dense<0.000000e+00> : vector<2x64xf32>
    %187 = tpu.matmul %186, %2, %cst_38 {dimension_numbers = #tpu.dot_dimension_numbers<[1], [0], [0], [1], [0, 0, 1, 1], [], []>} : vector<2x32xf32>, vector<32x64xf32>, vector<2x64xf32> -> vector<2x64xf32>
    %188 = arith.addf %187, %11 : vector<2x64xf32>
    %189 = arith.negf %188 : vector<2x64xf32>
    %190 = math.exp %189 : vector<2x64xf32>
    %cst_39 = arith.constant 1.000000e+00 : f32
    %191 = vector.broadcast %cst_39 : f32 to vector<2x64xf32>
    %192 = arith.addf %191, %190 : vector<2x64xf32>
    %193 = arith.divf %191, %192 : vector<2x64xf32>
    %194 = math.tanh %188 : vector<2x64xf32>
    %195 = vector.extract_strided_slice %193 {offsets = [0, 0], sizes = [2, 16], strides = [1, 1]} : vector<2x64xf32> to vector<2x16xf32>
    %196 = vector.extract_strided_slice %193 {offsets = [0, 16], sizes = [2, 16], strides = [1, 1]} : vector<2x64xf32> to vector<2x16xf32>
    %197 = vector.extract_strided_slice %194 {offsets = [0, 32], sizes = [2, 16], strides = [1, 1]} : vector<2x64xf32> to vector<2x16xf32>
    %198 = vector.extract_strided_slice %193 {offsets = [0, 48], sizes = [2, 16], strides = [1, 1]} : vector<2x64xf32> to vector<2x16xf32>
    %199 = arith.mulf %196, %137 : vector<2x16xf32>
    %200 = arith.mulf %195, %197 : vector<2x16xf32>
    %201 = arith.addf %199, %200 : vector<2x16xf32>
    %202 = math.tanh %201 : vector<2x16xf32>
    %203 = arith.mulf %198, %202 : vector<2x16xf32>
    %204 = arith.mulf %203, %14 : vector<2x16xf32>
    %cst_40 = arith.constant dense<0.000000e+00> : vector<2xf32>
    %205 = vector.multi_reduction <add>, %204, %cst_40 [1] : vector<2x16xf32> to vector<2xf32>
    %206 = vector.shape_cast %205 : vector<2xf32> to vector<2x1xf32>
    %207 = arith.addf %206, %17 : vector<2x1xf32>
    %c2_i32 = arith.constant 2 : i32
    %208 = vector.broadcast %c2_i32 : i32 to vector<2x8xi32>
    %209 = arith.cmpi eq, %18, %208 : vector<2x8xi32>
    %210 = vector.shape_cast %207 : vector<2x1xf32> to vector<2x1xf32>
    %211 = vector.broadcast %210 : vector<2x1xf32> to vector<2x8xf32>
    %212 = arith.select %209, %211, %148 : vector<2x8xi1>, vector<2x8xf32>
    %c0_41 = arith.constant 0 : index
    %c24 = arith.constant 24 : index
    %213 = vector.load %arg0[%c0_41, %c24] : memref<2x64xf32, #tpu.memory_space<vmem>>, vector<2x8xf32>
    %214 = tpu.concatenate %213, %167 in 1 : vector<2x8xf32>, vector<2x16xf32> -> vector<2x24xf32>
    %cst_42 = arith.constant dense<0.000000e+00> : vector<2x64xf32>
    %215 = tpu.matmul %214, %0, %cst_42 {dimension_numbers = #tpu.dot_dimension_numbers<[1], [0], [0], [1], [0, 0, 1, 1], [], []>} : vector<2x24xf32>, vector<24x64xf32>, vector<2x64xf32> -> vector<2x64xf32>
    %216 = arith.addf %215, %5 : vector<2x64xf32>
    %217 = arith.negf %216 : vector<2x64xf32>
    %218 = math.exp %217 : vector<2x64xf32>
    %cst_43 = arith.constant 1.000000e+00 : f32
    %219 = vector.broadcast %cst_43 : f32 to vector<2x64xf32>
    %220 = arith.addf %219, %218 : vector<2x64xf32>
    %221 = arith.divf %219, %220 : vector<2x64xf32>
    %222 = math.tanh %216 : vector<2x64xf32>
    %223 = vector.extract_strided_slice %221 {offsets = [0, 0], sizes = [2, 16], strides = [1, 1]} : vector<2x64xf32> to vector<2x16xf32>
    %224 = vector.extract_strided_slice %221 {offsets = [0, 16], sizes = [2, 16], strides = [1, 1]} : vector<2x64xf32> to vector<2x16xf32>
    %225 = vector.extract_strided_slice %222 {offsets = [0, 32], sizes = [2, 16], strides = [1, 1]} : vector<2x64xf32> to vector<2x16xf32>
    %226 = vector.extract_strided_slice %221 {offsets = [0, 48], sizes = [2, 16], strides = [1, 1]} : vector<2x64xf32> to vector<2x16xf32>
    %227 = arith.mulf %224, %165 : vector<2x16xf32>
    %228 = arith.mulf %223, %225 : vector<2x16xf32>
    %229 = arith.addf %227, %228 : vector<2x16xf32>
    %230 = math.tanh %229 : vector<2x16xf32>
    %231 = arith.mulf %226, %230 : vector<2x16xf32>
    %232 = tpu.concatenate %231, %185 in 1 : vector<2x16xf32>, vector<2x16xf32> -> vector<2x32xf32>
    %cst_44 = arith.constant dense<0.000000e+00> : vector<2x64xf32>
    %233 = tpu.matmul %232, %1, %cst_44 {dimension_numbers = #tpu.dot_dimension_numbers<[1], [0], [0], [1], [0, 0, 1, 1], [], []>} : vector<2x32xf32>, vector<32x64xf32>, vector<2x64xf32> -> vector<2x64xf32>
    %234 = arith.addf %233, %8 : vector<2x64xf32>
    %235 = arith.negf %234 : vector<2x64xf32>
    %236 = math.exp %235 : vector<2x64xf32>
    %cst_45 = arith.constant 1.000000e+00 : f32
    %237 = vector.broadcast %cst_45 : f32 to vector<2x64xf32>
    %238 = arith.addf %237, %236 : vector<2x64xf32>
    %239 = arith.divf %237, %238 : vector<2x64xf32>
    %240 = math.tanh %234 : vector<2x64xf32>
    %241 = vector.extract_strided_slice %239 {offsets = [0, 0], sizes = [2, 16], strides = [1, 1]} : vector<2x64xf32> to vector<2x16xf32>
    %242 = vector.extract_strided_slice %239 {offsets = [0, 16], sizes = [2, 16], strides = [1, 1]} : vector<2x64xf32> to vector<2x16xf32>
    %243 = vector.extract_strided_slice %240 {offsets = [0, 32], sizes = [2, 16], strides = [1, 1]} : vector<2x64xf32> to vector<2x16xf32>
    %244 = vector.extract_strided_slice %239 {offsets = [0, 48], sizes = [2, 16], strides = [1, 1]} : vector<2x64xf32> to vector<2x16xf32>
    %245 = arith.mulf %242, %183 : vector<2x16xf32>
    %246 = arith.mulf %241, %243 : vector<2x16xf32>
    %247 = arith.addf %245, %246 : vector<2x16xf32>
    %248 = math.tanh %247 : vector<2x16xf32>
    %249 = arith.mulf %244, %248 : vector<2x16xf32>
    %250 = tpu.concatenate %249, %203 in 1 : vector<2x16xf32>, vector<2x16xf32> -> vector<2x32xf32>
    %cst_46 = arith.constant dense<0.000000e+00> : vector<2x64xf32>
    %251 = tpu.matmul %250, %2, %cst_46 {dimension_numbers = #tpu.dot_dimension_numbers<[1], [0], [0], [1], [0, 0, 1, 1], [], []>} : vector<2x32xf32>, vector<32x64xf32>, vector<2x64xf32> -> vector<2x64xf32>
    %252 = arith.addf %251, %11 : vector<2x64xf32>
    %253 = arith.negf %252 : vector<2x64xf32>
    %254 = math.exp %253 : vector<2x64xf32>
    %cst_47 = arith.constant 1.000000e+00 : f32
    %255 = vector.broadcast %cst_47 : f32 to vector<2x64xf32>
    %256 = arith.addf %255, %254 : vector<2x64xf32>
    %257 = arith.divf %255, %256 : vector<2x64xf32>
    %258 = math.tanh %252 : vector<2x64xf32>
    %259 = vector.extract_strided_slice %257 {offsets = [0, 0], sizes = [2, 16], strides = [1, 1]} : vector<2x64xf32> to vector<2x16xf32>
    %260 = vector.extract_strided_slice %257 {offsets = [0, 16], sizes = [2, 16], strides = [1, 1]} : vector<2x64xf32> to vector<2x16xf32>
    %261 = vector.extract_strided_slice %258 {offsets = [0, 32], sizes = [2, 16], strides = [1, 1]} : vector<2x64xf32> to vector<2x16xf32>
    %262 = vector.extract_strided_slice %257 {offsets = [0, 48], sizes = [2, 16], strides = [1, 1]} : vector<2x64xf32> to vector<2x16xf32>
    %263 = arith.mulf %260, %201 : vector<2x16xf32>
    %264 = arith.mulf %259, %261 : vector<2x16xf32>
    %265 = arith.addf %263, %264 : vector<2x16xf32>
    %266 = math.tanh %265 : vector<2x16xf32>
    %267 = arith.mulf %262, %266 : vector<2x16xf32>
    %268 = arith.mulf %267, %14 : vector<2x16xf32>
    %cst_48 = arith.constant dense<0.000000e+00> : vector<2xf32>
    %269 = vector.multi_reduction <add>, %268, %cst_48 [1] : vector<2x16xf32> to vector<2xf32>
    %270 = vector.shape_cast %269 : vector<2xf32> to vector<2x1xf32>
    %271 = arith.addf %270, %17 : vector<2x1xf32>
    %c3_i32 = arith.constant 3 : i32
    %272 = vector.broadcast %c3_i32 : i32 to vector<2x8xi32>
    %273 = arith.cmpi eq, %18, %272 : vector<2x8xi32>
    %274 = vector.shape_cast %271 : vector<2x1xf32> to vector<2x1xf32>
    %275 = vector.broadcast %274 : vector<2x1xf32> to vector<2x8xf32>
    %276 = arith.select %273, %275, %212 : vector<2x8xi1>, vector<2x8xf32>
    %c0_49 = arith.constant 0 : index
    %c32 = arith.constant 32 : index
    %277 = vector.load %arg0[%c0_49, %c32] : memref<2x64xf32, #tpu.memory_space<vmem>>, vector<2x8xf32>
    %278 = tpu.concatenate %277, %231 in 1 : vector<2x8xf32>, vector<2x16xf32> -> vector<2x24xf32>
    %cst_50 = arith.constant dense<0.000000e+00> : vector<2x64xf32>
    %279 = tpu.matmul %278, %0, %cst_50 {dimension_numbers = #tpu.dot_dimension_numbers<[1], [0], [0], [1], [0, 0, 1, 1], [], []>} : vector<2x24xf32>, vector<24x64xf32>, vector<2x64xf32> -> vector<2x64xf32>
    %280 = arith.addf %279, %5 : vector<2x64xf32>
    %281 = arith.negf %280 : vector<2x64xf32>
    %282 = math.exp %281 : vector<2x64xf32>
    %cst_51 = arith.constant 1.000000e+00 : f32
    %283 = vector.broadcast %cst_51 : f32 to vector<2x64xf32>
    %284 = arith.addf %283, %282 : vector<2x64xf32>
    %285 = arith.divf %283, %284 : vector<2x64xf32>
    %286 = math.tanh %280 : vector<2x64xf32>
    %287 = vector.extract_strided_slice %285 {offsets = [0, 0], sizes = [2, 16], strides = [1, 1]} : vector<2x64xf32> to vector<2x16xf32>
    %288 = vector.extract_strided_slice %285 {offsets = [0, 16], sizes = [2, 16], strides = [1, 1]} : vector<2x64xf32> to vector<2x16xf32>
    %289 = vector.extract_strided_slice %286 {offsets = [0, 32], sizes = [2, 16], strides = [1, 1]} : vector<2x64xf32> to vector<2x16xf32>
    %290 = vector.extract_strided_slice %285 {offsets = [0, 48], sizes = [2, 16], strides = [1, 1]} : vector<2x64xf32> to vector<2x16xf32>
    %291 = arith.mulf %288, %229 : vector<2x16xf32>
    %292 = arith.mulf %287, %289 : vector<2x16xf32>
    %293 = arith.addf %291, %292 : vector<2x16xf32>
    %294 = math.tanh %293 : vector<2x16xf32>
    %295 = arith.mulf %290, %294 : vector<2x16xf32>
    %296 = tpu.concatenate %295, %249 in 1 : vector<2x16xf32>, vector<2x16xf32> -> vector<2x32xf32>
    %cst_52 = arith.constant dense<0.000000e+00> : vector<2x64xf32>
    %297 = tpu.matmul %296, %1, %cst_52 {dimension_numbers = #tpu.dot_dimension_numbers<[1], [0], [0], [1], [0, 0, 1, 1], [], []>} : vector<2x32xf32>, vector<32x64xf32>, vector<2x64xf32> -> vector<2x64xf32>
    %298 = arith.addf %297, %8 : vector<2x64xf32>
    %299 = arith.negf %298 : vector<2x64xf32>
    %300 = math.exp %299 : vector<2x64xf32>
    %cst_53 = arith.constant 1.000000e+00 : f32
    %301 = vector.broadcast %cst_53 : f32 to vector<2x64xf32>
    %302 = arith.addf %301, %300 : vector<2x64xf32>
    %303 = arith.divf %301, %302 : vector<2x64xf32>
    %304 = math.tanh %298 : vector<2x64xf32>
    %305 = vector.extract_strided_slice %303 {offsets = [0, 0], sizes = [2, 16], strides = [1, 1]} : vector<2x64xf32> to vector<2x16xf32>
    %306 = vector.extract_strided_slice %303 {offsets = [0, 16], sizes = [2, 16], strides = [1, 1]} : vector<2x64xf32> to vector<2x16xf32>
    %307 = vector.extract_strided_slice %304 {offsets = [0, 32], sizes = [2, 16], strides = [1, 1]} : vector<2x64xf32> to vector<2x16xf32>
    %308 = vector.extract_strided_slice %303 {offsets = [0, 48], sizes = [2, 16], strides = [1, 1]} : vector<2x64xf32> to vector<2x16xf32>
    %309 = arith.mulf %306, %247 : vector<2x16xf32>
    %310 = arith.mulf %305, %307 : vector<2x16xf32>
    %311 = arith.addf %309, %310 : vector<2x16xf32>
    %312 = math.tanh %311 : vector<2x16xf32>
    %313 = arith.mulf %308, %312 : vector<2x16xf32>
    %314 = tpu.concatenate %313, %267 in 1 : vector<2x16xf32>, vector<2x16xf32> -> vector<2x32xf32>
    %cst_54 = arith.constant dense<0.000000e+00> : vector<2x64xf32>
    %315 = tpu.matmul %314, %2, %cst_54 {dimension_numbers = #tpu.dot_dimension_numbers<[1], [0], [0], [1], [0, 0, 1, 1], [], []>} : vector<2x32xf32>, vector<32x64xf32>, vector<2x64xf32> -> vector<2x64xf32>
    %316 = arith.addf %315, %11 : vector<2x64xf32>
    %317 = arith.negf %316 : vector<2x64xf32>
    %318 = math.exp %317 : vector<2x64xf32>
    %cst_55 = arith.constant 1.000000e+00 : f32
    %319 = vector.broadcast %cst_55 : f32 to vector<2x64xf32>
    %320 = arith.addf %319, %318 : vector<2x64xf32>
    %321 = arith.divf %319, %320 : vector<2x64xf32>
    %322 = math.tanh %316 : vector<2x64xf32>
    %323 = vector.extract_strided_slice %321 {offsets = [0, 0], sizes = [2, 16], strides = [1, 1]} : vector<2x64xf32> to vector<2x16xf32>
    %324 = vector.extract_strided_slice %321 {offsets = [0, 16], sizes = [2, 16], strides = [1, 1]} : vector<2x64xf32> to vector<2x16xf32>
    %325 = vector.extract_strided_slice %322 {offsets = [0, 32], sizes = [2, 16], strides = [1, 1]} : vector<2x64xf32> to vector<2x16xf32>
    %326 = vector.extract_strided_slice %321 {offsets = [0, 48], sizes = [2, 16], strides = [1, 1]} : vector<2x64xf32> to vector<2x16xf32>
    %327 = arith.mulf %324, %265 : vector<2x16xf32>
    %328 = arith.mulf %323, %325 : vector<2x16xf32>
    %329 = arith.addf %327, %328 : vector<2x16xf32>
    %330 = math.tanh %329 : vector<2x16xf32>
    %331 = arith.mulf %326, %330 : vector<2x16xf32>
    %332 = arith.mulf %331, %14 : vector<2x16xf32>
    %cst_56 = arith.constant dense<0.000000e+00> : vector<2xf32>
    %333 = vector.multi_reduction <add>, %332, %cst_56 [1] : vector<2x16xf32> to vector<2xf32>
    %334 = vector.shape_cast %333 : vector<2xf32> to vector<2x1xf32>
    %335 = arith.addf %334, %17 : vector<2x1xf32>
    %c4_i32 = arith.constant 4 : i32
    %336 = vector.broadcast %c4_i32 : i32 to vector<2x8xi32>
    %337 = arith.cmpi eq, %18, %336 : vector<2x8xi32>
    %338 = vector.shape_cast %335 : vector<2x1xf32> to vector<2x1xf32>
    %339 = vector.broadcast %338 : vector<2x1xf32> to vector<2x8xf32>
    %340 = arith.select %337, %339, %276 : vector<2x8xi1>, vector<2x8xf32>
    %c0_57 = arith.constant 0 : index
    %c40 = arith.constant 40 : index
    %341 = vector.load %arg0[%c0_57, %c40] : memref<2x64xf32, #tpu.memory_space<vmem>>, vector<2x8xf32>
    %342 = tpu.concatenate %341, %295 in 1 : vector<2x8xf32>, vector<2x16xf32> -> vector<2x24xf32>
    %cst_58 = arith.constant dense<0.000000e+00> : vector<2x64xf32>
    %343 = tpu.matmul %342, %0, %cst_58 {dimension_numbers = #tpu.dot_dimension_numbers<[1], [0], [0], [1], [0, 0, 1, 1], [], []>} : vector<2x24xf32>, vector<24x64xf32>, vector<2x64xf32> -> vector<2x64xf32>
    %344 = arith.addf %343, %5 : vector<2x64xf32>
    %345 = arith.negf %344 : vector<2x64xf32>
    %346 = math.exp %345 : vector<2x64xf32>
    %cst_59 = arith.constant 1.000000e+00 : f32
    %347 = vector.broadcast %cst_59 : f32 to vector<2x64xf32>
    %348 = arith.addf %347, %346 : vector<2x64xf32>
    %349 = arith.divf %347, %348 : vector<2x64xf32>
    %350 = math.tanh %344 : vector<2x64xf32>
    %351 = vector.extract_strided_slice %349 {offsets = [0, 0], sizes = [2, 16], strides = [1, 1]} : vector<2x64xf32> to vector<2x16xf32>
    %352 = vector.extract_strided_slice %349 {offsets = [0, 16], sizes = [2, 16], strides = [1, 1]} : vector<2x64xf32> to vector<2x16xf32>
    %353 = vector.extract_strided_slice %350 {offsets = [0, 32], sizes = [2, 16], strides = [1, 1]} : vector<2x64xf32> to vector<2x16xf32>
    %354 = vector.extract_strided_slice %349 {offsets = [0, 48], sizes = [2, 16], strides = [1, 1]} : vector<2x64xf32> to vector<2x16xf32>
    %355 = arith.mulf %352, %293 : vector<2x16xf32>
    %356 = arith.mulf %351, %353 : vector<2x16xf32>
    %357 = arith.addf %355, %356 : vector<2x16xf32>
    %358 = math.tanh %357 : vector<2x16xf32>
    %359 = arith.mulf %354, %358 : vector<2x16xf32>
    %360 = tpu.concatenate %359, %313 in 1 : vector<2x16xf32>, vector<2x16xf32> -> vector<2x32xf32>
    %cst_60 = arith.constant dense<0.000000e+00> : vector<2x64xf32>
    %361 = tpu.matmul %360, %1, %cst_60 {dimension_numbers = #tpu.dot_dimension_numbers<[1], [0], [0], [1], [0, 0, 1, 1], [], []>} : vector<2x32xf32>, vector<32x64xf32>, vector<2x64xf32> -> vector<2x64xf32>
    %362 = arith.addf %361, %8 : vector<2x64xf32>
    %363 = arith.negf %362 : vector<2x64xf32>
    %364 = math.exp %363 : vector<2x64xf32>
    %cst_61 = arith.constant 1.000000e+00 : f32
    %365 = vector.broadcast %cst_61 : f32 to vector<2x64xf32>
    %366 = arith.addf %365, %364 : vector<2x64xf32>
    %367 = arith.divf %365, %366 : vector<2x64xf32>
    %368 = math.tanh %362 : vector<2x64xf32>
    %369 = vector.extract_strided_slice %367 {offsets = [0, 0], sizes = [2, 16], strides = [1, 1]} : vector<2x64xf32> to vector<2x16xf32>
    %370 = vector.extract_strided_slice %367 {offsets = [0, 16], sizes = [2, 16], strides = [1, 1]} : vector<2x64xf32> to vector<2x16xf32>
    %371 = vector.extract_strided_slice %368 {offsets = [0, 32], sizes = [2, 16], strides = [1, 1]} : vector<2x64xf32> to vector<2x16xf32>
    %372 = vector.extract_strided_slice %367 {offsets = [0, 48], sizes = [2, 16], strides = [1, 1]} : vector<2x64xf32> to vector<2x16xf32>
    %373 = arith.mulf %370, %311 : vector<2x16xf32>
    %374 = arith.mulf %369, %371 : vector<2x16xf32>
    %375 = arith.addf %373, %374 : vector<2x16xf32>
    %376 = math.tanh %375 : vector<2x16xf32>
    %377 = arith.mulf %372, %376 : vector<2x16xf32>
    %378 = tpu.concatenate %377, %331 in 1 : vector<2x16xf32>, vector<2x16xf32> -> vector<2x32xf32>
    %cst_62 = arith.constant dense<0.000000e+00> : vector<2x64xf32>
    %379 = tpu.matmul %378, %2, %cst_62 {dimension_numbers = #tpu.dot_dimension_numbers<[1], [0], [0], [1], [0, 0, 1, 1], [], []>} : vector<2x32xf32>, vector<32x64xf32>, vector<2x64xf32> -> vector<2x64xf32>
    %380 = arith.addf %379, %11 : vector<2x64xf32>
    %381 = arith.negf %380 : vector<2x64xf32>
    %382 = math.exp %381 : vector<2x64xf32>
    %cst_63 = arith.constant 1.000000e+00 : f32
    %383 = vector.broadcast %cst_63 : f32 to vector<2x64xf32>
    %384 = arith.addf %383, %382 : vector<2x64xf32>
    %385 = arith.divf %383, %384 : vector<2x64xf32>
    %386 = math.tanh %380 : vector<2x64xf32>
    %387 = vector.extract_strided_slice %385 {offsets = [0, 0], sizes = [2, 16], strides = [1, 1]} : vector<2x64xf32> to vector<2x16xf32>
    %388 = vector.extract_strided_slice %385 {offsets = [0, 16], sizes = [2, 16], strides = [1, 1]} : vector<2x64xf32> to vector<2x16xf32>
    %389 = vector.extract_strided_slice %386 {offsets = [0, 32], sizes = [2, 16], strides = [1, 1]} : vector<2x64xf32> to vector<2x16xf32>
    %390 = vector.extract_strided_slice %385 {offsets = [0, 48], sizes = [2, 16], strides = [1, 1]} : vector<2x64xf32> to vector<2x16xf32>
    %391 = arith.mulf %388, %329 : vector<2x16xf32>
    %392 = arith.mulf %387, %389 : vector<2x16xf32>
    %393 = arith.addf %391, %392 : vector<2x16xf32>
    %394 = math.tanh %393 : vector<2x16xf32>
    %395 = arith.mulf %390, %394 : vector<2x16xf32>
    %396 = arith.mulf %395, %14 : vector<2x16xf32>
    %cst_64 = arith.constant dense<0.000000e+00> : vector<2xf32>
    %397 = vector.multi_reduction <add>, %396, %cst_64 [1] : vector<2x16xf32> to vector<2xf32>
    %398 = vector.shape_cast %397 : vector<2xf32> to vector<2x1xf32>
    %399 = arith.addf %398, %17 : vector<2x1xf32>
    %c5_i32 = arith.constant 5 : i32
    %400 = vector.broadcast %c5_i32 : i32 to vector<2x8xi32>
    %401 = arith.cmpi eq, %18, %400 : vector<2x8xi32>
    %402 = vector.shape_cast %399 : vector<2x1xf32> to vector<2x1xf32>
    %403 = vector.broadcast %402 : vector<2x1xf32> to vector<2x8xf32>
    %404 = arith.select %401, %403, %340 : vector<2x8xi1>, vector<2x8xf32>
    %c0_65 = arith.constant 0 : index
    %c48 = arith.constant 48 : index
    %405 = vector.load %arg0[%c0_65, %c48] : memref<2x64xf32, #tpu.memory_space<vmem>>, vector<2x8xf32>
    %406 = tpu.concatenate %405, %359 in 1 : vector<2x8xf32>, vector<2x16xf32> -> vector<2x24xf32>
    %cst_66 = arith.constant dense<0.000000e+00> : vector<2x64xf32>
    %407 = tpu.matmul %406, %0, %cst_66 {dimension_numbers = #tpu.dot_dimension_numbers<[1], [0], [0], [1], [0, 0, 1, 1], [], []>} : vector<2x24xf32>, vector<24x64xf32>, vector<2x64xf32> -> vector<2x64xf32>
    %408 = arith.addf %407, %5 : vector<2x64xf32>
    %409 = arith.negf %408 : vector<2x64xf32>
    %410 = math.exp %409 : vector<2x64xf32>
    %cst_67 = arith.constant 1.000000e+00 : f32
    %411 = vector.broadcast %cst_67 : f32 to vector<2x64xf32>
    %412 = arith.addf %411, %410 : vector<2x64xf32>
    %413 = arith.divf %411, %412 : vector<2x64xf32>
    %414 = math.tanh %408 : vector<2x64xf32>
    %415 = vector.extract_strided_slice %413 {offsets = [0, 0], sizes = [2, 16], strides = [1, 1]} : vector<2x64xf32> to vector<2x16xf32>
    %416 = vector.extract_strided_slice %413 {offsets = [0, 16], sizes = [2, 16], strides = [1, 1]} : vector<2x64xf32> to vector<2x16xf32>
    %417 = vector.extract_strided_slice %414 {offsets = [0, 32], sizes = [2, 16], strides = [1, 1]} : vector<2x64xf32> to vector<2x16xf32>
    %418 = vector.extract_strided_slice %413 {offsets = [0, 48], sizes = [2, 16], strides = [1, 1]} : vector<2x64xf32> to vector<2x16xf32>
    %419 = arith.mulf %416, %357 : vector<2x16xf32>
    %420 = arith.mulf %415, %417 : vector<2x16xf32>
    %421 = arith.addf %419, %420 : vector<2x16xf32>
    %422 = math.tanh %421 : vector<2x16xf32>
    %423 = arith.mulf %418, %422 : vector<2x16xf32>
    %424 = tpu.concatenate %423, %377 in 1 : vector<2x16xf32>, vector<2x16xf32> -> vector<2x32xf32>
    %cst_68 = arith.constant dense<0.000000e+00> : vector<2x64xf32>
    %425 = tpu.matmul %424, %1, %cst_68 {dimension_numbers = #tpu.dot_dimension_numbers<[1], [0], [0], [1], [0, 0, 1, 1], [], []>} : vector<2x32xf32>, vector<32x64xf32>, vector<2x64xf32> -> vector<2x64xf32>
    %426 = arith.addf %425, %8 : vector<2x64xf32>
    %427 = arith.negf %426 : vector<2x64xf32>
    %428 = math.exp %427 : vector<2x64xf32>
    %cst_69 = arith.constant 1.000000e+00 : f32
    %429 = vector.broadcast %cst_69 : f32 to vector<2x64xf32>
    %430 = arith.addf %429, %428 : vector<2x64xf32>
    %431 = arith.divf %429, %430 : vector<2x64xf32>
    %432 = math.tanh %426 : vector<2x64xf32>
    %433 = vector.extract_strided_slice %431 {offsets = [0, 0], sizes = [2, 16], strides = [1, 1]} : vector<2x64xf32> to vector<2x16xf32>
    %434 = vector.extract_strided_slice %431 {offsets = [0, 16], sizes = [2, 16], strides = [1, 1]} : vector<2x64xf32> to vector<2x16xf32>
    %435 = vector.extract_strided_slice %432 {offsets = [0, 32], sizes = [2, 16], strides = [1, 1]} : vector<2x64xf32> to vector<2x16xf32>
    %436 = vector.extract_strided_slice %431 {offsets = [0, 48], sizes = [2, 16], strides = [1, 1]} : vector<2x64xf32> to vector<2x16xf32>
    %437 = arith.mulf %434, %375 : vector<2x16xf32>
    %438 = arith.mulf %433, %435 : vector<2x16xf32>
    %439 = arith.addf %437, %438 : vector<2x16xf32>
    %440 = math.tanh %439 : vector<2x16xf32>
    %441 = arith.mulf %436, %440 : vector<2x16xf32>
    %442 = tpu.concatenate %441, %395 in 1 : vector<2x16xf32>, vector<2x16xf32> -> vector<2x32xf32>
    %cst_70 = arith.constant dense<0.000000e+00> : vector<2x64xf32>
    %443 = tpu.matmul %442, %2, %cst_70 {dimension_numbers = #tpu.dot_dimension_numbers<[1], [0], [0], [1], [0, 0, 1, 1], [], []>} : vector<2x32xf32>, vector<32x64xf32>, vector<2x64xf32> -> vector<2x64xf32>
    %444 = arith.addf %443, %11 : vector<2x64xf32>
    %445 = arith.negf %444 : vector<2x64xf32>
    %446 = math.exp %445 : vector<2x64xf32>
    %cst_71 = arith.constant 1.000000e+00 : f32
    %447 = vector.broadcast %cst_71 : f32 to vector<2x64xf32>
    %448 = arith.addf %447, %446 : vector<2x64xf32>
    %449 = arith.divf %447, %448 : vector<2x64xf32>
    %450 = math.tanh %444 : vector<2x64xf32>
    %451 = vector.extract_strided_slice %449 {offsets = [0, 0], sizes = [2, 16], strides = [1, 1]} : vector<2x64xf32> to vector<2x16xf32>
    %452 = vector.extract_strided_slice %449 {offsets = [0, 16], sizes = [2, 16], strides = [1, 1]} : vector<2x64xf32> to vector<2x16xf32>
    %453 = vector.extract_strided_slice %450 {offsets = [0, 32], sizes = [2, 16], strides = [1, 1]} : vector<2x64xf32> to vector<2x16xf32>
    %454 = vector.extract_strided_slice %449 {offsets = [0, 48], sizes = [2, 16], strides = [1, 1]} : vector<2x64xf32> to vector<2x16xf32>
    %455 = arith.mulf %452, %393 : vector<2x16xf32>
    %456 = arith.mulf %451, %453 : vector<2x16xf32>
    %457 = arith.addf %455, %456 : vector<2x16xf32>
    %458 = math.tanh %457 : vector<2x16xf32>
    %459 = arith.mulf %454, %458 : vector<2x16xf32>
    %460 = arith.mulf %459, %14 : vector<2x16xf32>
    %cst_72 = arith.constant dense<0.000000e+00> : vector<2xf32>
    %461 = vector.multi_reduction <add>, %460, %cst_72 [1] : vector<2x16xf32> to vector<2xf32>
    %462 = vector.shape_cast %461 : vector<2xf32> to vector<2x1xf32>
    %463 = arith.addf %462, %17 : vector<2x1xf32>
    %c6_i32 = arith.constant 6 : i32
    %464 = vector.broadcast %c6_i32 : i32 to vector<2x8xi32>
    %465 = arith.cmpi eq, %18, %464 : vector<2x8xi32>
    %466 = vector.shape_cast %463 : vector<2x1xf32> to vector<2x1xf32>
    %467 = vector.broadcast %466 : vector<2x1xf32> to vector<2x8xf32>
    %468 = arith.select %465, %467, %404 : vector<2x8xi1>, vector<2x8xf32>
    %c0_73 = arith.constant 0 : index
    %c56 = arith.constant 56 : index
    %469 = vector.load %arg0[%c0_73, %c56] : memref<2x64xf32, #tpu.memory_space<vmem>>, vector<2x8xf32>
    %470 = tpu.concatenate %469, %423 in 1 : vector<2x8xf32>, vector<2x16xf32> -> vector<2x24xf32>
    %cst_74 = arith.constant dense<0.000000e+00> : vector<2x64xf32>
    %471 = tpu.matmul %470, %0, %cst_74 {dimension_numbers = #tpu.dot_dimension_numbers<[1], [0], [0], [1], [0, 0, 1, 1], [], []>} : vector<2x24xf32>, vector<24x64xf32>, vector<2x64xf32> -> vector<2x64xf32>
    %472 = arith.addf %471, %5 : vector<2x64xf32>
    %473 = arith.negf %472 : vector<2x64xf32>
    %474 = math.exp %473 : vector<2x64xf32>
    %cst_75 = arith.constant 1.000000e+00 : f32
    %475 = vector.broadcast %cst_75 : f32 to vector<2x64xf32>
    %476 = arith.addf %475, %474 : vector<2x64xf32>
    %477 = arith.divf %475, %476 : vector<2x64xf32>
    %478 = math.tanh %472 : vector<2x64xf32>
    %479 = vector.extract_strided_slice %477 {offsets = [0, 0], sizes = [2, 16], strides = [1, 1]} : vector<2x64xf32> to vector<2x16xf32>
    %480 = vector.extract_strided_slice %477 {offsets = [0, 16], sizes = [2, 16], strides = [1, 1]} : vector<2x64xf32> to vector<2x16xf32>
    %481 = vector.extract_strided_slice %478 {offsets = [0, 32], sizes = [2, 16], strides = [1, 1]} : vector<2x64xf32> to vector<2x16xf32>
    %482 = vector.extract_strided_slice %477 {offsets = [0, 48], sizes = [2, 16], strides = [1, 1]} : vector<2x64xf32> to vector<2x16xf32>
    %483 = arith.mulf %480, %421 : vector<2x16xf32>
    %484 = arith.mulf %479, %481 : vector<2x16xf32>
    %485 = arith.addf %483, %484 : vector<2x16xf32>
    %486 = math.tanh %485 : vector<2x16xf32>
    %487 = arith.mulf %482, %486 : vector<2x16xf32>
    %488 = tpu.concatenate %487, %441 in 1 : vector<2x16xf32>, vector<2x16xf32> -> vector<2x32xf32>
    %cst_76 = arith.constant dense<0.000000e+00> : vector<2x64xf32>
    %489 = tpu.matmul %488, %1, %cst_76 {dimension_numbers = #tpu.dot_dimension_numbers<[1], [0], [0], [1], [0, 0, 1, 1], [], []>} : vector<2x32xf32>, vector<32x64xf32>, vector<2x64xf32> -> vector<2x64xf32>
    %490 = arith.addf %489, %8 : vector<2x64xf32>
    %491 = arith.negf %490 : vector<2x64xf32>
    %492 = math.exp %491 : vector<2x64xf32>
    %cst_77 = arith.constant 1.000000e+00 : f32
    %493 = vector.broadcast %cst_77 : f32 to vector<2x64xf32>
    %494 = arith.addf %493, %492 : vector<2x64xf32>
    %495 = arith.divf %493, %494 : vector<2x64xf32>
    %496 = math.tanh %490 : vector<2x64xf32>
    %497 = vector.extract_strided_slice %495 {offsets = [0, 0], sizes = [2, 16], strides = [1, 1]} : vector<2x64xf32> to vector<2x16xf32>
    %498 = vector.extract_strided_slice %495 {offsets = [0, 16], sizes = [2, 16], strides = [1, 1]} : vector<2x64xf32> to vector<2x16xf32>
    %499 = vector.extract_strided_slice %496 {offsets = [0, 32], sizes = [2, 16], strides = [1, 1]} : vector<2x64xf32> to vector<2x16xf32>
    %500 = vector.extract_strided_slice %495 {offsets = [0, 48], sizes = [2, 16], strides = [1, 1]} : vector<2x64xf32> to vector<2x16xf32>
    %501 = arith.mulf %498, %439 : vector<2x16xf32>
    %502 = arith.mulf %497, %499 : vector<2x16xf32>
    %503 = arith.addf %501, %502 : vector<2x16xf32>
    %504 = math.tanh %503 : vector<2x16xf32>
    %505 = arith.mulf %500, %504 : vector<2x16xf32>
    %506 = tpu.concatenate %505, %459 in 1 : vector<2x16xf32>, vector<2x16xf32> -> vector<2x32xf32>
    %cst_78 = arith.constant dense<0.000000e+00> : vector<2x64xf32>
    %507 = tpu.matmul %506, %2, %cst_78 {dimension_numbers = #tpu.dot_dimension_numbers<[1], [0], [0], [1], [0, 0, 1, 1], [], []>} : vector<2x32xf32>, vector<32x64xf32>, vector<2x64xf32> -> vector<2x64xf32>
    %508 = arith.addf %507, %11 : vector<2x64xf32>
    %509 = arith.negf %508 : vector<2x64xf32>
    %510 = math.exp %509 : vector<2x64xf32>
    %cst_79 = arith.constant 1.000000e+00 : f32
    %511 = vector.broadcast %cst_79 : f32 to vector<2x64xf32>
    %512 = arith.addf %511, %510 : vector<2x64xf32>
    %513 = arith.divf %511, %512 : vector<2x64xf32>
    %514 = math.tanh %508 : vector<2x64xf32>
    %515 = vector.extract_strided_slice %513 {offsets = [0, 0], sizes = [2, 16], strides = [1, 1]} : vector<2x64xf32> to vector<2x16xf32>
    %516 = vector.extract_strided_slice %513 {offsets = [0, 16], sizes = [2, 16], strides = [1, 1]} : vector<2x64xf32> to vector<2x16xf32>
    %517 = vector.extract_strided_slice %514 {offsets = [0, 32], sizes = [2, 16], strides = [1, 1]} : vector<2x64xf32> to vector<2x16xf32>
    %518 = vector.extract_strided_slice %513 {offsets = [0, 48], sizes = [2, 16], strides = [1, 1]} : vector<2x64xf32> to vector<2x16xf32>
    %519 = arith.mulf %516, %457 : vector<2x16xf32>
    %520 = arith.mulf %515, %517 : vector<2x16xf32>
    %521 = arith.addf %519, %520 : vector<2x16xf32>
    %522 = math.tanh %521 : vector<2x16xf32>
    %523 = arith.mulf %518, %522 : vector<2x16xf32>
    %524 = arith.mulf %523, %14 : vector<2x16xf32>
    %cst_80 = arith.constant dense<0.000000e+00> : vector<2xf32>
    %525 = vector.multi_reduction <add>, %524, %cst_80 [1] : vector<2x16xf32> to vector<2xf32>
    %526 = vector.shape_cast %525 : vector<2xf32> to vector<2x1xf32>
    %527 = arith.addf %526, %17 : vector<2x1xf32>
    %c7_i32 = arith.constant 7 : i32
    %528 = vector.broadcast %c7_i32 : i32 to vector<2x8xi32>
    %529 = arith.cmpi eq, %18, %528 : vector<2x8xi32>
    %530 = vector.shape_cast %527 : vector<2x1xf32> to vector<2x1xf32>
    %531 = vector.broadcast %530 : vector<2x1xf32> to vector<2x8xf32>
    %532 = arith.select %529, %531, %468 : vector<2x8xi1>, vector<2x8xf32>
    %c0_81 = arith.constant 0 : index
    %c0_82 = arith.constant 0 : index
    %533 = vector.load %arg9[%c0_81, %c0_82] : memref<2x8xf32, #tpu.memory_space<vmem>>, vector<2x8xf32>
    tpu.vector_store %arg9[%c0_81, %c0_82], %532 {strides = array<i32>} : memref<2x8xf32, #tpu.memory_space<vmem>>, vector<2x8xf32>,
    return
  }
}

</mosaic_0001>

<llo_original>
// kernel: lstm_forward.1
$region0: #{lstm_forward.1}
  #allocation0 [shape = 'u32[]', space=smem, size = 0x4, offset = 0x4, fixed_abs, tag = 'smem constant byte address 0x4 - core index']
  #allocation1 [shape = 'u32[144,128]{1,0:T(1,128)}', space=vmem, size = 0x12000, scoped, tag = 'internal scratch']
  #allocation2 [shape = 'f32[1,1]{1,0:T(1,128)S(1)}', space=vmem, size = 0x200, scoped, tag = 'scoped memory for lstm_forward.1']
  %s0 = inlined_call_operand.vmem [shape: f32[2,64], index: 0, kind: input, shape index: {}]
  %s1 = inlined_call_operand.hbm [shape: f32[24,64], index: 1, kind: input, shape index: {}]
  %s2 = inlined_call_operand.vmem [shape: f32[1,64], index: 2, kind: input, shape index: {}]
  %s3 = inlined_call_operand.vmem [shape: f32[32,64], index: 3, kind: input, shape index: {}]
  %s4 = inlined_call_operand.vmem [shape: f32[1,64], index: 4, kind: input, shape index: {}]
  %s5 = inlined_call_operand.hbm [shape: f32[32,64], index: 5, kind: input, shape index: {}]
  %s6 = inlined_call_operand.vmem [shape: f32[1,64], index: 6, kind: input, shape index: {}]
  %s7 = inlined_call_operand.vmem [shape: f32[1,16], index: 7, kind: input, shape index: {}]
  %s8 = inlined_call_operand.<no memory space> [shape: f32[1,1], index: 8, kind: input, shape index: {}]
  %s9 = inlined_call_operand.hbm [shape: f32[2,8], index: 9, kind: output, shape index: {}]
  %s10 = sld [smem:[#allocation0]]
  $region54: #{lstm_forward.1} parent=0
    _
  %s12 = ssub.s32 1, %s10
  %s13 = scalar_select 0, %s12, %s10
  %v14 = vstv %s8
  %15 = vst [vmem:[#allocation2] sm:$0x1] %v14
  $region1: #{lstm_forward.1} parent=0
    #allocation3 [shape = 'u8[12288]{0}', space=vmem, size = 0x3000, scoped, tag = 'input window, operand 1, single buffered']
    #allocation4 [shape = 's32[1]{0}', space=sflag, size = 0x4, scoped, tag = 'scoped memory for lstm_forward.1']
    #allocation5 [shape = 's32[1]{0}', space=sflag, size = 0x4, scoped, tag = 'scoped memory for lstm_forward.1']
    #allocation6 [shape = 'u8[16384]{0}', space=vmem, size = 0x4000, scoped, tag = 'input window, operand 5, single buffered']
    #allocation7 [shape = 's32[1]{0}', space=sflag, size = 0x4, scoped, tag = 'scoped memory for lstm_forward.1']
    #allocation8 [shape = 'u8[1024]{0}', space=vmem, size = 0x400, scoped, tag = 'output window, operand 0, single buffered']
    %16 = vsyncpa [#allocation4], 0
    %17 = vsyncpa [#allocation7], 0
    %18 = vsyncpa [#allocation5], 0
    // Predicated region
    $region2: #{lstm_forward.1} parent=1 // pred_check
      _
    $region3: #{lstm_forward.1} parent=1 // pred_check_branch
      %20 = sbr.rel (0) target = $region5
    $region4: #{lstm_forward.1} parent=1 // pred_region
      _
    $region5: #{lstm_forward.1} parent=1 // pred_fallthru
      _
    // Predicated region
    $region6: #{lstm_forward.1} parent=1 // pred_check
      _
    $region7: #{lstm_forward.1} parent=1 // pred_check_branch
      %22 = sbr.rel (0) target = $region9
    $region8: #{lstm_forward.1} parent=1 // pred_region
      %s24 = ssub.s32 384, 384
      %25 = vsyncadd [#allocation4], %s24
      %s26 = sshll.u32 [#allocation3], 4
      %s27 = int_to_ptr.vmem [resolvable:$true] %s26
      %32 = dma.hbm_to_vmem [thread:$0]  %s1, 384, %s27, [#allocation4], 128, 128, 8
    $region9: #{lstm_forward.1} parent=1 // pred_fallthru
      _
    // Predicated region
    $region10: #{lstm_forward.1} parent=1 // pred_check
      _
    $region11: #{lstm_forward.1} parent=1 // pred_check_branch
      %34 = sbr.rel (0) target = $region13
    $region12: #{lstm_forward.1} parent=1 // pred_region
      _
    $region13: #{lstm_forward.1} parent=1 // pred_fallthru
      _
    // Predicated region
    $region14: #{lstm_forward.1} parent=1 // pred_check
      _
    $region15: #{lstm_forward.1} parent=1 // pred_check_branch
      %36 = sbr.rel (0) target = $region17
    $region16: #{lstm_forward.1} parent=1 // pred_region
      _
    $region17: #{lstm_forward.1} parent=1 // pred_fallthru
      _
    // Predicated region
    $region18: #{lstm_forward.1} parent=1 // pred_check
      _
    $region19: #{lstm_forward.1} parent=1 // pred_check_branch
      %38 = sbr.rel (0) target = $region21
    $region20: #{lstm_forward.1} parent=1 // pred_region
      _
    $region21: #{lstm_forward.1} parent=1 // pred_fallthru
      _
    // Predicated region
    $region22: #{lstm_forward.1} parent=1 // pred_check
      _
    $region23: #{lstm_forward.1} parent=1 // pred_check_branch
      %40 = sbr.rel (0) target = $region25
    $region24: #{lstm_forward.1} parent=1 // pred_region
      %s42 = ssub.s32 512, 512
      %43 = vsyncadd [#allocation7], %s42
      %s44 = sshll.u32 [#allocation6], 4
      %s45 = int_to_ptr.vmem [resolvable:$true] %s44
      %50 = dma.hbm_to_vmem [thread:$0]  %s5, 512, %s45, [#allocation7], 128, 128, 8
    $region25: #{lstm_forward.1} parent=1 // pred_fallthru
      _
    // Predicated region
    $region26: #{lstm_forward.1} parent=1 // pred_check
      _
    $region27: #{lstm_forward.1} parent=1 // pred_check_branch
      %52 = sbr.rel (0) target = $region29
    $region28: #{lstm_forward.1} parent=1 // pred_region
      _
    $region29: #{lstm_forward.1} parent=1 // pred_fallthru
      _
    // Predicated region
    $region30: #{lstm_forward.1} parent=1 // pred_check
      _
    $region31: #{lstm_forward.1} parent=1 // pred_check_branch
      %54 = sbr.rel (0) target = $region33
    $region32: #{lstm_forward.1} parent=1 // pred_region
      _
    $region33: #{lstm_forward.1} parent=1 // pred_fallthru
      _
    // Predicated region
    $region34: #{lstm_forward.1} parent=1 // pred_check
      _
    $region35: #{lstm_forward.1} parent=1 // pred_check_branch
      %56 = sbr.rel (0) target = $region37
    $region36: #{lstm_forward.1} parent=1 // pred_region
      _
    $region37: #{lstm_forward.1} parent=1 // pred_fallthru
      _
    // Predicated region
    $region38: #{lstm_forward.1} parent=1 // pred_check
      _
    $region39: #{lstm_forward.1} parent=1 // pred_check_branch
      %58 = sbr.rel (0) target = $region41
    $region40: #{lstm_forward.1} parent=1 // pred_region
      %59 = dma.done [#allocation4], 384
    $region41: #{lstm_forward.1} parent=1 // pred_fallthru
      _
    // Predicated region
    $region42: #{lstm_forward.1} parent=1 // pred_check
      _
    $region43: #{lstm_forward.1} parent=1 // pred_check_branch
      %61 = sbr.rel (0) target = $region45
    $region44: #{lstm_forward.1} parent=1 // pred_region
      %62 = dma.done [#allocation7], 512
    $region45: #{lstm_forward.1} parent=1 // pred_fallthru
      _
    %v63 = vld [vmem:[#allocation3] sm:$0xff]
    %v64 = vld [vmem:[#allocation3 + $0x8] sm:$0xff]
    %v65 = vld [vmem:[#allocation3 + $0x10] sm:$0xff]
    %v66 = vld [vmem:[%s3] sm:$0xff]
    %v67 = vld [vmem:[%s3 + $0x8] sm:$0xff]
    %v68 = vld [vmem:[%s3 + $0x10] sm:$0xff]
    %v69 = vld [vmem:[%s3 + $0x18] sm:$0xff]
    %v70 = vld [vmem:[#allocation6] sm:$0xff]
    %v71 = vld [vmem:[#allocation6 + $0x8] sm:$0xff]
    %v72 = vld [vmem:[#allocation6 + $0x10] sm:$0xff]
    %v73 = vld [vmem:[#allocation6 + $0x18] sm:$0xff]
    %v74 = vld [vmem:[%s2] sm:$0x1]
    %v76 = vlaneseq
    %v77 = vshrl.u32 %v76, 7
    %v78 = vsub.s32 0, %v77
    %v79 = vrot.slane %v74, %v78
    %v81 = vld [vmem:[%s4] sm:$0x1]
    %v83 = vlaneseq
    %v84 = vshrl.u32 %v83, 7
    %v85 = vsub.s32 0, %v84
    %v86 = vrot.slane %v81, %v85
    %v88 = vld [vmem:[%s6] sm:$0x1]
    %v90 = vlaneseq
    %v91 = vshrl.u32 %v90, 7
    %v92 = vsub.s32 0, %v91
    %v93 = vrot.slane %v88, %v92
    %v95 = vld [vmem:[%s7] sm:$0x1]
    %v97 = vlaneseq
    %v98 = vshrl.u32 %v97, 7
    %v99 = vsub.s32 0, %v98
    %v100 = vrot.slane %v95, %v99
    %v101 = vld [vmem:[#allocation2] sm:$0x1]
    %v103 = vlaneseq
    %v104 = vshrl.u32 %v103, 7
    %v105 = vsub.s32 0, %v104
    %v106 = vrot.slane %v101, %v105
    %v108 = vlaneseq
    %v109 = vand.u32 %v108, 127
    %v110 = vld [vmem:[%s0] sm:$0x3]
    %vm111 = vcmask 64512
    %v112 = vsel %vm111, %v110, 0.0
    %vm113 = vcmask 195584
    %v115 = vsel %vm113, %v112, 0
    %117 = vmatprep.subr.mxu0 0.0
    %118 = vmatpush1.msra.mxu0 %v63
    %119 = vmatprep.subr.mxu0 0.0
    %120 = vmatpush1.msra.mxu0 %v64
    %121 = vmatprep.subr.mxu0 0.0
    %122 = vmatpush1.msra.mxu0 %v65
    %123 = vmatprep.subr.mxu0 0.0
    %124 = vmatpush1.msra.mxu0 0.0
    %125 = vmatprep.subr.mxu0 0.0
    %126 = vmatpush1.msra.mxu0 0.0
    %127 = vmatprep.subr.mxu0 0.0
    %128 = vmatpush1.msra.mxu0 0.0
    %129 = vmatprep.subr.mxu0 0.0
    %130 = vmatpush1.msra.mxu0 0.0
    %131 = vmatprep.subr.mxu0 0.0
    %132 = vmatpush1.msra.mxu0 0.0
    %133 = vmatprep.subr.mxu0 0.0
    %134 = vmatpush1.msra.mxu0 0.0
    %135 = vmatprep.subr.mxu0 0.0
    %136 = vmatpush1.msra.mxu0 0.0
    %137 = vmatprep.subr.mxu0 0.0
    %138 = vmatpush1.msra.mxu0 0.0
    %139 = vmatprep.subr.mxu0 0.0
    %140 = vmatpush1.msra.mxu0 0.0
    %141 = vmatprep.subr.mxu0 0.0
    %142 = vmatpush1.msra.mxu0 0.0
    %143 = vmatprep.subr.mxu0 0.0
    %144 = vmatpush1.msra.mxu0 0.0
    %145 = vmatprep.subr.mxu0 0.0
    %146 = vmatpush1.msra.mxu0 0.0
    %147 = vmatprep.subr.mxu0 0.0
    %148 = vmatpush1.msra.mxu0 0.0
    %149 = vmatprep.subr.mxu0 0.0
    %150 = vmatpush1.msra.mxu0 0.0
    %151 = vmatprep.subr.mxu0 0.0
    %152 = vmatpush1.msra.mxu0 0.0
    %153 = vmatprep.subr.mxu0 0.0
    %154 = vmatpush1.msra.mxu0 0.0
    %155 = vmatprep.subr.mxu0 0.0
    %156 = vmatpush1.msra.mxu0 0.0
    %157 = vmatprep.subr.mxu0 0.0
    %158 = vmatpush1.msra.mxu0 0.0
    %159 = vmatprep.subr.mxu0 0.0
    %160 = vmatpush1.msra.mxu0 0.0
    %161 = vmatprep.subr.mxu0 0.0
    %162 = vmatpush1.msra.mxu0 0.0
    %163 = vmatprep.subr.mxu0 0.0
    %164 = vmatpush1.msra.mxu0 0.0
    %165 = vmatprep.subr.mxu0 0.0
    %166 = vmatpush1.msra.mxu0 0.0
    %167 = vmatprep.subr.mxu0 0.0
    %168 = vmatpush1.msra.mxu0 0.0
    %169 = vmatprep.subr.mxu0 0.0
    %170 = vmatpush1.msra.mxu0 0.0
    %171 = vmatprep.subr.mxu0 0.0
    %172 = vmatpush1.msra.mxu0 0.0
    %173 = vmatprep.subr.mxu0 0.0
    %174 = vmatpush1.msra.mxu0 0.0
    %175 = vmatprep.subr.mxu0 0.0
    %176 = vmatpush1.msra.mxu0 0.0
    %177 = vmatprep.subr.mxu0 0.0
    %178 = vmatpush1.msra.mxu0 0.0
    %179 = vmatprep.subr.mxu0 0.0
    %180 = vmatpush1.msra.mxu0 0.0
    %181 = vmatprep.mubr.f32.mxu0 0.0
    %182 = vmatmul.mubr.f32.gmra.mrb[0].mxu0 %v115
    %v183 = vpop.f32.mrb[0].mxu0
    %v184 = vadd.f32 %v79, %v183
    %v185 = vpop.f32.mrb[0].mxu0
    %186 = vdwg.mxu0
    %v187 = vxor.u32 %v184, 2147483648
    %v188 = vmul.f32 %v187, 1.442695
    %v189 = vpow.pop %v188
    %v190 = vadd.f32 %v189, 1.0
    %v191 = vrcp.pop %v190
    %v192 = vmul.f32 1.0, %v191
    %v193 = vtanh.pop %v184
    %v194 = vmul.f32 %v192, 0.0
    %196 = vrot.lane.b32.xlu0 %v193, 96
    %v197 = vpop.permute.xlu0 %196
    %v199 = vmul.f32 %v192, %v197
    %201 = vrot.lane.b32.xlu0 %v199, 16
    %v202 = vpop.permute.xlu0 %201
    %v204 = vadd.f32 %v194, %v202
    %v205 = vtanh.pop %v204
    %207 = vrot.lane.b32.xlu0 %v205, 32
    %v208 = vpop.permute.xlu0 %207
    %v210 = vmul.f32 %v192, %v208
    %212 = vrot.lane.b32.xlu0 %v210, 80
    %v213 = vpop.permute.xlu0 %212
    %vm215 = vcmask 130048
    %v216 = vsel %vm215, %v213, 0.0
    %vm217 = vcmask 261120
    %v219 = vsel %vm217, %v216, 0
    %221 = vmatprep.subr.mxu0 0.0
    %222 = vmatpush1.msra.mxu0 %v66
    %223 = vmatprep.subr.mxu0 0.0
    %224 = vmatpush1.msra.mxu0 %v67
    %225 = vmatprep.subr.mxu0 0.0
    %226 = vmatpush1.msra.mxu0 %v68
    %227 = vmatprep.subr.mxu0 0.0
    %228 = vmatpush1.msra.mxu0 %v69
    %229 = vmatprep.subr.mxu0 0.0
    %230 = vmatpush1.msra.mxu0 0.0
    %231 = vmatprep.subr.mxu0 0.0
    %232 = vmatpush1.msra.mxu0 0.0
    %233 = vmatprep.subr.mxu0 0.0
    %234 = vmatpush1.msra.mxu0 0.0
    %235 = vmatprep.subr.mxu0 0.0
    %236 = vmatpush1.msra.mxu0 0.0
    %237 = vmatprep.subr.mxu0 0.0
    %238 = vmatpush1.msra.mxu0 0.0
    %239 = vmatprep.subr.mxu0 0.0
    %240 = vmatpush1.msra.mxu0 0.0
    %241 = vmatprep.subr.mxu0 0.0
    %242 = vmatpush1.msra.mxu0 0.0
    %243 = vmatprep.subr.mxu0 0.0
    %244 = vmatpush1.msra.mxu0 0.0
    %245 = vmatprep.subr.mxu0 0.0
    %246 = vmatpush1.msra.mxu0 0.0
    %247 = vmatprep.subr.mxu0 0.0
    %248 = vmatpush1.msra.mxu0 0.0
    %249 = vmatprep.subr.mxu0 0.0
    %250 = vmatpush1.msra.mxu0 0.0
    %251 = vmatprep.subr.mxu0 0.0
    %252 = vmatpush1.msra.mxu0 0.0
    %253 = vmatprep.subr.mxu0 0.0
    %254 = vmatpush1.msra.mxu0 0.0
    %255 = vmatprep.subr.mxu0 0.0
    %256 = vmatpush1.msra.mxu0 0.0
    %257 = vmatprep.subr.mxu0 0.0
    %258 = vmatpush1.msra.mxu0 0.0
    %259 = vmatprep.subr.mxu0 0.0
    %260 = vmatpush1.msra.mxu0 0.0
    %261 = vmatprep.subr.mxu0 0.0
    %262 = vmatpush1.msra.mxu0 0.0
    %263 = vmatprep.subr.mxu0 0.0
    %264 = vmatpush1.msra.mxu0 0.0
    %265 = vmatprep.subr.mxu0 0.0
    %266 = vmatpush1.msra.mxu0 0.0
    %267 = vmatprep.subr.mxu0 0.0
    %268 = vmatpush1.msra.mxu0 0.0
    %269 = vmatprep.subr.mxu0 0.0
    %270 = vmatpush1.msra.mxu0 0.0
    %271 = vmatprep.subr.mxu0 0.0
    %272 = vmatpush1.msra.mxu0 0.0
    %273 = vmatprep.subr.mxu0 0.0
    %274 = vmatpush1.msra.mxu0 0.0
    %275 = vmatprep.subr.mxu0 0.0
    %276 = vmatpush1.msra.mxu0 0.0
    %277 = vmatprep.subr.mxu0 0.0
    %278 = vmatpush1.msra.mxu0 0.0
    %279 = vmatprep.subr.mxu0 0.0
    %280 = vmatpush1.msra.mxu0 0.0
    %281 = vmatprep.subr.mxu0 0.0
    %282 = vmatpush1.msra.mxu0 0.0
    %283 = vmatprep.subr.mxu0 0.0
    %284 = vmatpush1.msra.mxu0 0.0
    %285 = vmatprep.mubr.f32.mxu0 0.0
    %286 = vmatmul.mubr.f32.gmra.mrb[0].mxu0 %v219
    %v287 = vpop.f32.mrb[0].mxu0
    %v288 = vadd.f32 %v86, %v287
    %v289 = vpop.f32.mrb[0].mxu0
    %290 = vdwg.mxu0
    %v291 = vxor.u32 %v288, 2147483648
    %v292 = vmul.f32 %v291, 1.442695
    %v293 = vpow.pop %v292
    %v294 = vadd.f32 %v293, 1.0
    %v295 = vrcp.pop %v294
    %v296 = vmul.f32 1.0, %v295
    %v297 = vtanh.pop %v288
    %v298 = vmul.f32 %v296, 0.0
    %300 = vrot.lane.b32.xlu0 %v297, 96
    %v301 = vpop.permute.xlu0 %300
    %v303 = vmul.f32 %v296, %v301
    %305 = vrot.lane.b32.xlu0 %v303, 16
    %v306 = vpop.permute.xlu0 %305
    %v308 = vadd.f32 %v298, %v306
    %v309 = vtanh.pop %v308
    %311 = vrot.lane.b32.xlu0 %v309, 32
    %v312 = vpop.permute.xlu0 %311
    %v314 = vmul.f32 %v296, %v312
    %316 = vrot.lane.b32.xlu0 %v314, 80
    %v317 = vpop.permute.xlu0 %316
    %v319 = vsel %vm215, %v317, 0.0
    %v321 = vsel %vm217, %v319, 0
    %323 = vmatprep.subr.mxu0 0.0
    %324 = vmatpush1.msra.mxu0 %v70
    %325 = vmatprep.subr.mxu0 0.0
    %326 = vmatpush1.msra.mxu0 %v71
    %327 = vmatprep.subr.mxu0 0.0
    %328 = vmatpush1.msra.mxu0 %v72
    %329 = vmatprep.subr.mxu0 0.0
    %330 = vmatpush1.msra.mxu0 %v73
    %331 = vmatprep.subr.mxu0 0.0
    %332 = vmatpush1.msra.mxu0 0.0
    %333 = vmatprep.subr.mxu0 0.0
    %334 = vmatpush1.msra.mxu0 0.0
    %335 = vmatprep.subr.mxu0 0.0
    %336 = vmatpush1.msra.mxu0 0.0
    %337 = vmatprep.subr.mxu0 0.0
    %338 = vmatpush1.msra.mxu0 0.0
    %339 = vmatprep.subr.mxu0 0.0
    %340 = vmatpush1.msra.mxu0 0.0
    %341 = vmatprep.subr.mxu0 0.0
    %342 = vmatpush1.msra.mxu0 0.0
    %343 = vmatprep.subr.mxu0 0.0
    %344 = vmatpush1.msra.mxu0 0.0
    %345 = vmatprep.subr.mxu0 0.0
    %346 = vmatpush1.msra.mxu0 0.0
    %347 = vmatprep.subr.mxu0 0.0
    %348 = vmatpush1.msra.mxu0 0.0
    %349 = vmatprep.subr.mxu0 0.0
    %350 = vmatpush1.msra.mxu0 0.0
    %351 = vmatprep.subr.mxu0 0.0
    %352 = vmatpush1.msra.mxu0 0.0
    %353 = vmatprep.subr.mxu0 0.0
    %354 = vmatpush1.msra.mxu0 0.0
    %355 = vmatprep.subr.mxu0 0.0
    %356 = vmatpush1.msra.mxu0 0.0
    %357 = vmatprep.subr.mxu0 0.0
    %358 = vmatpush1.msra.mxu0 0.0
    %359 = vmatprep.subr.mxu0 0.0
    %360 = vmatpush1.msra.mxu0 0.0
    %361 = vmatprep.subr.mxu0 0.0
    %362 = vmatpush1.msra.mxu0 0.0
    %363 = vmatprep.subr.mxu0 0.0
    %364 = vmatpush1.msra.mxu0 0.0
    %365 = vmatprep.subr.mxu0 0.0
    %366 = vmatpush1.msra.mxu0 0.0
    %367 = vmatprep.subr.mxu0 0.0
    %368 = vmatpush1.msra.mxu0 0.0
    %369 = vmatprep.subr.mxu0 0.0
    %370 = vmatpush1.msra.mxu0 0.0
    %371 = vmatprep.subr.mxu0 0.0
    %372 = vmatpush1.msra.mxu0 0.0
    %373 = vmatprep.subr.mxu0 0.0
    %374 = vmatpush1.msra.mxu0 0.0
    %375 = vmatprep.subr.mxu0 0.0
    %376 = vmatpush1.msra.mxu0 0.0
    %377 = vmatprep.subr.mxu0 0.0
    %378 = vmatpush1.msra.mxu0 0.0
    %379 = vmatprep.subr.mxu0 0.0
    %380 = vmatpush1.msra.mxu0 0.0
    %381 = vmatprep.subr.mxu0 0.0
    %382 = vmatpush1.msra.mxu0 0.0
    %383 = vmatprep.subr.mxu0 0.0
    %384 = vmatpush1.msra.mxu0 0.0
    %385 = vmatprep.subr.mxu0 0.0
    %386 = vmatpush1.msra.mxu0 0.0
    %387 = vmatprep.mubr.f32.mxu0 0.0
    %388 = vmatmul.mubr.f32.gmra.mrb[0].mxu0 %v321
    %v389 = vpop.f32.mrb[0].mxu0
    %v390 = vadd.f32 %v93, %v389
    %v391 = vpop.f32.mrb[0].mxu0
    %392 = vdwg.mxu0
    %v393 = vxor.u32 %v390, 2147483648
    %v394 = vmul.f32 %v393, 1.442695
    %v395 = vpow.pop %v394
    %v396 = vadd.f32 %v395, 1.0
    %v397 = vrcp.pop %v396
    %v398 = vmul.f32 1.0, %v397
    %v399 = vtanh.pop %v390
    %v400 = vmul.f32 %v398, 0.0
    %402 = vrot.lane.b32.xlu0 %v399, 96
    %v403 = vpop.permute.xlu0 %402
    %v405 = vmul.f32 %v398, %v403
    %407 = vrot.lane.b32.xlu0 %v405, 16
    %v408 = vpop.permute.xlu0 %407
    %v410 = vadd.f32 %v400, %v408
    %v411 = vtanh.pop %v410
    %413 = vrot.lane.b32.xlu0 %v411, 32
    %v414 = vpop.permute.xlu0 %413
    %v416 = vmul.f32 %v398, %v414
    %417 = vrot.lane.b32.xlu0 %v100, 48
    %v418 = vpop.permute.xlu0 %417
    %v420 = vmul.f32 %v416, %v418
    %422 = vrot.lane.b32.xlu0 %v420, 80
    %v423 = vpop.permute.xlu0 %422
    %vm425 = vcmask 123904
    %v426 = vsel %vm425, %v423, 0.0
    %427 = vadd.xlane.f32.xlu0 %v426
    %v428 = vpop.xlane.xlu0 %427
    %v429 = vadd.f32 %v428, %v106
    %vm430 = vcmp.eq.s32.totalorder %v109, 0
    %432 = vset.pattern.permute.xlu0 0
    %433 = vperm.xlu0 %432, %v429
    %v434 = vpop.permute.xlu0 %433
    %v436 = vsel %vm430, %v434, 0.0
    %438 = vrot.lane.b32.xlu0 %v110, 120
    %v439 = vpop.permute.xlu0 %438
    %441 = vrot.lane.b32.xlu0 %v210, 88
    %v442 = vpop.permute.xlu0 %441
    %v444 = vsel %vm111, %v439, %v442
    %v446 = vsel %vm113, %v444, 0
    %448 = vmatprep.subr.mxu0 0.0
    %449 = vmatpush1.msra.mxu0 %v63
    %450 = vmatprep.subr.mxu0 0.0
    %451 = vmatpush1.msra.mxu0 %v64
    %452 = vmatprep.subr.mxu0 0.0
    %453 = vmatpush1.msra.mxu0 %v65
    %454 = vmatprep.subr.mxu0 0.0
    %455 = vmatpush1.msra.mxu0 0.0
    %456 = vmatprep.subr.mxu0 0.0
    %457 = vmatpush1.msra.mxu0 0.0
    %458 = vmatprep.subr.mxu0 0.0
    %459 = vmatpush1.msra.mxu0 0.0
    %460 = vmatprep.subr.mxu0 0.0
    %461 = vmatpush1.msra.mxu0 0.0
    %462 = vmatprep.subr.mxu0 0.0
    %463 = vmatpush1.msra.mxu0 0.0
    %464 = vmatprep.subr.mxu0 0.0
    %465 = vmatpush1.msra.mxu0 0.0
    %466 = vmatprep.subr.mxu0 0.0
    %467 = vmatpush1.msra.mxu0 0.0
    %468 = vmatprep.subr.mxu0 0.0
    %469 = vmatpush1.msra.mxu0 0.0
    %470 = vmatprep.subr.mxu0 0.0
    %471 = vmatpush1.msra.mxu0 0.0
    %472 = vmatprep.subr.mxu0 0.0
    %473 = vmatpush1.msra.mxu0 0.0
    %474 = vmatprep.subr.mxu0 0.0
    %475 = vmatpush1.msra.mxu0 0.0
    %476 = vmatprep.subr.mxu0 0.0
    %477 = vmatpush1.msra.mxu0 0.0
    %478 = vmatprep.subr.mxu0 0.0
    %479 = vmatpush1.msra.mxu0 0.0
    %480 = vmatprep.subr.mxu0 0.0
    %481 = vmatpush1.msra.mxu0 0.0
    %482 = vmatprep.subr.mxu0 0.0
    %483 = vmatpush1.msra.mxu0 0.0
    %484 = vmatprep.subr.mxu0 0.0
    %485 = vmatpush1.msra.mxu0 0.0
    %486 = vmatprep.subr.mxu0 0.0
    %487 = vmatpush1.msra.mxu0 0.0
    %488 = vmatprep.subr.mxu0 0.0
    %489 = vmatpush1.msra.mxu0 0.0
    %490 = vmatprep.subr.mxu0 0.0
    %491 = vmatpush1.msra.mxu0 0.0
    %492 = vmatprep.subr.mxu0 0.0
    %493 = vmatpush1.msra.mxu0 0.0
    %494 = vmatprep.subr.mxu0 0.0
    %495 = vmatpush1.msra.mxu0 0.0
    %496 = vmatprep.subr.mxu0 0.0
    %497 = vmatpush1.msra.mxu0 0.0
    %498 = vmatprep.subr.mxu0 0.0
    %499 = vmatpush1.msra.mxu0 0.0
    %500 = vmatprep.subr.mxu0 0.0
    %501 = vmatpush1.msra.mxu0 0.0
    %502 = vmatprep.subr.mxu0 0.0
    %503 = vmatpush1.msra.mxu0 0.0
    %504 = vmatprep.subr.mxu0 0.0
    %505 = vmatpush1.msra.mxu0 0.0
    %506 = vmatprep.subr.mxu0 0.0
    %507 = vmatpush1.msra.mxu0 0.0
    %508 = vmatprep.subr.mxu0 0.0
    %509 = vmatpush1.msra.mxu0 0.0
    %510 = vmatprep.subr.mxu0 0.0
    %511 = vmatpush1.msra.mxu0 0.0
    %512 = vmatprep.mubr.f32.mxu0 0.0
    %513 = vmatmul.mubr.f32.gmra.mrb[0].mxu0 %v446
    %v514 = vpop.f32.mrb[0].mxu0
    %v515 = vadd.f32 %v79, %v514
    %v516 = vpop.f32.mrb[0].mxu0
    %517 = vdwg.mxu0
    %v518 = vxor.u32 %v515, 2147483648
    %v519 = vmul.f32 %v518, 1.442695
    %v520 = vpow.pop %v519
    %v521 = vadd.f32 %v520, 1.0
    %v522 = vrcp.pop %v521
    %v523 = vmul.f32 1.0, %v522
    %v524 = vtanh.pop %v515
    %v525 = vmul.f32 %v523, %v204
    %527 = vrot.lane.b32.xlu0 %v524, 96
    %v528 = vpop.permute.xlu0 %527
    %v530 = vmul.f32 %v523, %v528
    %532 = vrot.lane.b32.xlu0 %v530, 16
    %v533 = vpop.permute.xlu0 %532
    %v535 = vadd.f32 %v525, %v533
    %v536 = vtanh.pop %v535
    %538 = vrot.lane.b32.xlu0 %v536, 32
    %v539 = vpop.permute.xlu0 %538
    %v541 = vmul.f32 %v523, %v539
    %543 = vrot.lane.b32.xlu0 %v541, 80
    %v544 = vpop.permute.xlu0 %543
    %546 = vrot.lane.b32.xlu0 %v314, 96
    %v547 = vpop.permute.xlu0 %546
    %v549 = vsel %vm215, %v544, %v547
    %v551 = vsel %vm217, %v549, 0
    %553 = vmatprep.subr.mxu0 0.0
    %554 = vmatpush1.msra.mxu0 %v66
    %555 = vmatprep.subr.mxu0 0.0
    %556 = vmatpush1.msra.mxu0 %v67
    %557 = vmatprep.subr.mxu0 0.0
    %558 = vmatpush1.msra.mxu0 %v68
    %559 = vmatprep.subr.mxu0 0.0
    %560 = vmatpush1.msra.mxu0 %v69
    %561 = vmatprep.subr.mxu0 0.0
    %562 = vmatpush1.msra.mxu0 0.0
    %563 = vmatprep.subr.mxu0 0.0
    %564 = vmatpush1.msra.mxu0 0.0
    %565 = vmatprep.subr.mxu0 0.0
    %566 = vmatpush1.msra.mxu0 0.0
    %567 = vmatprep.subr.mxu0 0.0
    %568 = vmatpush1.msra.mxu0 0.0
    %569 = vmatprep.subr.mxu0 0.0
    %570 = vmatpush1.msra.mxu0 0.0
    %571 = vmatprep.subr.mxu0 0.0
    %572 = vmatpush1.msra.mxu0 0.0
    %573 = vmatprep.subr.mxu0 0.0
    %574 = vmatpush1.msra.mxu0 0.0
    %575 = vmatprep.subr.mxu0 0.0
    %576 = vmatpush1.msra.mxu0 0.0
    %577 = vmatprep.subr.mxu0 0.0
    %578 = vmatpush1.msra.mxu0 0.0
    %579 = vmatprep.subr.mxu0 0.0
    %580 = vmatpush1.msra.mxu0 0.0
    %581 = vmatprep.subr.mxu0 0.0
    %582 = vmatpush1.msra.mxu0 0.0
    %583 = vmatprep.subr.mxu0 0.0
    %584 = vmatpush1.msra.mxu0 0.0
    %585 = vmatprep.subr.mxu0 0.0
    %586 = vmatpush1.msra.mxu0 0.0
    %587 = vmatprep.subr.mxu0 0.0
    %588 = vmatpush1.msra.mxu0 0.0
    %589 = vmatprep.subr.mxu0 0.0
    %590 = vmatpush1.msra.mxu0 0.0
    %591 = vmatprep.subr.mxu0 0.0
    %592 = vmatpush1.msra.mxu0 0.0
    %593 = vmatprep.subr.mxu0 0.0
    %594 = vmatpush1.msra.mxu0 0.0
    %595 = vmatprep.subr.mxu0 0.0
    %596 = vmatpush1.msra.mxu0 0.0
    %597 = vmatprep.subr.mxu0 0.0
    %598 = vmatpush1.msra.mxu0 0.0
    %599 = vmatprep.subr.mxu0 0.0
    %600 = vmatpush1.msra.mxu0 0.0
    %601 = vmatprep.subr.mxu0 0.0
    %602 = vmatpush1.msra.mxu0 0.0
    %603 = vmatprep.subr.mxu0 0.0
    %604 = vmatpush1.msra.mxu0 0.0
    %605 = vmatprep.subr.mxu0 0.0
    %606 = vmatpush1.msra.mxu0 0.0
    %607 = vmatprep.subr.mxu0 0.0
    %608 = vmatpush1.msra.mxu0 0.0
    %609 = vmatprep.subr.mxu0 0.0
    %610 = vmatpush1.msra.mxu0 0.0
    %611 = vmatprep.subr.mxu0 0.0
    %612 = vmatpush1.msra.mxu0 0.0
    %613 = vmatprep.subr.mxu0 0.0
    %614 = vmatpush1.msra.mxu0 0.0
    %615 = vmatprep.subr.mxu0 0.0
    %616 = vmatpush1.msra.mxu0 0.0
    %617 = vmatprep.mubr.f32.mxu0 0.0
    %618 = vmatmul.mubr.f32.gmra.mrb[0].mxu0 %v551
    %v619 = vpop.f32.mrb[0].mxu0
    %v620 = vadd.f32 %v86, %v619
    %v621 = vpop.f32.mrb[0].mxu0
    %622 = vdwg.mxu0
    %v623 = vxor.u32 %v620, 2147483648
    %v624 = vmul.f32 %v623, 1.442695
    %v625 = vpow.pop %v624
    %v626 = vadd.f32 %v625, 1.0
    %v627 = vrcp.pop %v626
    %v628 = vmul.f32 1.0, %v627
    %v629 = vtanh.pop %v620
    %v630 = vmul.f32 %v628, %v308
    %632 = vrot.lane.b32.xlu0 %v629, 96
    %v633 = vpop.permute.xlu0 %632
    %v635 = vmul.f32 %v628, %v633
    %637 = vrot.lane.b32.xlu0 %v635, 16
    %v638 = vpop.permute.xlu0 %637
    %v640 = vadd.f32 %v630, %v638
    %v641 = vtanh.pop %v640
    %643 = vrot.lane.b32.xlu0 %v641, 32
    %v644 = vpop.permute.xlu0 %643
    %v646 = vmul.f32 %v628, %v644
    %648 = vrot.lane.b32.xlu0 %v646, 80
    %v649 = vpop.permute.xlu0 %648
    %652 = vrot.lane.b32.xlu0 %v416, 96
    %v653 = vpop.permute.xlu0 %652
    %v655 = vsel %vm215, %v649, %v653
    %v657 = vsel %vm217, %v655, 0
    %659 = vmatprep.subr.mxu0 0.0
    %660 = vmatpush1.msra.mxu0 %v70
    %661 = vmatprep.subr.mxu0 0.0
    %662 = vmatpush1.msra.mxu0 %v71
    %663 = vmatprep.subr.mxu0 0.0
    %664 = vmatpush1.msra.mxu0 %v72
    %665 = vmatprep.subr.mxu0 0.0
    %666 = vmatpush1.msra.mxu0 %v73
    %667 = vmatprep.subr.mxu0 0.0
    %668 = vmatpush1.msra.mxu0 0.0
    %669 = vmatprep.subr.mxu0 0.0
    %670 = vmatpush1.msra.mxu0 0.0
    %671 = vmatprep.subr.mxu0 0.0
    %672 = vmatpush1.msra.mxu0 0.0
    %673 = vmatprep.subr.mxu0 0.0
    %674 = vmatpush1.msra.mxu0 0.0
    %675 = vmatprep.subr.mxu0 0.0
    %676 = vmatpush1.msra.mxu0 0.0
    %677 = vmatprep.subr.mxu0 0.0
    %678 = vmatpush1.msra.mxu0 0.0
    %679 = vmatprep.subr.mxu0 0.0
    %680 = vmatpush1.msra.mxu0 0.0
    %681 = vmatprep.subr.mxu0 0.0
    %682 = vmatpush1.msra.mxu0 0.0
    %683 = vmatprep.subr.mxu0 0.0
    %684 = vmatpush1.msra.mxu0 0.0
    %685 = vmatprep.subr.mxu0 0.0
    %686 = vmatpush1.msra.mxu0 0.0
    %687 = vmatprep.subr.mxu0 0.0
    %688 = vmatpush1.msra.mxu0 0.0
    %689 = vmatprep.subr.mxu0 0.0
    %690 = vmatpush1.msra.mxu0 0.0
    %691 = vmatprep.subr.mxu0 0.0
    %692 = vmatpush1.msra.mxu0 0.0
    %693 = vmatprep.subr.mxu0 0.0
    %694 = vmatpush1.msra.mxu0 0.0
    %695 = vmatprep.subr.mxu0 0.0
    %696 = vmatpush1.msra.mxu0 0.0
    %697 = vmatprep.subr.mxu0 0.0
    %698 = vmatpush1.msra.mxu0 0.0
    %699 = vmatprep.subr.mxu0 0.0
    %700 = vmatpush1.msra.mxu0 0.0
    %701 = vmatprep.subr.mxu0 0.0
    %702 = vmatpush1.msra.mxu0 0.0
    %703 = vmatprep.subr.mxu0 0.0
    %704 = vmatpush1.msra.mxu0 0.0
    %705 = vmatprep.subr.mxu0 0.0
    %706 = vmatpush1.msra.mxu0 0.0
    %707 = vmatprep.subr.mxu0 0.0
    %708 = vmatpush1.msra.mxu0 0.0
    %709 = vmatprep.subr.mxu0 0.0
    %710 = vmatpush1.msra.mxu0 0.0
    %711 = vmatprep.subr.mxu0 0.0
    %712 = vmatpush1.msra.mxu0 0.0
    %713 = vmatprep.subr.mxu0 0.0
    %714 = vmatpush1.msra.mxu0 0.0
    %715 = vmatprep.subr.mxu0 0.0
    %716 = vmatpush1.msra.mxu0 0.0
    %717 = vmatprep.subr.mxu0 0.0
    %718 = vmatpush1.msra.mxu0 0.0
    %719 = vmatprep.subr.mxu0 0.0
    %720 = vmatpush1.msra.mxu0 0.0
    %721 = vmatprep.subr.mxu0 0.0
    %722 = vmatpush1.msra.mxu0 0.0
    %723 = vmatprep.mubr.f32.mxu0 0.0
    %724 = vmatmul.mubr.f32.gmra.mrb[0].mxu0 %v657
    %v725 = vpop.f32.mrb[0].mxu0
    %v726 = vadd.f32 %v93, %v725
    %v727 = vpop.f32.mrb[0].mxu0
    %728 = vdwg.mxu0
    %v729 = vxor.u32 %v726, 2147483648
    %v730 = vmul.f32 %v729, 1.442695
    %v731 = vpow.pop %v730
    %v732 = vadd.f32 %v731, 1.0
    %v733 = vrcp.pop %v732
    %v734 = vmul.f32 1.0, %v733
    %v735 = vtanh.pop %v726
    %v736 = vmul.f32 %v734, %v410
    %738 = vrot.lane.b32.xlu0 %v735, 96
    %v739 = vpop.permute.xlu0 %738
    %v741 = vmul.f32 %v734, %v739
    %743 = vrot.lane.b32.xlu0 %v741, 16
    %v744 = vpop.permute.xlu0 %743
    %v746 = vadd.f32 %v736, %v744
    %v747 = vtanh.pop %v746
    %749 = vrot.lane.b32.xlu0 %v747, 32
    %v750 = vpop.permute.xlu0 %749
    %v752 = vmul.f32 %v734, %v750
    %v753 = vmul.f32 %v752, %v418
    %755 = vrot.lane.b32.xlu0 %v753, 80
    %v756 = vpop.permute.xlu0 %755
    %v758 = vsel %vm425, %v756, 0.0
    %759 = vadd.xlane.f32.xlu0 %v758
    %v760 = vpop.xlane.xlu0 %759
    %v761 = vadd.f32 %v760, %v106
    %vm762 = vcmp.eq.s32.totalorder %v109, 1
    %764 = vset.pattern.permute.xlu0 0
    %765 = vperm.xlu0 %764, %v761
    %v766 = vpop.permute.xlu0 %765
    %v768 = vsel %vm762, %v766, %v436
    %769 = vrot.lane.b32.xlu0 %v110, 112
    %v770 = vpop.permute.xlu0 %769
    %772 = vrot.lane.b32.xlu0 %v541, 88
    %v773 = vpop.permute.xlu0 %772
    %v775 = vsel %vm111, %v770, %v773
    %v777 = vsel %vm113, %v775, 0
    %779 = vmatprep.subr.mxu0 0.0
    %780 = vmatpush1.msra.mxu0 %v63
    %781 = vmatprep.subr.mxu0 0.0
    %782 = vmatpush1.msra.mxu0 %v64
    %783 = vmatprep.subr.mxu0 0.0
    %784 = vmatpush1.msra.mxu0 %v65
    %785 = vmatprep.subr.mxu0 0.0
    %786 = vmatpush1.msra.mxu0 0.0
    %787 = vmatprep.subr.mxu0 0.0
    %788 = vmatpush1.msra.mxu0 0.0
    %789 = vmatprep.subr.mxu0 0.0
    %790 = vmatpush1.msra.mxu0 0.0
    %791 = vmatprep.subr.mxu0 0.0
    %792 = vmatpush1.msra.mxu0 0.0
    %793 = vmatprep.subr.mxu0 0.0
    %794 = vmatpush1.msra.mxu0 0.0
    %795 = vmatprep.subr.mxu0 0.0
    %796 = vmatpush1.msra.mxu0 0.0
    %797 = vmatprep.subr.mxu0 0.0
    %798 = vmatpush1.msra.mxu0 0.0
    %799 = vmatprep.subr.mxu0 0.0
    %800 = vmatpush1.msra.mxu0 0.0
    %801 = vmatprep.subr.mxu0 0.0
    %802 = vmatpush1.msra.mxu0 0.0
    %803 = vmatprep.subr.mxu0 0.0
    %804 = vmatpush1.msra.mxu0 0.0
    %805 = vmatprep.subr.mxu0 0.0
    %806 = vmatpush1.msra.mxu0 0.0
    %807 = vmatprep.subr.mxu0 0.0
    %808 = vmatpush1.msra.mxu0 0.0
    %809 = vmatprep.subr.mxu0 0.0
    %810 = vmatpush1.msra.mxu0 0.0
    %811 = vmatprep.subr.mxu0 0.0
    %812 = vmatpush1.msra.mxu0 0.0
    %813 = vmatprep.subr.mxu0 0.0
    %814 = vmatpush1.msra.mxu0 0.0
    %815 = vmatprep.subr.mxu0 0.0
    %816 = vmatpush1.msra.mxu0 0.0
    %817 = vmatprep.subr.mxu0 0.0
    %818 = vmatpush1.msra.mxu0 0.0
    %819 = vmatprep.subr.mxu0 0.0
    %820 = vmatpush1.msra.mxu0 0.0
    %821 = vmatprep.subr.mxu0 0.0
    %822 = vmatpush1.msra.mxu0 0.0
    %823 = vmatprep.subr.mxu0 0.0
    %824 = vmatpush1.msra.mxu0 0.0
    %825 = vmatprep.subr.mxu0 0.0
    %826 = vmatpush1.msra.mxu0 0.0
    %827 = vmatprep.subr.mxu0 0.0
    %828 = vmatpush1.msra.mxu0 0.0
    %829 = vmatprep.subr.mxu0 0.0
    %830 = vmatpush1.msra.mxu0 0.0
    %831 = vmatprep.subr.mxu0 0.0
    %832 = vmatpush1.msra.mxu0 0.0
    %833 = vmatprep.subr.mxu0 0.0
    %834 = vmatpush1.msra.mxu0 0.0
    %835 = vmatprep.subr.mxu0 0.0
    %836 = vmatpush1.msra.mxu0 0.0
    %837 = vmatprep.subr.mxu0 0.0
    %838 = vmatpush1.msra.mxu0 0.0
    %839 = vmatprep.subr.mxu0 0.0
    %840 = vmatpush1.msra.mxu0 0.0
    %841 = vmatprep.subr.mxu0 0.0
    %842 = vmatpush1.msra.mxu0 0.0
    %843 = vmatprep.mubr.f32.mxu0 0.0
    %844 = vmatmul.mubr.f32.gmra.mrb[0].mxu0 %v777
    %v845 = vpop.f32.mrb[0].mxu0
    %v846 = vadd.f32 %v79, %v845
    %v847 = vpop.f32.mrb[0].mxu0
    %848 = vdwg.mxu0
    %v849 = vxor.u32 %v846, 2147483648
    %v850 = vmul.f32 %v849, 1.442695
    %v851 = vpow.pop %v850
    %v852 = vadd.f32 %v851, 1.0
    %v853 = vrcp.pop %v852
    %v854 = vmul.f32 1.0, %v853
    %v855 = vtanh.pop %v846
    %v856 = vmul.f32 %v854, %v535
    %858 = vrot.lane.b32.xlu0 %v855, 96
    %v859 = vpop.permute.xlu0 %858
    %v861 = vmul.f32 %v854, %v859
    %863 = vrot.lane.b32.xlu0 %v861, 16
    %v864 = vpop.permute.xlu0 %863
    %v866 = vadd.f32 %v856, %v864
    %v867 = vtanh.pop %v866
    %869 = vrot.lane.b32.xlu0 %v867, 32
    %v870 = vpop.permute.xlu0 %869
    %v872 = vmul.f32 %v854, %v870
    %874 = vrot.lane.b32.xlu0 %v872, 80
    %v875 = vpop.permute.xlu0 %874
    %877 = vrot.lane.b32.xlu0 %v646, 96
    %v878 = vpop.permute.xlu0 %877
    %v880 = vsel %vm215, %v875, %v878
    %v882 = vsel %vm217, %v880, 0
    %884 = vmatprep.subr.mxu0 0.0
    %885 = vmatpush1.msra.mxu0 %v66
    %886 = vmatprep.subr.mxu0 0.0
    %887 = vmatpush1.msra.mxu0 %v67
    %888 = vmatprep.subr.mxu0 0.0
    %889 = vmatpush1.msra.mxu0 %v68
    %890 = vmatprep.subr.mxu0 0.0
    %891 = vmatpush1.msra.mxu0 %v69
    %892 = vmatprep.subr.mxu0 0.0
    %893 = vmatpush1.msra.mxu0 0.0
    %894 = vmatprep.subr.mxu0 0.0
    %895 = vmatpush1.msra.mxu0 0.0
    %896 = vmatprep.subr.mxu0 0.0
    %897 = vmatpush1.msra.mxu0 0.0
    %898 = vmatprep.subr.mxu0 0.0
    %899 = vmatpush1.msra.mxu0 0.0
    %900 = vmatprep.subr.mxu0 0.0
    %901 = vmatpush1.msra.mxu0 0.0
    %902 = vmatprep.subr.mxu0 0.0
    %903 = vmatpush1.msra.mxu0 0.0
    %904 = vmatprep.subr.mxu0 0.0
    %905 = vmatpush1.msra.mxu0 0.0
    %906 = vmatprep.subr.mxu0 0.0
    %907 = vmatpush1.msra.mxu0 0.0
    %908 = vmatprep.subr.mxu0 0.0
    %909 = vmatpush1.msra.mxu0 0.0
    %910 = vmatprep.subr.mxu0 0.0
    %911 = vmatpush1.msra.mxu0 0.0
    %912 = vmatprep.subr.mxu0 0.0
    %913 = vmatpush1.msra.mxu0 0.0
    %914 = vmatprep.subr.mxu0 0.0
    %915 = vmatpush1.msra.mxu0 0.0
    %916 = vmatprep.subr.mxu0 0.0
    %917 = vmatpush1.msra.mxu0 0.0
    %918 = vmatprep.subr.mxu0 0.0
    %919 = vmatpush1.msra.mxu0 0.0
    %920 = vmatprep.subr.mxu0 0.0
    %921 = vmatpush1.msra.mxu0 0.0
    %922 = vmatprep.subr.mxu0 0.0
    %923 = vmatpush1.msra.mxu0 0.0
    %924 = vmatprep.subr.mxu0 0.0
    %925 = vmatpush1.msra.mxu0 0.0
    %926 = vmatprep.subr.mxu0 0.0
    %927 = vmatpush1.msra.mxu0 0.0
    %928 = vmatprep.subr.mxu0 0.0
    %929 = vmatpush1.msra.mxu0 0.0
    %930 = vmatprep.subr.mxu0 0.0
    %931 = vmatpush1.msra.mxu0 0.0
    %932 = vmatprep.subr.mxu0 0.0
    %933 = vmatpush1.msra.mxu0 0.0
    %934 = vmatprep.subr.mxu0 0.0
    %935 = vmatpush1.msra.mxu0 0.0
    %936 = vmatprep.subr.mxu0 0.0
    %937 = vmatpush1.msra.mxu0 0.0
    %938 = vmatprep.subr.mxu0 0.0
    %939 = vmatpush1.msra.mxu0 0.0
    %940 = vmatprep.subr.mxu0 0.0
    %941 = vmatpush1.msra.mxu0 0.0
    %942 = vmatprep.subr.mxu0 0.0
    %943 = vmatpush1.msra.mxu0 0.0
    %944 = vmatprep.subr.mxu0 0.0
    %945 = vmatpush1.msra.mxu0 0.0
    %946 = vmatprep.subr.mxu0 0.0
    %947 = vmatpush1.msra.mxu0 0.0
    %948 = vmatprep.mubr.f32.mxu0 0.0
    %949 = vmatmul.mubr.f32.gmra.mrb[0].mxu0 %v882
    %v950 = vpop.f32.mrb[0].mxu0
    %v951 = vadd.f32 %v86, %v950
    %v952 = vpop.f32.mrb[0].mxu0
    %953 = vdwg.mxu0
    %v954 = vxor.u32 %v951, 2147483648
    %v955 = vmul.f32 %v954, 1.442695
    %v956 = vpow.pop %v955
    %v957 = vadd.f32 %v956, 1.0
    %v958 = vrcp.pop %v957
    %v959 = vmul.f32 1.0, %v958
    %v960 = vtanh.pop %v951
    %v961 = vmul.f32 %v959, %v640
    %963 = vrot.lane.b32.xlu0 %v960, 96
    %v964 = vpop.permute.xlu0 %963
    %v966 = vmul.f32 %v959, %v964
    %968 = vrot.lane.b32.xlu0 %v966, 16
    %v969 = vpop.permute.xlu0 %968
    %v971 = vadd.f32 %v961, %v969
    %v972 = vtanh.pop %v971
    %974 = vrot.lane.b32.xlu0 %v972, 32
    %v975 = vpop.permute.xlu0 %974
    %v977 = vmul.f32 %v959, %v975
    %979 = vrot.lane.b32.xlu0 %v977, 80
    %v980 = vpop.permute.xlu0 %979
    %983 = vrot.lane.b32.xlu0 %v752, 96
    %v984 = vpop.permute.xlu0 %983
    %v986 = vsel %vm215, %v980, %v984
    %v988 = vsel %vm217, %v986, 0
    %990 = vmatprep.subr.mxu0 0.0
    %991 = vmatpush1.msra.mxu0 %v70
    %992 = vmatprep.subr.mxu0 0.0
    %993 = vmatpush1.msra.mxu0 %v71
    %994 = vmatprep.subr.mxu0 0.0
    %995 = vmatpush1.msra.mxu0 %v72
    %996 = vmatprep.subr.mxu0 0.0
    %997 = vmatpush1.msra.mxu0 %v73
    %998 = vmatprep.subr.mxu0 0.0
    %999 = vmatpush1.msra.mxu0 0.0
    %1000 = vmatprep.subr.mxu0 0.0
    %1001 = vmatpush1.msra.mxu0 0.0
    %1002 = vmatprep.subr.mxu0 0.0
    %1003 = vmatpush1.msra.mxu0 0.0
    %1004 = vmatprep.subr.mxu0 0.0
    %1005 = vmatpush1.msra.mxu0 0.0
    %1006 = vmatprep.subr.mxu0 0.0
    %1007 = vmatpush1.msra.mxu0 0.0
    %1008 = vmatprep.subr.mxu0 0.0
    %1009 = vmatpush1.msra.mxu0 0.0
    %1010 = vmatprep.subr.mxu0 0.0
    %1011 = vmatpush1.msra.mxu0 0.0
    %1012 = vmatprep.subr.mxu0 0.0
    %1013 = vmatpush1.msra.mxu0 0.0
    %1014 = vmatprep.subr.mxu0 0.0
    %1015 = vmatpush1.msra.mxu0 0.0
    %1016 = vmatprep.subr.mxu0 0.0
    %1017 = vmatpush1.msra.mxu0 0.0
    %1018 = vmatprep.subr.mxu0 0.0
    %1019 = vmatpush1.msra.mxu0 0.0
    %1020 = vmatprep.subr.mxu0 0.0
    %1021 = vmatpush1.msra.mxu0 0.0
    %1022 = vmatprep.subr.mxu0 0.0
    %1023 = vmatpush1.msra.mxu0 0.0
    %1024 = vmatprep.subr.mxu0 0.0
    %1025 = vmatpush1.msra.mxu0 0.0
    %1026 = vmatprep.subr.mxu0 0.0
    %1027 = vmatpush1.msra.mxu0 0.0
    %1028 = vmatprep.subr.mxu0 0.0
    %1029 = vmatpush1.msra.mxu0 0.0
    %1030 = vmatprep.subr.mxu0 0.0
    %1031 = vmatpush1.msra.mxu0 0.0
    %1032 = vmatprep.subr.mxu0 0.0
    %1033 = vmatpush1.msra.mxu0 0.0
    %1034 = vmatprep.subr.mxu0 0.0
    %1035 = vmatpush1.msra.mxu0 0.0
    %1036 = vmatprep.subr.mxu0 0.0
    %1037 = vmatpush1.msra.mxu0 0.0
    %1038 = vmatprep.subr.mxu0 0.0
    %1039 = vmatpush1.msra.mxu0 0.0
    %1040 = vmatprep.subr.mxu0 0.0
    %1041 = vmatpush1.msra.mxu0 0.0
    %1042 = vmatprep.subr.mxu0 0.0
    %1043 = vmatpush1.msra.mxu0 0.0
    %1044 = vmatprep.subr.mxu0 0.0
    %1045 = vmatpush1.msra.mxu0 0.0
    %1046 = vmatprep.subr.mxu0 0.0
    %1047 = vmatpush1.msra.mxu0 0.0
    %1048 = vmatprep.subr.mxu0 0.0
    %1049 = vmatpush1.msra.mxu0 0.0
    %1050 = vmatprep.subr.mxu0 0.0
    %1051 = vmatpush1.msra.mxu0 0.0
    %1052 = vmatprep.subr.mxu0 0.0
    %1053 = vmatpush1.msra.mxu0 0.0
    %1054 = vmatprep.mubr.f32.mxu0 0.0
    %1055 = vmatmul.mubr.f32.gmra.mrb[0].mxu0 %v988
    %v1056 = vpop.f32.mrb[0].mxu0
    %v1057 = vadd.f32 %v93, %v1056
    %v1058 = vpop.f32.mrb[0].mxu0
    %1059 = vdwg.mxu0
    %v1060 = vxor.u32 %v1057, 2147483648
    %v1061 = vmul.f32 %v1060, 1.442695
    %v1062 = vpow.pop %v1061
    %v1063 = vadd.f32 %v1062, 1.0
    %v1064 = vrcp.pop %v1063
    %v1065 = vmul.f32 1.0, %v1064
    %v1066 = vtanh.pop %v1057
    %v1067 = vmul.f32 %v1065, %v746
    %1069 = vrot.lane.b32.xlu0 %v1066, 96
    %v1070 = vpop.permute.xlu0 %1069
    %v1072 = vmul.f32 %v1065, %v1070
    %1074 = vrot.lane.b32.xlu0 %v1072, 16
    %v1075 = vpop.permute.xlu0 %1074
    %v1077 = vadd.f32 %v1067, %v1075
    %v1078 = vtanh.pop %v1077
    %1080 = vrot.lane.b32.xlu0 %v1078, 32
    %v1081 = vpop.permute.xlu0 %1080
    %v1083 = vmul.f32 %v1065, %v1081
    %v1084 = vmul.f32 %v1083, %v418
    %1086 = vrot.lane.b32.xlu0 %v1084, 80
    %v1087 = vpop.permute.xlu0 %1086
    %v1089 = vsel %vm425, %v1087, 0.0
    %1090 = vadd.xlane.f32.xlu0 %v1089
    %v1091 = vpop.xlane.xlu0 %1090
    %v1092 = vadd.f32 %v1091, %v106
    %vm1093 = vcmp.eq.s32.totalorder %v109, 2
    %1095 = vset.pattern.permute.xlu0 0
    %1096 = vperm.xlu0 %1095, %v1092
    %v1097 = vpop.permute.xlu0 %1096
    %v1099 = vsel %vm1093, %v1097, %v768
    %1100 = vrot.lane.b32.xlu0 %v110, 104
    %v1101 = vpop.permute.xlu0 %1100
    %1103 = vrot.lane.b32.xlu0 %v872, 88
    %v1104 = vpop.permute.xlu0 %1103
    %v1106 = vsel %vm111, %v1101, %v1104
    %v1108 = vsel %vm113, %v1106, 0
    %1110 = vmatprep.subr.mxu0 0.0
    %1111 = vmatpush1.msra.mxu0 %v63
    %1112 = vmatprep.subr.mxu0 0.0
    %1113 = vmatpush1.msra.mxu0 %v64
    %1114 = vmatprep.subr.mxu0 0.0
    %1115 = vmatpush1.msra.mxu0 %v65
    %1116 = vmatprep.subr.mxu0 0.0
    %1117 = vmatpush1.msra.mxu0 0.0
    %1118 = vmatprep.subr.mxu0 0.0
    %1119 = vmatpush1.msra.mxu0 0.0
    %1120 = vmatprep.subr.mxu0 0.0
    %1121 = vmatpush1.msra.mxu0 0.0
    %1122 = vmatprep.subr.mxu0 0.0
    %1123 = vmatpush1.msra.mxu0 0.0
    %1124 = vmatprep.subr.mxu0 0.0
    %1125 = vmatpush1.msra.mxu0 0.0
    %1126 = vmatprep.subr.mxu0 0.0
    %1127 = vmatpush1.msra.mxu0 0.0
    %1128 = vmatprep.subr.mxu0 0.0
    %1129 = vmatpush1.msra.mxu0 0.0
    %1130 = vmatprep.subr.mxu0 0.0
    %1131 = vmatpush1.msra.mxu0 0.0
    %1132 = vmatprep.subr.mxu0 0.0
    %1133 = vmatpush1.msra.mxu0 0.0
    %1134 = vmatprep.subr.mxu0 0.0
    %1135 = vmatpush1.msra.mxu0 0.0
    %1136 = vmatprep.subr.mxu0 0.0
    %1137 = vmatpush1.msra.mxu0 0.0
    %1138 = vmatprep.subr.mxu0 0.0
    %1139 = vmatpush1.msra.mxu0 0.0
    %1140 = vmatprep.subr.mxu0 0.0
    %1141 = vmatpush1.msra.mxu0 0.0
    %1142 = vmatprep.subr.mxu0 0.0
    %1143 = vmatpush1.msra.mxu0 0.0
    %1144 = vmatprep.subr.mxu0 0.0
    %1145 = vmatpush1.msra.mxu0 0.0
    %1146 = vmatprep.subr.mxu0 0.0
    %1147 = vmatpush1.msra.mxu0 0.0
    %1148 = vmatprep.subr.mxu0 0.0
    %1149 = vmatpush1.msra.mxu0 0.0
    %1150 = vmatprep.subr.mxu0 0.0
    %1151 = vmatpush1.msra.mxu0 0.0
    %1152 = vmatprep.subr.mxu0 0.0
    %1153 = vmatpush1.msra.mxu0 0.0
    %1154 = vmatprep.subr.mxu0 0.0
    %1155 = vmatpush1.msra.mxu0 0.0
    %1156 = vmatprep.subr.mxu0 0.0
    %1157 = vmatpush1.msra.mxu0 0.0
    %1158 = vmatprep.subr.mxu0 0.0
    %1159 = vmatpush1.msra.mxu0 0.0
    %1160 = vmatprep.subr.mxu0 0.0
    %1161 = vmatpush1.msra.mxu0 0.0
    %1162 = vmatprep.subr.mxu0 0.0
    %1163 = vmatpush1.msra.mxu0 0.0
    %1164 = vmatprep.subr.mxu0 0.0
    %1165 = vmatpush1.msra.mxu0 0.0
    %1166 = vmatprep.subr.mxu0 0.0
    %1167 = vmatpush1.msra.mxu0 0.0
    %1168 = vmatprep.subr.mxu0 0.0
    %1169 = vmatpush1.msra.mxu0 0.0
    %1170 = vmatprep.subr.mxu0 0.0
    %1171 = vmatpush1.msra.mxu0 0.0
    %1172 = vmatprep.subr.mxu0 0.0
    %1173 = vmatpush1.msra.mxu0 0.0
    %1174 = vmatprep.mubr.f32.mxu0 0.0
    %1175 = vmatmul.mubr.f32.gmra.mrb[0].mxu0 %v1108
    %v1176 = vpop.f32.mrb[0].mxu0
    %v1177 = vadd.f32 %v79, %v1176
    %v1178 = vpop.f32.mrb[0].mxu0
    %1179 = vdwg.mxu0
    %v1180 = vxor.u32 %v1177, 2147483648
    %v1181 = vmul.f32 %v1180, 1.442695
    %v1182 = vpow.pop %v1181
    %v1183 = vadd.f32 %v1182, 1.0
    %v1184 = vrcp.pop %v1183
    %v1185 = vmul.f32 1.0, %v1184
    %v1186 = vtanh.pop %v1177
    %v1187 = vmul.f32 %v1185, %v866
    %1189 = vrot.lane.b32.xlu0 %v1186, 96
    %v1190 = vpop.permute.xlu0 %1189
    %v1192 = vmul.f32 %v1185, %v1190
    %1194 = vrot.lane.b32.xlu0 %v1192, 16
    %v1195 = vpop.permute.xlu0 %1194
    %v1197 = vadd.f32 %v1187, %v1195
    %v1198 = vtanh.pop %v1197
    %1200 = vrot.lane.b32.xlu0 %v1198, 32
    %v1201 = vpop.permute.xlu0 %1200
    %v1203 = vmul.f32 %v1185, %v1201
    %1205 = vrot.lane.b32.xlu0 %v1203, 80
    %v1206 = vpop.permute.xlu0 %1205
    %1208 = vrot.lane.b32.xlu0 %v977, 96
    %v1209 = vpop.permute.xlu0 %1208
    %v1211 = vsel %vm215, %v1206, %v1209
    %v1213 = vsel %vm217, %v1211, 0
    %1215 = vmatprep.subr.mxu0 0.0
    %1216 = vmatpush1.msra.mxu0 %v66
    %1217 = vmatprep.subr.mxu0 0.0
    %1218 = vmatpush1.msra.mxu0 %v67
    %1219 = vmatprep.subr.mxu0 0.0
    %1220 = vmatpush1.msra.mxu0 %v68
    %1221 = vmatprep.subr.mxu0 0.0
    %1222 = vmatpush1.msra.mxu0 %v69
    %1223 = vmatprep.subr.mxu0 0.0
    %1224 = vmatpush1.msra.mxu0 0.0
    %1225 = vmatprep.subr.mxu0 0.0
    %1226 = vmatpush1.msra.mxu0 0.0
    %1227 = vmatprep.subr.mxu0 0.0
    %1228 = vmatpush1.msra.mxu0 0.0
    %1229 = vmatprep.subr.mxu0 0.0
    %1230 = vmatpush1.msra.mxu0 0.0
    %1231 = vmatprep.subr.mxu0 0.0
    %1232 = vmatpush1.msra.mxu0 0.0
    %1233 = vmatprep.subr.mxu0 0.0
    %1234 = vmatpush1.msra.mxu0 0.0
    %1235 = vmatprep.subr.mxu0 0.0
    %1236 = vmatpush1.msra.mxu0 0.0
    %1237 = vmatprep.subr.mxu0 0.0
    %1238 = vmatpush1.msra.mxu0 0.0
    %1239 = vmatprep.subr.mxu0 0.0
    %1240 = vmatpush1.msra.mxu0 0.0
    %1241 = vmatprep.subr.mxu0 0.0
    %1242 = vmatpush1.msra.mxu0 0.0
    %1243 = vmatprep.subr.mxu0 0.0
    %1244 = vmatpush1.msra.mxu0 0.0
    %1245 = vmatprep.subr.mxu0 0.0
    %1246 = vmatpush1.msra.mxu0 0.0
    %1247 = vmatprep.subr.mxu0 0.0
    %1248 = vmatpush1.msra.mxu0 0.0
    %1249 = vmatprep.subr.mxu0 0.0
    %1250 = vmatpush1.msra.mxu0 0.0
    %1251 = vmatprep.subr.mxu0 0.0
    %1252 = vmatpush1.msra.mxu0 0.0
    %1253 = vmatprep.subr.mxu0 0.0
    %1254 = vmatpush1.msra.mxu0 0.0
    %1255 = vmatprep.subr.mxu0 0.0
    %1256 = vmatpush1.msra.mxu0 0.0
    %1257 = vmatprep.subr.mxu0 0.0
    %1258 = vmatpush1.msra.mxu0 0.0
    %1259 = vmatprep.subr.mxu0 0.0
    %1260 = vmatpush1.msra.mxu0 0.0
    %1261 = vmatprep.subr.mxu0 0.0
    %1262 = vmatpush1.msra.mxu0 0.0
    %1263 = vmatprep.subr.mxu0 0.0
    %1264 = vmatpush1.msra.mxu0 0.0
    %1265 = vmatprep.subr.mxu0 0.0
    %1266 = vmatpush1.msra.mxu0 0.0
    %1267 = vmatprep.subr.mxu0 0.0
    %1268 = vmatpush1.msra.mxu0 0.0
    %1269 = vmatprep.subr.mxu0 0.0
    %1270 = vmatpush1.msra.mxu0 0.0
    %1271 = vmatprep.subr.mxu0 0.0
    %1272 = vmatpush1.msra.mxu0 0.0
    %1273 = vmatprep.subr.mxu0 0.0
    %1274 = vmatpush1.msra.mxu0 0.0
    %1275 = vmatprep.subr.mxu0 0.0
    %1276 = vmatpush1.msra.mxu0 0.0
    %1277 = vmatprep.subr.mxu0 0.0
    %1278 = vmatpush1.msra.mxu0 0.0
    %1279 = vmatprep.mubr.f32.mxu0 0.0
    %1280 = vmatmul.mubr.f32.gmra.mrb[0].mxu0 %v1213
    %v1281 = vpop.f32.mrb[0].mxu0
    %v1282 = vadd.f32 %v86, %v1281
    %v1283 = vpop.f32.mrb[0].mxu0
    %1284 = vdwg.mxu0
    %v1285 = vxor.u32 %v1282, 2147483648
    %v1286 = vmul.f32 %v1285, 1.442695
    %v1287 = vpow.pop %v1286
    %v1288 = vadd.f32 %v1287, 1.0
    %v1289 = vrcp.pop %v1288
    %v1290 = vmul.f32 1.0, %v1289
    %v1291 = vtanh.pop %v1282
    %v1292 = vmul.f32 %v1290, %v971
    %1294 = vrot.lane.b32.xlu0 %v1291, 96
    %v1295 = vpop.permute.xlu0 %1294
    %v1297 = vmul.f32 %v1290, %v1295
    %1299 = vrot.lane.b32.xlu0 %v1297, 16
    %v1300 = vpop.permute.xlu0 %1299
    %v1302 = vadd.f32 %v1292, %v1300
    %v1303 = vtanh.pop %v1302
    %1305 = vrot.lane.b32.xlu0 %v1303, 32
    %v1306 = vpop.permute.xlu0 %1305
    %v1308 = vmul.f32 %v1290, %v1306
    %1310 = vrot.lane.b32.xlu0 %v1308, 80
    %v1311 = vpop.permute.xlu0 %1310
    %1314 = vrot.lane.b32.xlu0 %v1083, 96
    %v1315 = vpop.permute.xlu0 %1314
    %v1317 = vsel %vm215, %v1311, %v1315
    %v1319 = vsel %vm217, %v1317, 0
    %1321 = vmatprep.subr.mxu0 0.0
    %1322 = vmatpush1.msra.mxu0 %v70
    %1323 = vmatprep.subr.mxu0 0.0
    %1324 = vmatpush1.msra.mxu0 %v71
    %1325 = vmatprep.subr.mxu0 0.0
    %1326 = vmatpush1.msra.mxu0 %v72
    %1327 = vmatprep.subr.mxu0 0.0
    %1328 = vmatpush1.msra.mxu0 %v73
    %1329 = vmatprep.subr.mxu0 0.0
    %1330 = vmatpush1.msra.mxu0 0.0
    %1331 = vmatprep.subr.mxu0 0.0
    %1332 = vmatpush1.msra.mxu0 0.0
    %1333 = vmatprep.subr.mxu0 0.0
    %1334 = vmatpush1.msra.mxu0 0.0
    %1335 = vmatprep.subr.mxu0 0.0
    %1336 = vmatpush1.msra.mxu0 0.0
    %1337 = vmatprep.subr.mxu0 0.0
    %1338 = vmatpush1.msra.mxu0 0.0
    %1339 = vmatprep.subr.mxu0 0.0
    %1340 = vmatpush1.msra.mxu0 0.0
    %1341 = vmatprep.subr.mxu0 0.0
    %1342 = vmatpush1.msra.mxu0 0.0
    %1343 = vmatprep.subr.mxu0 0.0
    %1344 = vmatpush1.msra.mxu0 0.0
    %1345 = vmatprep.subr.mxu0 0.0
    %1346 = vmatpush1.msra.mxu0 0.0
    %1347 = vmatprep.subr.mxu0 0.0
    %1348 = vmatpush1.msra.mxu0 0.0
    %1349 = vmatprep.subr.mxu0 0.0
    %1350 = vmatpush1.msra.mxu0 0.0
    %1351 = vmatprep.subr.mxu0 0.0
    %1352 = vmatpush1.msra.mxu0 0.0
    %1353 = vmatprep.subr.mxu0 0.0
    %1354 = vmatpush1.msra.mxu0 0.0
    %1355 = vmatprep.subr.mxu0 0.0
    %1356 = vmatpush1.msra.mxu0 0.0
    %1357 = vmatprep.subr.mxu0 0.0
    %1358 = vmatpush1.msra.mxu0 0.0
    %1359 = vmatprep.subr.mxu0 0.0
    %1360 = vmatpush1.msra.mxu0 0.0
    %1361 = vmatprep.subr.mxu0 0.0
    %1362 = vmatpush1.msra.mxu0 0.0
    %1363 = vmatprep.subr.mxu0 0.0
    %1364 = vmatpush1.msra.mxu0 0.0
    %1365 = vmatprep.subr.mxu0 0.0
    %1366 = vmatpush1.msra.mxu0 0.0
    %1367 = vmatprep.subr.mxu0 0.0
    %1368 = vmatpush1.msra.mxu0 0.0
    %1369 = vmatprep.subr.mxu0 0.0
    %1370 = vmatpush1.msra.mxu0 0.0
    %1371 = vmatprep.subr.mxu0 0.0
    %1372 = vmatpush1.msra.mxu0 0.0
    %1373 = vmatprep.subr.mxu0 0.0
    %1374 = vmatpush1.msra.mxu0 0.0
    %1375 = vmatprep.subr.mxu0 0.0
    %1376 = vmatpush1.msra.mxu0 0.0
    %1377 = vmatprep.subr.mxu0 0.0
    %1378 = vmatpush1.msra.mxu0 0.0
    %1379 = vmatprep.subr.mxu0 0.0
    %1380 = vmatpush1.msra.mxu0 0.0
    %1381 = vmatprep.subr.mxu0 0.0
    %1382 = vmatpush1.msra.mxu0 0.0
    %1383 = vmatprep.subr.mxu0 0.0
    %1384 = vmatpush1.msra.mxu0 0.0
    %1385 = vmatprep.mubr.f32.mxu0 0.0
    %1386 = vmatmul.mubr.f32.gmra.mrb[0].mxu0 %v1319
    %v1387 = vpop.f32.mrb[0].mxu0
    %v1388 = vadd.f32 %v93, %v1387
    %v1389 = vpop.f32.mrb[0].mxu0
    %1390 = vdwg.mxu0
    %v1391 = vxor.u32 %v1388, 2147483648
    %v1392 = vmul.f32 %v1391, 1.442695
    %v1393 = vpow.pop %v1392
    %v1394 = vadd.f32 %v1393, 1.0
    %v1395 = vrcp.pop %v1394
    %v1396 = vmul.f32 1.0, %v1395
    %v1397 = vtanh.pop %v1388
    %v1398 = vmul.f32 %v1396, %v1077
    %1400 = vrot.lane.b32.xlu0 %v1397, 96
    %v1401 = vpop.permute.xlu0 %1400
    %v1403 = vmul.f32 %v1396, %v1401
    %1405 = vrot.lane.b32.xlu0 %v1403, 16
    %v1406 = vpop.permute.xlu0 %1405
    %v1408 = vadd.f32 %v1398, %v1406
    %v1409 = vtanh.pop %v1408
    %1411 = vrot.lane.b32.xlu0 %v1409, 32
    %v1412 = vpop.permute.xlu0 %1411
    %v1414 = vmul.f32 %v1396, %v1412
    %v1415 = vmul.f32 %v1414, %v418
    %1417 = vrot.lane.b32.xlu0 %v1415, 80
    %v1418 = vpop.permute.xlu0 %1417
    %v1420 = vsel %vm425, %v1418, 0.0
    %1421 = vadd.xlane.f32.xlu0 %v1420
    %v1422 = vpop.xlane.xlu0 %1421
    %v1423 = vadd.f32 %v1422, %v106
    %vm1424 = vcmp.eq.s32.totalorder %v109, 3
    %1426 = vset.pattern.permute.xlu0 0
    %1427 = vperm.xlu0 %1426, %v1423
    %v1428 = vpop.permute.xlu0 %1427
    %v1430 = vsel %vm1424, %v1428, %v1099
    %1431 = vrot.lane.b32.xlu0 %v110, 96
    %v1432 = vpop.permute.xlu0 %1431
    %1434 = vrot.lane.b32.xlu0 %v1203, 88
    %v1435 = vpop.permute.xlu0 %1434
    %v1437 = vsel %vm111, %v1432, %v1435
    %v1439 = vsel %vm113, %v1437, 0
    %1441 = vmatprep.subr.mxu0 0.0
    %1442 = vmatpush1.msra.mxu0 %v63
    %1443 = vmatprep.subr.mxu0 0.0
    %1444 = vmatpush1.msra.mxu0 %v64
    %1445 = vmatprep.subr.mxu0 0.0
    %1446 = vmatpush1.msra.mxu0 %v65
    %1447 = vmatprep.subr.mxu0 0.0
    %1448 = vmatpush1.msra.mxu0 0.0
    %1449 = vmatprep.subr.mxu0 0.0
    %1450 = vmatpush1.msra.mxu0 0.0
    %1451 = vmatprep.subr.mxu0 0.0
    %1452 = vmatpush1.msra.mxu0 0.0
    %1453 = vmatprep.subr.mxu0 0.0
    %1454 = vmatpush1.msra.mxu0 0.0
    %1455 = vmatprep.subr.mxu0 0.0
    %1456 = vmatpush1.msra.mxu0 0.0
    %1457 = vmatprep.subr.mxu0 0.0
    %1458 = vmatpush1.msra.mxu0 0.0
    %1459 = vmatprep.subr.mxu0 0.0
    %1460 = vmatpush1.msra.mxu0 0.0
    %1461 = vmatprep.subr.mxu0 0.0
    %1462 = vmatpush1.msra.mxu0 0.0
    %1463 = vmatprep.subr.mxu0 0.0
    %1464 = vmatpush1.msra.mxu0 0.0
    %1465 = vmatprep.subr.mxu0 0.0
    %1466 = vmatpush1.msra.mxu0 0.0
    %1467 = vmatprep.subr.mxu0 0.0
    %1468 = vmatpush1.msra.mxu0 0.0
    %1469 = vmatprep.subr.mxu0 0.0
    %1470 = vmatpush1.msra.mxu0 0.0
    %1471 = vmatprep.subr.mxu0 0.0
    %1472 = vmatpush1.msra.mxu0 0.0
    %1473 = vmatprep.subr.mxu0 0.0
    %1474 = vmatpush1.msra.mxu0 0.0
    %1475 = vmatprep.subr.mxu0 0.0
    %1476 = vmatpush1.msra.mxu0 0.0
    %1477 = vmatprep.subr.mxu0 0.0
    %1478 = vmatpush1.msra.mxu0 0.0
    %1479 = vmatprep.subr.mxu0 0.0
    %1480 = vmatpush1.msra.mxu0 0.0
    %1481 = vmatprep.subr.mxu0 0.0
    %1482 = vmatpush1.msra.mxu0 0.0
    %1483 = vmatprep.subr.mxu0 0.0
    %1484 = vmatpush1.msra.mxu0 0.0
    %1485 = vmatprep.subr.mxu0 0.0
    %1486 = vmatpush1.msra.mxu0 0.0
    %1487 = vmatprep.subr.mxu0 0.0
    %1488 = vmatpush1.msra.mxu0 0.0
    %1489 = vmatprep.subr.mxu0 0.0
    %1490 = vmatpush1.msra.mxu0 0.0
    %1491 = vmatprep.subr.mxu0 0.0
    %1492 = vmatpush1.msra.mxu0 0.0
    %1493 = vmatprep.subr.mxu0 0.0
    %1494 = vmatpush1.msra.mxu0 0.0
    %1495 = vmatprep.subr.mxu0 0.0
    %1496 = vmatpush1.msra.mxu0 0.0
    %1497 = vmatprep.subr.mxu0 0.0
    %1498 = vmatpush1.msra.mxu0 0.0
    %1499 = vmatprep.subr.mxu0 0.0
    %1500 = vmatpush1.msra.mxu0 0.0
    %1501 = vmatprep.subr.mxu0 0.0
    %1502 = vmatpush1.msra.mxu0 0.0
    %1503 = vmatprep.subr.mxu0 0.0
    %1504 = vmatpush1.msra.mxu0 0.0
    %1505 = vmatprep.mubr.f32.mxu0 0.0
    %1506 = vmatmul.mubr.f32.gmra.mrb[0].mxu0 %v1439
    %v1507 = vpop.f32.mrb[0].mxu0
    %v1508 = vadd.f32 %v79, %v1507
    %v1509 = vpop.f32.mrb[0].mxu0
    %1510 = vdwg.mxu0
    %v1511 = vxor.u32 %v1508, 2147483648
    %v1512 = vmul.f32 %v1511, 1.442695
    %v1513 = vpow.pop %v1512
    %v1514 = vadd.f32 %v1513, 1.0
    %v1515 = vrcp.pop %v1514
    %v1516 = vmul.f32 1.0, %v1515
    %v1517 = vtanh.pop %v1508
    %v1518 = vmul.f32 %v1516, %v1197
    %1520 = vrot.lane.b32.xlu0 %v1517, 96
    %v1521 = vpop.permute.xlu0 %1520
    %v1523 = vmul.f32 %v1516, %v1521
    %1525 = vrot.lane.b32.xlu0 %v1523, 16
    %v1526 = vpop.permute.xlu0 %1525
    %v1528 = vadd.f32 %v1518, %v1526
    %v1529 = vtanh.pop %v1528
    %1531 = vrot.lane.b32.xlu0 %v1529, 32
    %v1532 = vpop.permute.xlu0 %1531
    %v1534 = vmul.f32 %v1516, %v1532
    %1536 = vrot.lane.b32.xlu0 %v1534, 80
    %v1537 = vpop.permute.xlu0 %1536
    %1539 = vrot.lane.b32.xlu0 %v1308, 96
    %v1540 = vpop.permute.xlu0 %1539
    %v1542 = vsel %vm215, %v1537, %v1540
    %v1544 = vsel %vm217, %v1542, 0
    %1546 = vmatprep.subr.mxu0 0.0
    %1547 = vmatpush1.msra.mxu0 %v66
    %1548 = vmatprep.subr.mxu0 0.0
    %1549 = vmatpush1.msra.mxu0 %v67
    %1550 = vmatprep.subr.mxu0 0.0
    %1551 = vmatpush1.msra.mxu0 %v68
    %1552 = vmatprep.subr.mxu0 0.0
    %1553 = vmatpush1.msra.mxu0 %v69
    %1554 = vmatprep.subr.mxu0 0.0
    %1555 = vmatpush1.msra.mxu0 0.0
    %1556 = vmatprep.subr.mxu0 0.0
    %1557 = vmatpush1.msra.mxu0 0.0
    %1558 = vmatprep.subr.mxu0 0.0
    %1559 = vmatpush1.msra.mxu0 0.0
    %1560 = vmatprep.subr.mxu0 0.0
    %1561 = vmatpush1.msra.mxu0 0.0
    %1562 = vmatprep.subr.mxu0 0.0
    %1563 = vmatpush1.msra.mxu0 0.0
    %1564 = vmatprep.subr.mxu0 0.0
    %1565 = vmatpush1.msra.mxu0 0.0
    %1566 = vmatprep.subr.mxu0 0.0
    %1567 = vmatpush1.msra.mxu0 0.0
    %1568 = vmatprep.subr.mxu0 0.0
    %1569 = vmatpush1.msra.mxu0 0.0
    %1570 = vmatprep.subr.mxu0 0.0
    %1571 = vmatpush1.msra.mxu0 0.0
    %1572 = vmatprep.subr.mxu0 0.0
    %1573 = vmatpush1.msra.mxu0 0.0
    %1574 = vmatprep.subr.mxu0 0.0
    %1575 = vmatpush1.msra.mxu0 0.0
    %1576 = vmatprep.subr.mxu0 0.0
    %1577 = vmatpush1.msra.mxu0 0.0
    %1578 = vmatprep.subr.mxu0 0.0
    %1579 = vmatpush1.msra.mxu0 0.0
    %1580 = vmatprep.subr.mxu0 0.0
    %1581 = vmatpush1.msra.mxu0 0.0
    %1582 = vmatprep.subr.mxu0 0.0
    %1583 = vmatpush1.msra.mxu0 0.0
    %1584 = vmatprep.subr.mxu0 0.0
    %1585 = vmatpush1.msra.mxu0 0.0
    %1586 = vmatprep.subr.mxu0 0.0
    %1587 = vmatpush1.msra.mxu0 0.0
    %1588 = vmatprep.subr.mxu0 0.0
    %1589 = vmatpush1.msra.mxu0 0.0
    %1590 = vmatprep.subr.mxu0 0.0
    %1591 = vmatpush1.msra.mxu0 0.0
    %1592 = vmatprep.subr.mxu0 0.0
    %1593 = vmatpush1.msra.mxu0 0.0
    %1594 = vmatprep.subr.mxu0 0.0
    %1595 = vmatpush1.msra.mxu0 0.0
    %1596 = vmatprep.subr.mxu0 0.0
    %1597 = vmatpush1.msra.mxu0 0.0
    %1598 = vmatprep.subr.mxu0 0.0
    %1599 = vmatpush1.msra.mxu0 0.0
    %1600 = vmatprep.subr.mxu0 0.0
    %1601 = vmatpush1.msra.mxu0 0.0
    %1602 = vmatprep.subr.mxu0 0.0
    %1603 = vmatpush1.msra.mxu0 0.0
    %1604 = vmatprep.subr.mxu0 0.0
    %1605 = vmatpush1.msra.mxu0 0.0
    %1606 = vmatprep.subr.mxu0 0.0
    %1607 = vmatpush1.msra.mxu0 0.0
    %1608 = vmatprep.subr.mxu0 0.0
    %1609 = vmatpush1.msra.mxu0 0.0
    %1610 = vmatprep.mubr.f32.mxu0 0.0
    %1611 = vmatmul.mubr.f32.gmra.mrb[0].mxu0 %v1544
    %v1612 = vpop.f32.mrb[0].mxu0
    %v1613 = vadd.f32 %v86, %v1612
    %v1614 = vpop.f32.mrb[0].mxu0
    %1615 = vdwg.mxu0
    %v1616 = vxor.u32 %v1613, 2147483648
    %v1617 = vmul.f32 %v1616, 1.442695
    %v1618 = vpow.pop %v1617
    %v1619 = vadd.f32 %v1618, 1.0
    %v1620 = vrcp.pop %v1619
    %v1621 = vmul.f32 1.0, %v1620
    %v1622 = vtanh.pop %v1613
    %v1623 = vmul.f32 %v1621, %v1302
    %1625 = vrot.lane.b32.xlu0 %v1622, 96
    %v1626 = vpop.permute.xlu0 %1625
    %v1628 = vmul.f32 %v1621, %v1626
    %1630 = vrot.lane.b32.xlu0 %v1628, 16
    %v1631 = vpop.permute.xlu0 %1630
    %v1633 = vadd.f32 %v1623, %v1631
    %v1634 = vtanh.pop %v1633
    %1636 = vrot.lane.b32.xlu0 %v1634, 32
    %v1637 = vpop.permute.xlu0 %1636
    %v1639 = vmul.f32 %v1621, %v1637
    %1641 = vrot.lane.b32.xlu0 %v1639, 80
    %v1642 = vpop.permute.xlu0 %1641
    %1645 = vrot.lane.b32.xlu0 %v1414, 96
    %v1646 = vpop.permute.xlu0 %1645
    %v1648 = vsel %vm215, %v1642, %v1646
    %v1650 = vsel %vm217, %v1648, 0
    %1652 = vmatprep.subr.mxu0 0.0
    %1653 = vmatpush1.msra.mxu0 %v70
    %1654 = vmatprep.subr.mxu0 0.0
    %1655 = vmatpush1.msra.mxu0 %v71
    %1656 = vmatprep.subr.mxu0 0.0
    %1657 = vmatpush1.msra.mxu0 %v72
    %1658 = vmatprep.subr.mxu0 0.0
    %1659 = vmatpush1.msra.mxu0 %v73
    %1660 = vmatprep.subr.mxu0 0.0
    %1661 = vmatpush1.msra.mxu0 0.0
    %1662 = vmatprep.subr.mxu0 0.0
    %1663 = vmatpush1.msra.mxu0 0.0
    %1664 = vmatprep.subr.mxu0 0.0
    %1665 = vmatpush1.msra.mxu0 0.0
    %1666 = vmatprep.subr.mxu0 0.0
    %1667 = vmatpush1.msra.mxu0 0.0
    %1668 = vmatprep.subr.mxu0 0.0
    %1669 = vmatpush1.msra.mxu0 0.0
    %1670 = vmatprep.subr.mxu0 0.0
    %1671 = vmatpush1.msra.mxu0 0.0
    %1672 = vmatprep.subr.mxu0 0.0
    %1673 = vmatpush1.msra.mxu0 0.0
    %1674 = vmatprep.subr.mxu0 0.0
    %1675 = vmatpush1.msra.mxu0 0.0
    %1676 = vmatprep.subr.mxu0 0.0
    %1677 = vmatpush1.msra.mxu0 0.0
    %1678 = vmatprep.subr.mxu0 0.0
    %1679 = vmatpush1.msra.mxu0 0.0
    %1680 = vmatprep.subr.mxu0 0.0
    %1681 = vmatpush1.msra.mxu0 0.0
    %1682 = vmatprep.subr.mxu0 0.0
    %1683 = vmatpush1.msra.mxu0 0.0
    %1684 = vmatprep.subr.mxu0 0.0
    %1685 = vmatpush1.msra.mxu0 0.0
    %1686 = vmatprep.subr.mxu0 0.0
    %1687 = vmatpush1.msra.mxu0 0.0
    %1688 = vmatprep.subr.mxu0 0.0
    %1689 = vmatpush1.msra.mxu0 0.0
    %1690 = vmatprep.subr.mxu0 0.0
    %1691 = vmatpush1.msra.mxu0 0.0
    %1692 = vmatprep.subr.mxu0 0.0
    %1693 = vmatpush1.msra.mxu0 0.0
    %1694 = vmatprep.subr.mxu0 0.0
    %1695 = vmatpush1.msra.mxu0 0.0
    %1696 = vmatprep.subr.mxu0 0.0
    %1697 = vmatpush1.msra.mxu0 0.0
    %1698 = vmatprep.subr.mxu0 0.0
    %1699 = vmatpush1.msra.mxu0 0.0
    %1700 = vmatprep.subr.mxu0 0.0
    %1701 = vmatpush1.msra.mxu0 0.0
    %1702 = vmatprep.subr.mxu0 0.0
    %1703 = vmatpush1.msra.mxu0 0.0
    %1704 = vmatprep.subr.mxu0 0.0
    %1705 = vmatpush1.msra.mxu0 0.0
    %1706 = vmatprep.subr.mxu0 0.0
    %1707 = vmatpush1.msra.mxu0 0.0
    %1708 = vmatprep.subr.mxu0 0.0
    %1709 = vmatpush1.msra.mxu0 0.0
    %1710 = vmatprep.subr.mxu0 0.0
    %1711 = vmatpush1.msra.mxu0 0.0
    %1712 = vmatprep.subr.mxu0 0.0
    %1713 = vmatpush1.msra.mxu0 0.0
    %1714 = vmatprep.subr.mxu0 0.0
    %1715 = vmatpush1.msra.mxu0 0.0
    %1716 = vmatprep.mubr.f32.mxu0 0.0
    %1717 = vmatmul.mubr.f32.gmra.mrb[0].mxu0 %v1650
    %v1718 = vpop.f32.mrb[0].mxu0
    %v1719 = vadd.f32 %v93, %v1718
    %v1720 = vpop.f32.mrb[0].mxu0
    %1721 = vdwg.mxu0
    %v1722 = vxor.u32 %v1719, 2147483648
    %v1723 = vmul.f32 %v1722, 1.442695
    %v1724 = vpow.pop %v1723
    %v1725 = vadd.f32 %v1724, 1.0
    %v1726 = vrcp.pop %v1725
    %v1727 = vmul.f32 1.0, %v1726
    %v1728 = vtanh.pop %v1719
    %v1729 = vmul.f32 %v1727, %v1408
    %1731 = vrot.lane.b32.xlu0 %v1728, 96
    %v1732 = vpop.permute.xlu0 %1731
    %v1734 = vmul.f32 %v1727, %v1732
    %1736 = vrot.lane.b32.xlu0 %v1734, 16
    %v1737 = vpop.permute.xlu0 %1736
    %v1739 = vadd.f32 %v1729, %v1737
    %v1740 = vtanh.pop %v1739
    %1742 = vrot.lane.b32.xlu0 %v1740, 32
    %v1743 = vpop.permute.xlu0 %1742
    %v1745 = vmul.f32 %v1727, %v1743
    %v1746 = vmul.f32 %v1745, %v418
    %1748 = vrot.lane.b32.xlu0 %v1746, 80
    %v1749 = vpop.permute.xlu0 %1748
    %v1751 = vsel %vm425, %v1749, 0.0
    %1752 = vadd.xlane.f32.xlu0 %v1751
    %v1753 = vpop.xlane.xlu0 %1752
    %v1754 = vadd.f32 %v1753, %v106
    %vm1755 = vcmp.eq.s32.totalorder %v109, 4
    %1757 = vset.pattern.permute.xlu0 0
    %1758 = vperm.xlu0 %1757, %v1754
    %v1759 = vpop.permute.xlu0 %1758
    %v1761 = vsel %vm1755, %v1759, %v1430
    %1762 = vrot.lane.b32.xlu0 %v110, 88
    %v1763 = vpop.permute.xlu0 %1762
    %1765 = vrot.lane.b32.xlu0 %v1534, 88
    %v1766 = vpop.permute.xlu0 %1765
    %v1768 = vsel %vm111, %v1763, %v1766
    %v1770 = vsel %vm113, %v1768, 0
    %1772 = vmatprep.subr.mxu0 0.0
    %1773 = vmatpush1.msra.mxu0 %v63
    %1774 = vmatprep.subr.mxu0 0.0
    %1775 = vmatpush1.msra.mxu0 %v64
    %1776 = vmatprep.subr.mxu0 0.0
    %1777 = vmatpush1.msra.mxu0 %v65
    %1778 = vmatprep.subr.mxu0 0.0
    %1779 = vmatpush1.msra.mxu0 0.0
    %1780 = vmatprep.subr.mxu0 0.0
    %1781 = vmatpush1.msra.mxu0 0.0
    %1782 = vmatprep.subr.mxu0 0.0
    %1783 = vmatpush1.msra.mxu0 0.0
    %1784 = vmatprep.subr.mxu0 0.0
    %1785 = vmatpush1.msra.mxu0 0.0
    %1786 = vmatprep.subr.mxu0 0.0
    %1787 = vmatpush1.msra.mxu0 0.0
    %1788 = vmatprep.subr.mxu0 0.0
    %1789 = vmatpush1.msra.mxu0 0.0
    %1790 = vmatprep.subr.mxu0 0.0
    %1791 = vmatpush1.msra.mxu0 0.0
    %1792 = vmatprep.subr.mxu0 0.0
    %1793 = vmatpush1.msra.mxu0 0.0
    %1794 = vmatprep.subr.mxu0 0.0
    %1795 = vmatpush1.msra.mxu0 0.0
    %1796 = vmatprep.subr.mxu0 0.0
    %1797 = vmatpush1.msra.mxu0 0.0
    %1798 = vmatprep.subr.mxu0 0.0
    %1799 = vmatpush1.msra.mxu0 0.0
    %1800 = vmatprep.subr.mxu0 0.0
    %1801 = vmatpush1.msra.mxu0 0.0
    %1802 = vmatprep.subr.mxu0 0.0
    %1803 = vmatpush1.msra.mxu0 0.0
    %1804 = vmatprep.subr.mxu0 0.0
    %1805 = vmatpush1.msra.mxu0 0.0
    %1806 = vmatprep.subr.mxu0 0.0
    %1807 = vmatpush1.msra.mxu0 0.0
    %1808 = vmatprep.subr.mxu0 0.0
    %1809 = vmatpush1.msra.mxu0 0.0
    %1810 = vmatprep.subr.mxu0 0.0
    %1811 = vmatpush1.msra.mxu0 0.0
    %1812 = vmatprep.subr.mxu0 0.0
    %1813 = vmatpush1.msra.mxu0 0.0
    %1814 = vmatprep.subr.mxu0 0.0
    %1815 = vmatpush1.msra.mxu0 0.0
    %1816 = vmatprep.subr.mxu0 0.0
    %1817 = vmatpush1.msra.mxu0 0.0
    %1818 = vmatprep.subr.mxu0 0.0
    %1819 = vmatpush1.msra.mxu0 0.0
    %1820 = vmatprep.subr.mxu0 0.0
    %1821 = vmatpush1.msra.mxu0 0.0
    %1822 = vmatprep.subr.mxu0 0.0
    %1823 = vmatpush1.msra.mxu0 0.0
    %1824 = vmatprep.subr.mxu0 0.0
    %1825 = vmatpush1.msra.mxu0 0.0
    %1826 = vmatprep.subr.mxu0 0.0
    %1827 = vmatpush1.msra.mxu0 0.0
    %1828 = vmatprep.subr.mxu0 0.0
    %1829 = vmatpush1.msra.mxu0 0.0
    %1830 = vmatprep.subr.mxu0 0.0
    %1831 = vmatpush1.msra.mxu0 0.0
    %1832 = vmatprep.subr.mxu0 0.0
    %1833 = vmatpush1.msra.mxu0 0.0
    %1834 = vmatprep.subr.mxu0 0.0
    %1835 = vmatpush1.msra.mxu0 0.0
    %1836 = vmatprep.mubr.f32.mxu0 0.0
    %1837 = vmatmul.mubr.f32.gmra.mrb[0].mxu0 %v1770
    %v1838 = vpop.f32.mrb[0].mxu0
    %v1839 = vadd.f32 %v79, %v1838
    %v1840 = vpop.f32.mrb[0].mxu0
    %1841 = vdwg.mxu0
    %v1842 = vxor.u32 %v1839, 2147483648
    %v1843 = vmul.f32 %v1842, 1.442695
    %v1844 = vpow.pop %v1843
    %v1845 = vadd.f32 %v1844, 1.0
    %v1846 = vrcp.pop %v1845
    %v1847 = vmul.f32 1.0, %v1846
    %v1848 = vtanh.pop %v1839
    %v1849 = vmul.f32 %v1847, %v1528
    %1851 = vrot.lane.b32.xlu0 %v1848, 96
    %v1852 = vpop.permute.xlu0 %1851
    %v1854 = vmul.f32 %v1847, %v1852
    %1856 = vrot.lane.b32.xlu0 %v1854, 16
    %v1857 = vpop.permute.xlu0 %1856
    %v1859 = vadd.f32 %v1849, %v1857
    %v1860 = vtanh.pop %v1859
    %1862 = vrot.lane.b32.xlu0 %v1860, 32
    %v1863 = vpop.permute.xlu0 %1862
    %v1865 = vmul.f32 %v1847, %v1863
    %1867 = vrot.lane.b32.xlu0 %v1865, 80
    %v1868 = vpop.permute.xlu0 %1867
    %1870 = vrot.lane.b32.xlu0 %v1639, 96
    %v1871 = vpop.permute.xlu0 %1870
    %v1873 = vsel %vm215, %v1868, %v1871
    %v1875 = vsel %vm217, %v1873, 0
    %1877 = vmatprep.subr.mxu0 0.0
    %1878 = vmatpush1.msra.mxu0 %v66
    %1879 = vmatprep.subr.mxu0 0.0
    %1880 = vmatpush1.msra.mxu0 %v67
    %1881 = vmatprep.subr.mxu0 0.0
    %1882 = vmatpush1.msra.mxu0 %v68
    %1883 = vmatprep.subr.mxu0 0.0
    %1884 = vmatpush1.msra.mxu0 %v69
    %1885 = vmatprep.subr.mxu0 0.0
    %1886 = vmatpush1.msra.mxu0 0.0
    %1887 = vmatprep.subr.mxu0 0.0
    %1888 = vmatpush1.msra.mxu0 0.0
    %1889 = vmatprep.subr.mxu0 0.0
    %1890 = vmatpush1.msra.mxu0 0.0
    %1891 = vmatprep.subr.mxu0 0.0
    %1892 = vmatpush1.msra.mxu0 0.0
    %1893 = vmatprep.subr.mxu0 0.0
    %1894 = vmatpush1.msra.mxu0 0.0
    %1895 = vmatprep.subr.mxu0 0.0
    %1896 = vmatpush1.msra.mxu0 0.0
    %1897 = vmatprep.subr.mxu0 0.0
    %1898 = vmatpush1.msra.mxu0 0.0
    %1899 = vmatprep.subr.mxu0 0.0
    %1900 = vmatpush1.msra.mxu0 0.0
    %1901 = vmatprep.subr.mxu0 0.0
    %1902 = vmatpush1.msra.mxu0 0.0
    %1903 = vmatprep.subr.mxu0 0.0
    %1904 = vmatpush1.msra.mxu0 0.0
    %1905 = vmatprep.subr.mxu0 0.0
    %1906 = vmatpush1.msra.mxu0 0.0
    %1907 = vmatprep.subr.mxu0 0.0
    %1908 = vmatpush1.msra.mxu0 0.0
    %1909 = vmatprep.subr.mxu0 0.0
    %1910 = vmatpush1.msra.mxu0 0.0
    %1911 = vmatprep.subr.mxu0 0.0
    %1912 = vmatpush1.msra.mxu0 0.0
    %1913 = vmatprep.subr.mxu0 0.0
    %1914 = vmatpush1.msra.mxu0 0.0
    %1915 = vmatprep.subr.mxu0 0.0
    %1916 = vmatpush1.msra.mxu0 0.0
    %1917 = vmatprep.subr.mxu0 0.0
    %1918 = vmatpush1.msra.mxu0 0.0
    %1919 = vmatprep.subr.mxu0 0.0
    %1920 = vmatpush1.msra.mxu0 0.0
    %1921 = vmatprep.subr.mxu0 0.0
    %1922 = vmatpush1.msra.mxu0 0.0
    %1923 = vmatprep.subr.mxu0 0.0
    %1924 = vmatpush1.msra.mxu0 0.0
    %1925 = vmatprep.subr.mxu0 0.0
    %1926 = vmatpush1.msra.mxu0 0.0
    %1927 = vmatprep.subr.mxu0 0.0
    %1928 = vmatpush1.msra.mxu0 0.0
    %1929 = vmatprep.subr.mxu0 0.0
    %1930 = vmatpush1.msra.mxu0 0.0
    %1931 = vmatprep.subr.mxu0 0.0
    %1932 = vmatpush1.msra.mxu0 0.0
    %1933 = vmatprep.subr.mxu0 0.0
    %1934 = vmatpush1.msra.mxu0 0.0
    %1935 = vmatprep.subr.mxu0 0.0
    %1936 = vmatpush1.msra.mxu0 0.0
    %1937 = vmatprep.subr.mxu0 0.0
    %1938 = vmatpush1.msra.mxu0 0.0
    %1939 = vmatprep.subr.mxu0 0.0
    %1940 = vmatpush1.msra.mxu0 0.0
    %1941 = vmatprep.mubr.f32.mxu0 0.0
    %1942 = vmatmul.mubr.f32.gmra.mrb[0].mxu0 %v1875
    %v1943 = vpop.f32.mrb[0].mxu0
    %v1944 = vadd.f32 %v86, %v1943
    %v1945 = vpop.f32.mrb[0].mxu0
    %1946 = vdwg.mxu0
    %v1947 = vxor.u32 %v1944, 2147483648
    %v1948 = vmul.f32 %v1947, 1.442695
    %v1949 = vpow.pop %v1948
    %v1950 = vadd.f32 %v1949, 1.0
    %v1951 = vrcp.pop %v1950
    %v1952 = vmul.f32 1.0, %v1951
    %v1953 = vtanh.pop %v1944
    %v1954 = vmul.f32 %v1952, %v1633
    %1956 = vrot.lane.b32.xlu0 %v1953, 96
    %v1957 = vpop.permute.xlu0 %1956
    %v1959 = vmul.f32 %v1952, %v1957
    %1961 = vrot.lane.b32.xlu0 %v1959, 16
    %v1962 = vpop.permute.xlu0 %1961
    %v1964 = vadd.f32 %v1954, %v1962
    %v1965 = vtanh.pop %v1964
    %1967 = vrot.lane.b32.xlu0 %v1965, 32
    %v1968 = vpop.permute.xlu0 %1967
    %v1970 = vmul.f32 %v1952, %v1968
    %1972 = vrot.lane.b32.xlu0 %v1970, 80
    %v1973 = vpop.permute.xlu0 %1972
    %1976 = vrot.lane.b32.xlu0 %v1745, 96
    %v1977 = vpop.permute.xlu0 %1976
    %v1979 = vsel %vm215, %v1973, %v1977
    %v1981 = vsel %vm217, %v1979, 0
    %1983 = vmatprep.subr.mxu0 0.0
    %1984 = vmatpush1.msra.mxu0 %v70
    %1985 = vmatprep.subr.mxu0 0.0
    %1986 = vmatpush1.msra.mxu0 %v71
    %1987 = vmatprep.subr.mxu0 0.0
    %1988 = vmatpush1.msra.mxu0 %v72
    %1989 = vmatprep.subr.mxu0 0.0
    %1990 = vmatpush1.msra.mxu0 %v73
    %1991 = vmatprep.subr.mxu0 0.0
    %1992 = vmatpush1.msra.mxu0 0.0
    %1993 = vmatprep.subr.mxu0 0.0
    %1994 = vmatpush1.msra.mxu0 0.0
    %1995 = vmatprep.subr.mxu0 0.0
    %1996 = vmatpush1.msra.mxu0 0.0
    %1997 = vmatprep.subr.mxu0 0.0
    %1998 = vmatpush1.msra.mxu0 0.0
    %1999 = vmatprep.subr.mxu0 0.0
    %2000 = vmatpush1.msra.mxu0 0.0
    %2001 = vmatprep.subr.mxu0 0.0
    %2002 = vmatpush1.msra.mxu0 0.0
    %2003 = vmatprep.subr.mxu0 0.0
    %2004 = vmatpush1.msra.mxu0 0.0
    %2005 = vmatprep.subr.mxu0 0.0
    %2006 = vmatpush1.msra.mxu0 0.0
    %2007 = vmatprep.subr.mxu0 0.0
    %2008 = vmatpush1.msra.mxu0 0.0
    %2009 = vmatprep.subr.mxu0 0.0
    %2010 = vmatpush1.msra.mxu0 0.0
    %2011 = vmatprep.subr.mxu0 0.0
    %2012 = vmatpush1.msra.mxu0 0.0
    %2013 = vmatprep.subr.mxu0 0.0
    %2014 = vmatpush1.msra.mxu0 0.0
    %2015 = vmatprep.subr.mxu0 0.0
    %2016 = vmatpush1.msra.mxu0 0.0
    %2017 = vmatprep.subr.mxu0 0.0
    %2018 = vmatpush1.msra.mxu0 0.0
    %2019 = vmatprep.subr.mxu0 0.0
    %2020 = vmatpush1.msra.mxu0 0.0
    %2021 = vmatprep.subr.mxu0 0.0
    %2022 = vmatpush1.msra.mxu0 0.0
    %2023 = vmatprep.subr.mxu0 0.0
    %2024 = vmatpush1.msra.mxu0 0.0
    %2025 = vmatprep.subr.mxu0 0.0
    %2026 = vmatpush1.msra.mxu0 0.0
    %2027 = vmatprep.subr.mxu0 0.0
    %2028 = vmatpush1.msra.mxu0 0.0
    %2029 = vmatprep.subr.mxu0 0.0
    %2030 = vmatpush1.msra.mxu0 0.0
    %2031 = vmatprep.subr.mxu0 0.0
    %2032 = vmatpush1.msra.mxu0 0.0
    %2033 = vmatprep.subr.mxu0 0.0
    %2034 = vmatpush1.msra.mxu0 0.0
    %2035 = vmatprep.subr.mxu0 0.0
    %2036 = vmatpush1.msra.mxu0 0.0
    %2037 = vmatprep.subr.mxu0 0.0
    %2038 = vmatpush1.msra.mxu0 0.0
    %2039 = vmatprep.subr.mxu0 0.0
    %2040 = vmatpush1.msra.mxu0 0.0
    %2041 = vmatprep.subr.mxu0 0.0
    %2042 = vmatpush1.msra.mxu0 0.0
    %2043 = vmatprep.subr.mxu0 0.0
    %2044 = vmatpush1.msra.mxu0 0.0
    %2045 = vmatprep.subr.mxu0 0.0
    %2046 = vmatpush1.msra.mxu0 0.0
    %2047 = vmatprep.mubr.f32.mxu0 0.0
    %2048 = vmatmul.mubr.f32.gmra.mrb[0].mxu0 %v1981
    %v2049 = vpop.f32.mrb[0].mxu0
    %v2050 = vadd.f32 %v93, %v2049
    %v2051 = vpop.f32.mrb[0].mxu0
    %2052 = vdwg.mxu0
    %v2053 = vxor.u32 %v2050, 2147483648
    %v2054 = vmul.f32 %v2053, 1.442695
    %v2055 = vpow.pop %v2054
    %v2056 = vadd.f32 %v2055, 1.0
    %v2057 = vrcp.pop %v2056
    %v2058 = vmul.f32 1.0, %v2057
    %v2059 = vtanh.pop %v2050
    %v2060 = vmul.f32 %v2058, %v1739
    %2062 = vrot.lane.b32.xlu0 %v2059, 96
    %v2063 = vpop.permute.xlu0 %2062
    %v2065 = vmul.f32 %v2058, %v2063
    %2067 = vrot.lane.b32.xlu0 %v2065, 16
    %v2068 = vpop.permute.xlu0 %2067
    %v2070 = vadd.f32 %v2060, %v2068
    %v2071 = vtanh.pop %v2070
    %2073 = vrot.lane.b32.xlu0 %v2071, 32
    %v2074 = vpop.permute.xlu0 %2073
    %v2076 = vmul.f32 %v2058, %v2074
    %v2077 = vmul.f32 %v2076, %v418
    %2079 = vrot.lane.b32.xlu0 %v2077, 80
    %v2080 = vpop.permute.xlu0 %2079
    %v2082 = vsel %vm425, %v2080, 0.0
    %2083 = vadd.xlane.f32.xlu0 %v2082
    %v2084 = vpop.xlane.xlu0 %2083
    %v2085 = vadd.f32 %v2084, %v106
    %vm2086 = vcmp.eq.s32.totalorder %v109, 5
    %2088 = vset.pattern.permute.xlu0 0
    %2089 = vperm.xlu0 %2088, %v2085
    %v2090 = vpop.permute.xlu0 %2089
    %v2092 = vsel %vm2086, %v2090, %v1761
    %2093 = vrot.lane.b32.xlu0 %v110, 80
    %v2094 = vpop.permute.xlu0 %2093
    %2096 = vrot.lane.b32.xlu0 %v1865, 88
    %v2097 = vpop.permute.xlu0 %2096
    %v2099 = vsel %vm111, %v2094, %v2097
    %v2101 = vsel %vm113, %v2099, 0
    %2103 = vmatprep.subr.mxu0 0.0
    %2104 = vmatpush1.msra.mxu0 %v63
    %2105 = vmatprep.subr.mxu0 0.0
    %2106 = vmatpush1.msra.mxu0 %v64
    %2107 = vmatprep.subr.mxu0 0.0
    %2108 = vmatpush1.msra.mxu0 %v65
    %2109 = vmatprep.subr.mxu0 0.0
    %2110 = vmatpush1.msra.mxu0 0.0
    %2111 = vmatprep.subr.mxu0 0.0
    %2112 = vmatpush1.msra.mxu0 0.0
    %2113 = vmatprep.subr.mxu0 0.0
    %2114 = vmatpush1.msra.mxu0 0.0
    %2115 = vmatprep.subr.mxu0 0.0
    %2116 = vmatpush1.msra.mxu0 0.0
    %2117 = vmatprep.subr.mxu0 0.0
    %2118 = vmatpush1.msra.mxu0 0.0
    %2119 = vmatprep.subr.mxu0 0.0
    %2120 = vmatpush1.msra.mxu0 0.0
    %2121 = vmatprep.subr.mxu0 0.0
    %2122 = vmatpush1.msra.mxu0 0.0
    %2123 = vmatprep.subr.mxu0 0.0
    %2124 = vmatpush1.msra.mxu0 0.0
    %2125 = vmatprep.subr.mxu0 0.0
    %2126 = vmatpush1.msra.mxu0 0.0
    %2127 = vmatprep.subr.mxu0 0.0
    %2128 = vmatpush1.msra.mxu0 0.0
    %2129 = vmatprep.subr.mxu0 0.0
    %2130 = vmatpush1.msra.mxu0 0.0
    %2131 = vmatprep.subr.mxu0 0.0
    %2132 = vmatpush1.msra.mxu0 0.0
    %2133 = vmatprep.subr.mxu0 0.0
    %2134 = vmatpush1.msra.mxu0 0.0
    %2135 = vmatprep.subr.mxu0 0.0
    %2136 = vmatpush1.msra.mxu0 0.0
    %2137 = vmatprep.subr.mxu0 0.0
    %2138 = vmatpush1.msra.mxu0 0.0
    %2139 = vmatprep.subr.mxu0 0.0
    %2140 = vmatpush1.msra.mxu0 0.0
    %2141 = vmatprep.subr.mxu0 0.0
    %2142 = vmatpush1.msra.mxu0 0.0
    %2143 = vmatprep.subr.mxu0 0.0
    %2144 = vmatpush1.msra.mxu0 0.0
    %2145 = vmatprep.subr.mxu0 0.0
    %2146 = vmatpush1.msra.mxu0 0.0
    %2147 = vmatprep.subr.mxu0 0.0
    %2148 = vmatpush1.msra.mxu0 0.0
    %2149 = vmatprep.subr.mxu0 0.0
    %2150 = vmatpush1.msra.mxu0 0.0
    %2151 = vmatprep.subr.mxu0 0.0
    %2152 = vmatpush1.msra.mxu0 0.0
    %2153 = vmatprep.subr.mxu0 0.0
    %2154 = vmatpush1.msra.mxu0 0.0
    %2155 = vmatprep.subr.mxu0 0.0
    %2156 = vmatpush1.msra.mxu0 0.0
    %2157 = vmatprep.subr.mxu0 0.0
    %2158 = vmatpush1.msra.mxu0 0.0
    %2159 = vmatprep.subr.mxu0 0.0
    %2160 = vmatpush1.msra.mxu0 0.0
    %2161 = vmatprep.subr.mxu0 0.0
    %2162 = vmatpush1.msra.mxu0 0.0
    %2163 = vmatprep.subr.mxu0 0.0
    %2164 = vmatpush1.msra.mxu0 0.0
    %2165 = vmatprep.subr.mxu0 0.0
    %2166 = vmatpush1.msra.mxu0 0.0
    %2167 = vmatprep.mubr.f32.mxu0 0.0
    %2168 = vmatmul.mubr.f32.gmra.mrb[0].mxu0 %v2101
    %v2169 = vpop.f32.mrb[0].mxu0
    %v2170 = vadd.f32 %v79, %v2169
    %v2171 = vpop.f32.mrb[0].mxu0
    %2172 = vdwg.mxu0
    %v2173 = vxor.u32 %v2170, 2147483648
    %v2174 = vmul.f32 %v2173, 1.442695
    %v2175 = vpow.pop %v2174
    %v2176 = vadd.f32 %v2175, 1.0
    %v2177 = vrcp.pop %v2176
    %v2178 = vmul.f32 1.0, %v2177
    %v2179 = vtanh.pop %v2170
    %v2180 = vmul.f32 %v2178, %v1859
    %2182 = vrot.lane.b32.xlu0 %v2179, 96
    %v2183 = vpop.permute.xlu0 %2182
    %v2185 = vmul.f32 %v2178, %v2183
    %2187 = vrot.lane.b32.xlu0 %v2185, 16
    %v2188 = vpop.permute.xlu0 %2187
    %v2190 = vadd.f32 %v2180, %v2188
    %v2191 = vtanh.pop %v2190
    %2193 = vrot.lane.b32.xlu0 %v2191, 32
    %v2194 = vpop.permute.xlu0 %2193
    %v2196 = vmul.f32 %v2178, %v2194
    %2198 = vrot.lane.b32.xlu0 %v2196, 80
    %v2199 = vpop.permute.xlu0 %2198
    %2201 = vrot.lane.b32.xlu0 %v1970, 96
    %v2202 = vpop.permute.xlu0 %2201
    %v2204 = vsel %vm215, %v2199, %v2202
    %v2206 = vsel %vm217, %v2204, 0
    %2208 = vmatprep.subr.mxu0 0.0
    %2209 = vmatpush1.msra.mxu0 %v66
    %2210 = vmatprep.subr.mxu0 0.0
    %2211 = vmatpush1.msra.mxu0 %v67
    %2212 = vmatprep.subr.mxu0 0.0
    %2213 = vmatpush1.msra.mxu0 %v68
    %2214 = vmatprep.subr.mxu0 0.0
    %2215 = vmatpush1.msra.mxu0 %v69
    %2216 = vmatprep.subr.mxu0 0.0
    %2217 = vmatpush1.msra.mxu0 0.0
    %2218 = vmatprep.subr.mxu0 0.0
    %2219 = vmatpush1.msra.mxu0 0.0
    %2220 = vmatprep.subr.mxu0 0.0
    %2221 = vmatpush1.msra.mxu0 0.0
    %2222 = vmatprep.subr.mxu0 0.0
    %2223 = vmatpush1.msra.mxu0 0.0
    %2224 = vmatprep.subr.mxu0 0.0
    %2225 = vmatpush1.msra.mxu0 0.0
    %2226 = vmatprep.subr.mxu0 0.0
    %2227 = vmatpush1.msra.mxu0 0.0
    %2228 = vmatprep.subr.mxu0 0.0
    %2229 = vmatpush1.msra.mxu0 0.0
    %2230 = vmatprep.subr.mxu0 0.0
    %2231 = vmatpush1.msra.mxu0 0.0
    %2232 = vmatprep.subr.mxu0 0.0
    %2233 = vmatpush1.msra.mxu0 0.0
    %2234 = vmatprep.subr.mxu0 0.0
    %2235 = vmatpush1.msra.mxu0 0.0
    %2236 = vmatprep.subr.mxu0 0.0
    %2237 = vmatpush1.msra.mxu0 0.0
    %2238 = vmatprep.subr.mxu0 0.0
    %2239 = vmatpush1.msra.mxu0 0.0
    %2240 = vmatprep.subr.mxu0 0.0
    %2241 = vmatpush1.msra.mxu0 0.0
    %2242 = vmatprep.subr.mxu0 0.0
    %2243 = vmatpush1.msra.mxu0 0.0
    %2244 = vmatprep.subr.mxu0 0.0
    %2245 = vmatpush1.msra.mxu0 0.0
    %2246 = vmatprep.subr.mxu0 0.0
    %2247 = vmatpush1.msra.mxu0 0.0
    %2248 = vmatprep.subr.mxu0 0.0
    %2249 = vmatpush1.msra.mxu0 0.0
    %2250 = vmatprep.subr.mxu0 0.0
    %2251 = vmatpush1.msra.mxu0 0.0
    %2252 = vmatprep.subr.mxu0 0.0
    %2253 = vmatpush1.msra.mxu0 0.0
    %2254 = vmatprep.subr.mxu0 0.0
    %2255 = vmatpush1.msra.mxu0 0.0
    %2256 = vmatprep.subr.mxu0 0.0
    %2257 = vmatpush1.msra.mxu0 0.0
    %2258 = vmatprep.subr.mxu0 0.0
    %2259 = vmatpush1.msra.mxu0 0.0
    %2260 = vmatprep.subr.mxu0 0.0
    %2261 = vmatpush1.msra.mxu0 0.0
    %2262 = vmatprep.subr.mxu0 0.0
    %2263 = vmatpush1.msra.mxu0 0.0
    %2264 = vmatprep.subr.mxu0 0.0
    %2265 = vmatpush1.msra.mxu0 0.0
    %2266 = vmatprep.subr.mxu0 0.0
    %2267 = vmatpush1.msra.mxu0 0.0
    %2268 = vmatprep.subr.mxu0 0.0
    %2269 = vmatpush1.msra.mxu0 0.0
    %2270 = vmatprep.subr.mxu0 0.0
    %2271 = vmatpush1.msra.mxu0 0.0
    %2272 = vmatprep.mubr.f32.mxu0 0.0
    %2273 = vmatmul.mubr.f32.gmra.mrb[0].mxu0 %v2206
    %v2274 = vpop.f32.mrb[0].mxu0
    %v2275 = vadd.f32 %v86, %v2274
    %v2276 = vpop.f32.mrb[0].mxu0
    %2277 = vdwg.mxu0
    %v2278 = vxor.u32 %v2275, 2147483648
    %v2279 = vmul.f32 %v2278, 1.442695
    %v2280 = vpow.pop %v2279
    %v2281 = vadd.f32 %v2280, 1.0
    %v2282 = vrcp.pop %v2281
    %v2283 = vmul.f32 1.0, %v2282
    %v2284 = vtanh.pop %v2275
    %v2285 = vmul.f32 %v2283, %v1964
    %2287 = vrot.lane.b32.xlu0 %v2284, 96
    %v2288 = vpop.permute.xlu0 %2287
    %v2290 = vmul.f32 %v2283, %v2288
    %2292 = vrot.lane.b32.xlu0 %v2290, 16
    %v2293 = vpop.permute.xlu0 %2292
    %v2295 = vadd.f32 %v2285, %v2293
    %v2296 = vtanh.pop %v2295
    %2298 = vrot.lane.b32.xlu0 %v2296, 32
    %v2299 = vpop.permute.xlu0 %2298
    %v2301 = vmul.f32 %v2283, %v2299
    %2303 = vrot.lane.b32.xlu0 %v2301, 80
    %v2304 = vpop.permute.xlu0 %2303
    %2307 = vrot.lane.b32.xlu0 %v2076, 96
    %v2308 = vpop.permute.xlu0 %2307
    %v2310 = vsel %vm215, %v2304, %v2308
    %v2312 = vsel %vm217, %v2310, 0
    %2314 = vmatprep.subr.mxu0 0.0
    %2315 = vmatpush1.msra.mxu0 %v70
    %2316 = vmatprep.subr.mxu0 0.0
    %2317 = vmatpush1.msra.mxu0 %v71
    %2318 = vmatprep.subr.mxu0 0.0
    %2319 = vmatpush1.msra.mxu0 %v72
    %2320 = vmatprep.subr.mxu0 0.0
    %2321 = vmatpush1.msra.mxu0 %v73
    %2322 = vmatprep.subr.mxu0 0.0
    %2323 = vmatpush1.msra.mxu0 0.0
    %2324 = vmatprep.subr.mxu0 0.0
    %2325 = vmatpush1.msra.mxu0 0.0
    %2326 = vmatprep.subr.mxu0 0.0
    %2327 = vmatpush1.msra.mxu0 0.0
    %2328 = vmatprep.subr.mxu0 0.0
    %2329 = vmatpush1.msra.mxu0 0.0
    %2330 = vmatprep.subr.mxu0 0.0
    %2331 = vmatpush1.msra.mxu0 0.0
    %2332 = vmatprep.subr.mxu0 0.0
    %2333 = vmatpush1.msra.mxu0 0.0
    %2334 = vmatprep.subr.mxu0 0.0
    %2335 = vmatpush1.msra.mxu0 0.0
    %2336 = vmatprep.subr.mxu0 0.0
    %2337 = vmatpush1.msra.mxu0 0.0
    %2338 = vmatprep.subr.mxu0 0.0
    %2339 = vmatpush1.msra.mxu0 0.0
    %2340 = vmatprep.subr.mxu0 0.0
    %2341 = vmatpush1.msra.mxu0 0.0
    %2342 = vmatprep.subr.mxu0 0.0
    %2343 = vmatpush1.msra.mxu0 0.0
    %2344 = vmatprep.subr.mxu0 0.0
    %2345 = vmatpush1.msra.mxu0 0.0
    %2346 = vmatprep.subr.mxu0 0.0
    %2347 = vmatpush1.msra.mxu0 0.0
    %2348 = vmatprep.subr.mxu0 0.0
    %2349 = vmatpush1.msra.mxu0 0.0
    %2350 = vmatprep.subr.mxu0 0.0
    %2351 = vmatpush1.msra.mxu0 0.0
    %2352 = vmatprep.subr.mxu0 0.0
    %2353 = vmatpush1.msra.mxu0 0.0
    %2354 = vmatprep.subr.mxu0 0.0
    %2355 = vmatpush1.msra.mxu0 0.0
    %2356 = vmatprep.subr.mxu0 0.0
    %2357 = vmatpush1.msra.mxu0 0.0
    %2358 = vmatprep.subr.mxu0 0.0
    %2359 = vmatpush1.msra.mxu0 0.0
    %2360 = vmatprep.subr.mxu0 0.0
    %2361 = vmatpush1.msra.mxu0 0.0
    %2362 = vmatprep.subr.mxu0 0.0
    %2363 = vmatpush1.msra.mxu0 0.0
    %2364 = vmatprep.subr.mxu0 0.0
    %2365 = vmatpush1.msra.mxu0 0.0
    %2366 = vmatprep.subr.mxu0 0.0
    %2367 = vmatpush1.msra.mxu0 0.0
    %2368 = vmatprep.subr.mxu0 0.0
    %2369 = vmatpush1.msra.mxu0 0.0
    %2370 = vmatprep.subr.mxu0 0.0
    %2371 = vmatpush1.msra.mxu0 0.0
    %2372 = vmatprep.subr.mxu0 0.0
    %2373 = vmatpush1.msra.mxu0 0.0
    %2374 = vmatprep.subr.mxu0 0.0
    %2375 = vmatpush1.msra.mxu0 0.0
    %2376 = vmatprep.subr.mxu0 0.0
    %2377 = vmatpush1.msra.mxu0 0.0
    %2378 = vmatprep.mubr.f32.mxu0 0.0
    %2379 = vmatmul.mubr.f32.gmra.mrb[0].mxu0 %v2312
    %v2380 = vpop.f32.mrb[0].mxu0
    %v2381 = vadd.f32 %v93, %v2380
    %v2382 = vpop.f32.mrb[0].mxu0
    %2383 = vdwg.mxu0
    %v2384 = vxor.u32 %v2381, 2147483648
    %v2385 = vmul.f32 %v2384, 1.442695
    %v2386 = vpow.pop %v2385
    %v2387 = vadd.f32 %v2386, 1.0
    %v2388 = vrcp.pop %v2387
    %v2389 = vmul.f32 1.0, %v2388
    %v2390 = vtanh.pop %v2381
    %v2391 = vmul.f32 %v2389, %v2070
    %2393 = vrot.lane.b32.xlu0 %v2390, 96
    %v2394 = vpop.permute.xlu0 %2393
    %v2396 = vmul.f32 %v2389, %v2394
    %2398 = vrot.lane.b32.xlu0 %v2396, 16
    %v2399 = vpop.permute.xlu0 %2398
    %v2401 = vadd.f32 %v2391, %v2399
    %v2402 = vtanh.pop %v2401
    %2404 = vrot.lane.b32.xlu0 %v2402, 32
    %v2405 = vpop.permute.xlu0 %2404
    %v2407 = vmul.f32 %v2389, %v2405
    %v2408 = vmul.f32 %v2407, %v418
    %2410 = vrot.lane.b32.xlu0 %v2408, 80
    %v2411 = vpop.permute.xlu0 %2410
    %v2413 = vsel %vm425, %v2411, 0.0
    %2414 = vadd.xlane.f32.xlu0 %v2413
    %v2415 = vpop.xlane.xlu0 %2414
    %v2416 = vadd.f32 %v2415, %v106
    %vm2417 = vcmp.eq.s32.totalorder %v109, 6
    %2419 = vset.pattern.permute.xlu0 0
    %2420 = vperm.xlu0 %2419, %v2416
    %v2421 = vpop.permute.xlu0 %2420
    %v2423 = vsel %vm2417, %v2421, %v2092
    %2424 = vrot.lane.b32.xlu0 %v110, 72
    %v2425 = vpop.permute.xlu0 %2424
    %2427 = vrot.lane.b32.xlu0 %v2196, 88
    %v2428 = vpop.permute.xlu0 %2427
    %v2430 = vsel %vm111, %v2425, %v2428
    %v2432 = vsel %vm113, %v2430, 0
    %2434 = vmatprep.subr.mxu0 0.0
    %2435 = vmatpush1.msra.mxu0 %v63
    %2436 = vmatprep.subr.mxu0 0.0
    %2437 = vmatpush1.msra.mxu0 %v64
    %2438 = vmatprep.subr.mxu0 0.0
    %2439 = vmatpush1.msra.mxu0 %v65
    %2440 = vmatprep.subr.mxu0 0.0
    %2441 = vmatpush1.msra.mxu0 0.0
    %2442 = vmatprep.subr.mxu0 0.0
    %2443 = vmatpush1.msra.mxu0 0.0
    %2444 = vmatprep.subr.mxu0 0.0
    %2445 = vmatpush1.msra.mxu0 0.0
    %2446 = vmatprep.subr.mxu0 0.0
    %2447 = vmatpush1.msra.mxu0 0.0
    %2448 = vmatprep.subr.mxu0 0.0
    %2449 = vmatpush1.msra.mxu0 0.0
    %2450 = vmatprep.subr.mxu0 0.0
    %2451 = vmatpush1.msra.mxu0 0.0
    %2452 = vmatprep.subr.mxu0 0.0
    %2453 = vmatpush1.msra.mxu0 0.0
    %2454 = vmatprep.subr.mxu0 0.0
    %2455 = vmatpush1.msra.mxu0 0.0
    %2456 = vmatprep.subr.mxu0 0.0
    %2457 = vmatpush1.msra.mxu0 0.0
    %2458 = vmatprep.subr.mxu0 0.0
    %2459 = vmatpush1.msra.mxu0 0.0
    %2460 = vmatprep.subr.mxu0 0.0
    %2461 = vmatpush1.msra.mxu0 0.0
    %2462 = vmatprep.subr.mxu0 0.0
    %2463 = vmatpush1.msra.mxu0 0.0
    %2464 = vmatprep.subr.mxu0 0.0
    %2465 = vmatpush1.msra.mxu0 0.0
    %2466 = vmatprep.subr.mxu0 0.0
    %2467 = vmatpush1.msra.mxu0 0.0
    %2468 = vmatprep.subr.mxu0 0.0
    %2469 = vmatpush1.msra.mxu0 0.0
    %2470 = vmatprep.subr.mxu0 0.0
    %2471 = vmatpush1.msra.mxu0 0.0
    %2472 = vmatprep.subr.mxu0 0.0
    %2473 = vmatpush1.msra.mxu0 0.0
    %2474 = vmatprep.subr.mxu0 0.0
    %2475 = vmatpush1.msra.mxu0 0.0
    %2476 = vmatprep.subr.mxu0 0.0
    %2477 = vmatpush1.msra.mxu0 0.0
    %2478 = vmatprep.subr.mxu0 0.0
    %2479 = vmatpush1.msra.mxu0 0.0
    %2480 = vmatprep.subr.mxu0 0.0
    %2481 = vmatpush1.msra.mxu0 0.0
    %2482 = vmatprep.subr.mxu0 0.0
    %2483 = vmatpush1.msra.mxu0 0.0
    %2484 = vmatprep.subr.mxu0 0.0
    %2485 = vmatpush1.msra.mxu0 0.0
    %2486 = vmatprep.subr.mxu0 0.0
    %2487 = vmatpush1.msra.mxu0 0.0
    %2488 = vmatprep.subr.mxu0 0.0
    %2489 = vmatpush1.msra.mxu0 0.0
    %2490 = vmatprep.subr.mxu0 0.0
    %2491 = vmatpush1.msra.mxu0 0.0
    %2492 = vmatprep.subr.mxu0 0.0
    %2493 = vmatpush1.msra.mxu0 0.0
    %2494 = vmatprep.subr.mxu0 0.0
    %2495 = vmatpush1.msra.mxu0 0.0
    %2496 = vmatprep.subr.mxu0 0.0
    %2497 = vmatpush1.msra.mxu0 0.0
    %2498 = vmatprep.mubr.f32.mxu0 0.0
    %2499 = vmatmul.mubr.f32.gmra.mrb[0].mxu0 %v2432
    %v2500 = vpop.f32.mrb[0].mxu0
    %v2501 = vadd.f32 %v79, %v2500
    %v2502 = vpop.f32.mrb[0].mxu0
    %2503 = vdwg.mxu0
    %v2504 = vxor.u32 %v2501, 2147483648
    %v2505 = vmul.f32 %v2504, 1.442695
    %v2506 = vpow.pop %v2505
    %v2507 = vadd.f32 %v2506, 1.0
    %v2508 = vrcp.pop %v2507
    %v2509 = vmul.f32 1.0, %v2508
    %v2510 = vtanh.pop %v2501
    %v2511 = vmul.f32 %v2509, %v2190
    %2513 = vrot.lane.b32.xlu0 %v2510, 96
    %v2514 = vpop.permute.xlu0 %2513
    %v2516 = vmul.f32 %v2509, %v2514
    %2518 = vrot.lane.b32.xlu0 %v2516, 16
    %v2519 = vpop.permute.xlu0 %2518
    %v2521 = vadd.f32 %v2511, %v2519
    %v2522 = vtanh.pop %v2521
    %2524 = vrot.lane.b32.xlu0 %v2522, 32
    %v2525 = vpop.permute.xlu0 %2524
    %v2527 = vmul.f32 %v2509, %v2525
    %2529 = vrot.lane.b32.xlu0 %v2527, 80
    %v2530 = vpop.permute.xlu0 %2529
    %2532 = vrot.lane.b32.xlu0 %v2301, 96
    %v2533 = vpop.permute.xlu0 %2532
    %v2535 = vsel %vm215, %v2530, %v2533
    %v2537 = vsel %vm217, %v2535, 0
    %2539 = vmatprep.subr.mxu0 0.0
    %2540 = vmatpush1.msra.mxu0 %v66
    %2541 = vmatprep.subr.mxu0 0.0
    %2542 = vmatpush1.msra.mxu0 %v67
    %2543 = vmatprep.subr.mxu0 0.0
    %2544 = vmatpush1.msra.mxu0 %v68
    %2545 = vmatprep.subr.mxu0 0.0
    %2546 = vmatpush1.msra.mxu0 %v69
    %2547 = vmatprep.subr.mxu0 0.0
    %2548 = vmatpush1.msra.mxu0 0.0
    %2549 = vmatprep.subr.mxu0 0.0
    %2550 = vmatpush1.msra.mxu0 0.0
    %2551 = vmatprep.subr.mxu0 0.0
    %2552 = vmatpush1.msra.mxu0 0.0
    %2553 = vmatprep.subr.mxu0 0.0
    %2554 = vmatpush1.msra.mxu0 0.0
    %2555 = vmatprep.subr.mxu0 0.0
    %2556 = vmatpush1.msra.mxu0 0.0
    %2557 = vmatprep.subr.mxu0 0.0
    %2558 = vmatpush1.msra.mxu0 0.0
    %2559 = vmatprep.subr.mxu0 0.0
    %2560 = vmatpush1.msra.mxu0 0.0
    %2561 = vmatprep.subr.mxu0 0.0
    %2562 = vmatpush1.msra.mxu0 0.0
    %2563 = vmatprep.subr.mxu0 0.0
    %2564 = vmatpush1.msra.mxu0 0.0
    %2565 = vmatprep.subr.mxu0 0.0
    %2566 = vmatpush1.msra.mxu0 0.0
    %2567 = vmatprep.subr.mxu0 0.0
    %2568 = vmatpush1.msra.mxu0 0.0
    %2569 = vmatprep.subr.mxu0 0.0
    %2570 = vmatpush1.msra.mxu0 0.0
    %2571 = vmatprep.subr.mxu0 0.0
    %2572 = vmatpush1.msra.mxu0 0.0
    %2573 = vmatprep.subr.mxu0 0.0
    %2574 = vmatpush1.msra.mxu0 0.0
    %2575 = vmatprep.subr.mxu0 0.0
    %2576 = vmatpush1.msra.mxu0 0.0
    %2577 = vmatprep.subr.mxu0 0.0
    %2578 = vmatpush1.msra.mxu0 0.0
    %2579 = vmatprep.subr.mxu0 0.0
    %2580 = vmatpush1.msra.mxu0 0.0
    %2581 = vmatprep.subr.mxu0 0.0
    %2582 = vmatpush1.msra.mxu0 0.0
    %2583 = vmatprep.subr.mxu0 0.0
    %2584 = vmatpush1.msra.mxu0 0.0
    %2585 = vmatprep.subr.mxu0 0.0
    %2586 = vmatpush1.msra.mxu0 0.0
    %2587 = vmatprep.subr.mxu0 0.0
    %2588 = vmatpush1.msra.mxu0 0.0
    %2589 = vmatprep.subr.mxu0 0.0
    %2590 = vmatpush1.msra.mxu0 0.0
    %2591 = vmatprep.subr.mxu0 0.0
    %2592 = vmatpush1.msra.mxu0 0.0
    %2593 = vmatprep.subr.mxu0 0.0
    %2594 = vmatpush1.msra.mxu0 0.0
    %2595 = vmatprep.subr.mxu0 0.0
    %2596 = vmatpush1.msra.mxu0 0.0
    %2597 = vmatprep.subr.mxu0 0.0
    %2598 = vmatpush1.msra.mxu0 0.0
    %2599 = vmatprep.subr.mxu0 0.0
    %2600 = vmatpush1.msra.mxu0 0.0
    %2601 = vmatprep.subr.mxu0 0.0
    %2602 = vmatpush1.msra.mxu0 0.0
    %2603 = vmatprep.mubr.f32.mxu0 0.0
    %2604 = vmatmul.mubr.f32.gmra.mrb[0].mxu0 %v2537
    %v2605 = vpop.f32.mrb[0].mxu0
    %v2606 = vadd.f32 %v86, %v2605
    %v2607 = vpop.f32.mrb[0].mxu0
    %2608 = vdwg.mxu0
    %v2609 = vxor.u32 %v2606, 2147483648
    %v2610 = vmul.f32 %v2609, 1.442695
    %v2611 = vpow.pop %v2610
    %v2612 = vadd.f32 %v2611, 1.0
    %v2613 = vrcp.pop %v2612
    %v2614 = vmul.f32 1.0, %v2613
    %v2615 = vtanh.pop %v2606
    %v2616 = vmul.f32 %v2614, %v2295
    %2618 = vrot.lane.b32.xlu0 %v2615, 96
    %v2619 = vpop.permute.xlu0 %2618
    %v2621 = vmul.f32 %v2614, %v2619
    %2623 = vrot.lane.b32.xlu0 %v2621, 16
    %v2624 = vpop.permute.xlu0 %2623
    %v2626 = vadd.f32 %v2616, %v2624
    %v2627 = vtanh.pop %v2626
    %2629 = vrot.lane.b32.xlu0 %v2627, 32
    %v2630 = vpop.permute.xlu0 %2629
    %v2632 = vmul.f32 %v2614, %v2630
    %2634 = vrot.lane.b32.xlu0 %v2632, 80
    %v2635 = vpop.permute.xlu0 %2634
    %2638 = vrot.lane.b32.xlu0 %v2407, 96
    %v2639 = vpop.permute.xlu0 %2638
    %v2641 = vsel %vm215, %v2635, %v2639
    %v2643 = vsel %vm217, %v2641, 0
    %2645 = vmatprep.subr.mxu0 0.0
    %2646 = vmatpush1.msra.mxu0 %v70
    %2647 = vmatprep.subr.mxu0 0.0
    %2648 = vmatpush1.msra.mxu0 %v71
    %2649 = vmatprep.subr.mxu0 0.0
    %2650 = vmatpush1.msra.mxu0 %v72
    %2651 = vmatprep.subr.mxu0 0.0
    %2652 = vmatpush1.msra.mxu0 %v73
    %2653 = vmatprep.subr.mxu0 0.0
    %2654 = vmatpush1.msra.mxu0 0.0
    %2655 = vmatprep.subr.mxu0 0.0
    %2656 = vmatpush1.msra.mxu0 0.0
    %2657 = vmatprep.subr.mxu0 0.0
    %2658 = vmatpush1.msra.mxu0 0.0
    %2659 = vmatprep.subr.mxu0 0.0
    %2660 = vmatpush1.msra.mxu0 0.0
    %2661 = vmatprep.subr.mxu0 0.0
    %2662 = vmatpush1.msra.mxu0 0.0
    %2663 = vmatprep.subr.mxu0 0.0
    %2664 = vmatpush1.msra.mxu0 0.0
    %2665 = vmatprep.subr.mxu0 0.0
    %2666 = vmatpush1.msra.mxu0 0.0
    %2667 = vmatprep.subr.mxu0 0.0
    %2668 = vmatpush1.msra.mxu0 0.0
    %2669 = vmatprep.subr.mxu0 0.0
    %2670 = vmatpush1.msra.mxu0 0.0
    %2671 = vmatprep.subr.mxu0 0.0
    %2672 = vmatpush1.msra.mxu0 0.0
    %2673 = vmatprep.subr.mxu0 0.0
    %2674 = vmatpush1.msra.mxu0 0.0
    %2675 = vmatprep.subr.mxu0 0.0
    %2676 = vmatpush1.msra.mxu0 0.0
    %2677 = vmatprep.subr.mxu0 0.0
    %2678 = vmatpush1.msra.mxu0 0.0
    %2679 = vmatprep.subr.mxu0 0.0
    %2680 = vmatpush1.msra.mxu0 0.0
    %2681 = vmatprep.subr.mxu0 0.0
    %2682 = vmatpush1.msra.mxu0 0.0
    %2683 = vmatprep.subr.mxu0 0.0
    %2684 = vmatpush1.msra.mxu0 0.0
    %2685 = vmatprep.subr.mxu0 0.0
    %2686 = vmatpush1.msra.mxu0 0.0
    %2687 = vmatprep.subr.mxu0 0.0
    %2688 = vmatpush1.msra.mxu0 0.0
    %2689 = vmatprep.subr.mxu0 0.0
    %2690 = vmatpush1.msra.mxu0 0.0
    %2691 = vmatprep.subr.mxu0 0.0
    %2692 = vmatpush1.msra.mxu0 0.0
    %2693 = vmatprep.subr.mxu0 0.0
    %2694 = vmatpush1.msra.mxu0 0.0
    %2695 = vmatprep.subr.mxu0 0.0
    %2696 = vmatpush1.msra.mxu0 0.0
    %2697 = vmatprep.subr.mxu0 0.0
    %2698 = vmatpush1.msra.mxu0 0.0
    %2699 = vmatprep.subr.mxu0 0.0
    %2700 = vmatpush1.msra.mxu0 0.0
    %2701 = vmatprep.subr.mxu0 0.0
    %2702 = vmatpush1.msra.mxu0 0.0
    %2703 = vmatprep.subr.mxu0 0.0
    %2704 = vmatpush1.msra.mxu0 0.0
    %2705 = vmatprep.subr.mxu0 0.0
    %2706 = vmatpush1.msra.mxu0 0.0
    %2707 = vmatprep.subr.mxu0 0.0
    %2708 = vmatpush1.msra.mxu0 0.0
    %2709 = vmatprep.mubr.f32.mxu0 0.0
    %2710 = vmatmul.mubr.f32.gmra.mrb[0].mxu0 %v2643
    %v2711 = vpop.f32.mrb[0].mxu0
    %v2712 = vadd.f32 %v93, %v2711
    %v2713 = vpop.f32.mrb[0].mxu0
    %2714 = vdwg.mxu0
    %v2715 = vxor.u32 %v2712, 2147483648
    %v2716 = vmul.f32 %v2715, 1.442695
    %v2717 = vpow.pop %v2716
    %v2718 = vadd.f32 %v2717, 1.0
    %v2719 = vrcp.pop %v2718
    %v2720 = vmul.f32 1.0, %v2719
    %v2721 = vtanh.pop %v2712
    %v2722 = vmul.f32 %v2720, %v2401
    %2724 = vrot.lane.b32.xlu0 %v2721, 96
    %v2725 = vpop.permute.xlu0 %2724
    %v2727 = vmul.f32 %v2720, %v2725
    %2729 = vrot.lane.b32.xlu0 %v2727, 16
    %v2730 = vpop.permute.xlu0 %2729
    %v2732 = vadd.f32 %v2722, %v2730
    %v2733 = vtanh.pop %v2732
    %2735 = vrot.lane.b32.xlu0 %v2733, 32
    %v2736 = vpop.permute.xlu0 %2735
    %v2738 = vmul.f32 %v2720, %v2736
    %v2739 = vmul.f32 %v2738, %v418
    %2741 = vrot.lane.b32.xlu0 %v2739, 80
    %v2742 = vpop.permute.xlu0 %2741
    %v2744 = vsel %vm425, %v2742, 0.0
    %2745 = vadd.xlane.f32.xlu0 %v2744
    %v2746 = vpop.xlane.xlu0 %2745
    %v2747 = vadd.f32 %v2746, %v106
    %vm2748 = vcmp.eq.s32.totalorder %v109, 7
    %2750 = vset.pattern.permute.xlu0 0
    %2751 = vperm.xlu0 %2750, %v2747
    %v2752 = vpop.permute.xlu0 %2751
    %v2754 = vsel %vm2748, %v2752, %v2423
    %vm2755 = vcmask 58368
    %2756 = vst.msk [vmem:[#allocation8] sm:$0x3] %vm2755, %v2754
    // Predicated region
    $region46: #{lstm_forward.1} parent=1 // pred_check
      _
    $region47: #{lstm_forward.1} parent=1 // pred_check_branch
      %2758 = sbr.rel (0) target = $region49
    $region48: #{lstm_forward.1} parent=1 // pred_region
      %s2760 = ssub.s32 32, 32
      %2761 = vsyncadd [#allocation5], %s2760
      %s2763 = sshll.u32 [#allocation8], 4
      %s2764 = int_to_ptr.vmem [resolvable:$true] %s2763
      %2766 = dma.vmem_to_hbm [thread:$0]  %s2764, 32, %s9, [#allocation5]
    $region49: #{lstm_forward.1} parent=1 // pred_fallthru
      _
    // Predicated region
    $region50: #{lstm_forward.1} parent=1 // pred_check
      _
    $region51: #{lstm_forward.1} parent=1 // pred_check_branch
      %2768 = sbr.rel (0) target = $region53
    $region52: #{lstm_forward.1} parent=1 // pred_region
      %2769 = dma.done [#allocation5], 32
    $region53: #{lstm_forward.1} parent=1 // pred_fallthru
      _
    %2770 = vsyncpa [#allocation4], 1
    %2771 = vsyncpa [#allocation7], 1
    %2772 = vsyncpa [#allocation5], 1

</llo_original>
